<compile_context>
chip_gen: v5e
topology: v5e:2x2
jax: 0.10.0
libtpu: 0.0.40
codegen_flags: <defaults>
</compile_context>

<pallas_src>
from functools import partial

import jax
import jax.numpy as jnp
from jax.experimental import pallas as pl
from jax.experimental.pallas import tpu as pltpu

LEAKY_SLOPE = 0.1
BN_EPS = 1e-5
ROW_TILE_TARGET = 512          # target sublane tile (flattened pixels) per grid step


# --------------------------------------------------------------------------
# Kernels
# --------------------------------------------------------------------------
def _conv1x1_kernel(x_ref, w_ref, b_ref, o_ref):
    y = jnp.dot(x_ref[...], w_ref[...], preferred_element_type=jnp.float32)
    y = y + b_ref[...]
    o_ref[...] = jnp.where(y >= 0, y, LEAKY_SLOPE * y).astype(o_ref.dtype)


def _tap_conv_kernel(x_ref, w_ref, b_ref, o_ref, acc_ref):
    """One shifted im2col tap per grid step (trailing 'arbitrary' axis)."""
    t = pl.program_id(1)

    @pl.when(t == 0)
    def _():
        acc_ref[...] = jnp.zeros_like(acc_ref)

    acc_ref[...] += jnp.dot(x_ref[0], w_ref[0], preferred_element_type=jnp.float32)

    @pl.when(t == pl.num_programs(1) - 1)
    def _():
        y = acc_ref[...] + b_ref[...]
        o_ref[...] = jnp.where(y >= 0, y, LEAKY_SLOPE * y).astype(o_ref.dtype)


def _dy3_conv_kernel(x_ref, w_ref, b_ref, o_ref, acc_ref):
    """3x3/stride-1 conv: one dy row-tap per grid step; the 3 dx column taps
    are generated in-kernel by a circular shift along the flattened pixel axis.
    Pixel tiles are multiples of the padded row width, so wrapped rows only
    ever contribute to the (discarded) pad columns."""
    d = pl.program_id(1)

    @pl.when(d == 0)
    def _():
        acc_ref[...] = jnp.zeros_like(acc_ref)

    x = x_ref[0]                                    # (TP, Cin)
    acc = acc_ref[...]
    acc = acc + jnp.dot(x, w_ref[0, 0], preferred_element_type=jnp.float32)
    for dx in (1, 2):
        # xs[i] = x[(i + dx) % TP]
        xs = jnp.concatenate([x[dx:], x[:dx]], axis=0)
        acc = acc + jnp.dot(xs, w_ref[0, dx], preferred_element_type=jnp.float32)
    acc_ref[...] = acc

    @pl.when(d == pl.num_programs(1) - 1)
    def _():
        y = acc_ref[...] + b_ref[...]
        o_ref[...] = jnp.where(y >= 0, y, LEAKY_SLOPE * y).astype(o_ref.dtype)


# --------------------------------------------------------------------------
# Tiling helpers / BN folding
# --------------------------------------------------------------------------
def _pick_tile(total, target=ROW_TILE_TARGET):
    """Largest divisor of `total` that is <= target and a multiple of 8
    (or the full extent)."""
    for cand in range(min(total, target), 0, -1):
        if total % cand == 0 and (cand % 8 == 0 or cand == total):
            return cand
    return total


def _pick_row_tile(total_rows, wp, target=ROW_TILE_TARGET):
    """Pixel tile that is a multiple of the padded row width `wp`, divides the
    total flattened-pixel count, and is 8-aligned (or the full extent)."""
    nrows = total_rows // wp
    best = None
    for k in range(1, nrows + 1):
        if nrows % k:
            continue
        tile = k * wp
        if tile % 8 != 0 and tile != total_rows:
            continue
        if tile <= target:
            best = tile
        else:
            if best is None:
                best = tile
            break
    return best if best is not None else total_rows


def _fold_bn(gamma, beta, mean, var):
    inv = jax.lax.rsqrt(var + BN_EPS)
    scale = gamma * inv
    return scale, beta - mean * scale


def _compiler_params(semantics):
    return pltpu.CompilerParams(dimension_semantics=semantics)


# --------------------------------------------------------------------------
# Per-layer Pallas conv wrappers (NHWC in / NHWC out, float32)
# --------------------------------------------------------------------------
def _conv1x1(x, w, gamma, beta, mean, var):
    N, H, W, Cin = x.shape
    Cout = w.shape[0]
    scale, bias = _fold_bn(gamma, beta, mean, var)
    wm = jnp.transpose(w, (2, 3, 1, 0)).reshape(Cin, Cout) * scale
    P = N * H * W
    TP = _pick_tile(P)
    out = pl.pallas_call(
        _conv1x1_kernel,
        out_shape=jax.ShapeDtypeStruct((P, Cout), jnp.float32),
        grid_spec=pltpu.PrefetchScalarGridSpec(
            num_scalar_prefetch=0,
            grid=(P // TP,),
            in_specs=[pl.BlockSpec((TP, Cin), lambda p: (p, 0)),
                      pl.BlockSpec((Cin, Cout), lambda p: (0, 0)),
                      pl.BlockSpec((1, Cout), lambda p: (0, 0))],
            out_specs=pl.BlockSpec((TP, Cout), lambda p: (p, 0)),
        ),
        compiler_params=_compiler_params(("parallel",)),
    )(x.reshape(P, Cin), wm, bias.reshape(1, Cout))
    return out.reshape(N, H, W, Cout)


def _conv3x3_s1_dy3(x, w, gamma, beta, mean, var):
    """3x3 stride-1 'same' conv; only 3 dy-shifted copies materialized."""
    N, H, W, Cin = x.shape
    Cout = w.shape[0]
    Wp = W + 2
    scale, bias = _fold_bn(gamma, beta, mean, var)
    w_dy = jnp.transpose(w, (2, 3, 1, 0)) * scale              # (3, 3, Cin, Cout)
    xp = jnp.pad(x, ((0, 0), (1, 1), (1, 1), (0, 0)))          # (N, H+2, Wp, Cin)
    xdy = jnp.stack([xp[:, d:d + H] for d in range(3)], axis=0)
    R = N * H * Wp
    xdy = xdy.reshape(3, R, Cin)
    TP = _pick_row_tile(R, Wp)
    out = pl.pallas_call(
        _dy3_conv_kernel,
        out_shape=jax.ShapeDtypeStruct((R, Cout), jnp.float32),
        grid_spec=pltpu.PrefetchScalarGridSpec(
            num_scalar_prefetch=0,
            grid=(R // TP, 3),
            in_specs=[pl.BlockSpec((1, TP, Cin), lambda p, d: (d, p, 0)),
                      pl.BlockSpec((1, 3, Cin, Cout), lambda p, d: (d, 0, 0, 0)),
                      pl.BlockSpec((1, Cout), lambda p, d: (0, 0))],
            out_specs=pl.BlockSpec((TP, Cout), lambda p, d: (p, 0)),
            scratch_shapes=[pltpu.VMEM((TP, Cout), jnp.float32)],
        ),
        compiler_params=_compiler_params(("parallel", "arbitrary")),
    )(xdy, w_dy, bias.reshape(1, Cout))
    return out.reshape(N, H, Wp, Cout)[:, :, :W, :]


def _conv3x3_im2col(x, w, gamma, beta, mean, var, *, stride):
    """9-tap im2col path: used for the darknet stride-2 downsample convs and as
    a fallback for stride-1 if the dy3 fast path is unavailable."""
    N, H, W, Cin = x.shape
    Cout = w.shape[0]
    scale, bias = _fold_bn(gamma, beta, mean, var)
    w_taps = (jnp.transpose(w, (2, 3, 1, 0)) * scale).reshape(9, Cin, Cout)
    if stride == 1:                                  # 3x3, padding 1 (same)
        Ho, Wo = H, W
        xp = jnp.pad(x, ((0, 0), (1, 1), (1, 1), (0, 0)))
        taps = jnp.stack([xp[:, dy:dy + Ho, dx:dx + Wo, :]
                          for dy in range(3) for dx in range(3)], axis=0)
    else:                                            # darknet: pad(top,left)=1, 3x3/s2 VALID
        Ho, Wo = H // 2, W // 2
        xp = jnp.pad(x, ((0, 0), (1, 0), (1, 0), (0, 0)))
        taps = jnp.stack([xp[:, dy:dy + 2 * Ho:2, dx:dx + 2 * Wo:2, :]
                          for dy in range(3) for dx in range(3)], axis=0)
    NP = N * Ho * Wo
    taps = taps.reshape(9, NP, Cin)
    TP = _pick_tile(NP)
    out = pl.pallas_call(
        _tap_conv_kernel,
        out_shape=jax.ShapeDtypeStruct((NP, Cout), jnp.float32),
        grid_spec=pltpu.PrefetchScalarGridSpec(
            num_scalar_prefetch=0,
            grid=(NP // TP, 9),
            in_specs=[pl.BlockSpec((1, TP, Cin), lambda p, t: (t, p, 0)),
                      pl.BlockSpec((1, Cin, Cout), lambda p, t: (t, 0, 0)),
                      pl.BlockSpec((1, Cout), lambda p, t: (0, 0))],
            out_specs=pl.BlockSpec((TP, Cout), lambda p, t: (p, 0)),
            scratch_shapes=[pltpu.VMEM((TP, Cout), jnp.float32)],
        ),
        compiler_params=_compiler_params(("parallel", "arbitrary")),
    )(taps, w_taps, bias.reshape(1, Cout))
    return out.reshape(N, Ho, Wo, Cout)


# --------------------------------------------------------------------------
# Fast-path probe (falls back to the proven 9-tap kernel if dy3 misbehaves)
# --------------------------------------------------------------------------
_DY3_SUPPORTED = None


def _probe_dy3():
    try:
        key = jax.random.PRNGKey(42)
        for (n, hw, cin, cout) in ((2, 16, 8, 16), (1, 8, 16, 32),
                                   (2, 2, 16, 32), (2, 1, 8, 16)):
            key, kx, kw = jax.random.split(key, 3)
            x = jax.random.normal(kx, (n, hw, hw, cin), jnp.float32)
            p = _init_conv_bn(kw, cin, cout, 3)
            got = jax.block_until_ready(_conv3x3_s1_dy3(x, *p))
            ref = _conv_bn_leaky_ref(x, *p, kernel_size=3, stride=1)
            tol = 2e-3 * (float(jnp.max(jnp.abs(ref))) + 1e-6) + 1e-3
            if not bool(jnp.isfinite(got).all()):
                return False
            if float(jnp.max(jnp.abs(got - ref))) > tol:
                return False
        return True
    except Exception:
        return False


def _dy3_enabled():
    global _DY3_SUPPORTED
    if _DY3_SUPPORTED is None:
        _DY3_SUPPORTED = _probe_dy3()
    return _DY3_SUPPORTED


# --------------------------------------------------------------------------
# Per-layer dispatcher (jit-cached per unique (shapes, kernel, stride))
# --------------------------------------------------------------------------
@partial(jax.jit, static_argnames=("kernel_size", "stride"))
def _conv_bn_leaky(x, w, gamma, beta, mean, var, *, kernel_size, stride):
    if kernel_size == 1:
        return _conv1x1(x, w, gamma, beta, mean, var)
    if stride == 1 and _dy3_enabled():
        return _conv3x3_s1_dy3(x, w, gamma, beta, mean, var)
    return _conv3x3_im2col(x, w, gamma, beta, mean, var, stride=stride)


# --------------------------------------------------------------------------
# darknet_body structure (shared between the Pallas path and the reference)
# --------------------------------------------------------------------------
def _darknet_apply(x_nchw, params, conv_fn):
    x = jnp.transpose(x_nchw, (0, 2, 3, 1))          # single NCHW -> NHWC
    x = conv_fn(x, *params["conv"], kernel_size=3, stride=1)
    for name in ("reblck1", "reblck2", "reblck3", "reblck4", "reblck5"):
        p = params[name]
        x = conv_fn(x, *p["down"], kernel_size=3, stride=2)
        for bp in p["blocks"]:                       # ConvolutionBlock
            r = x
            y = conv_fn(x, *bp["conv1"], kernel_size=1, stride=1)
            y = conv_fn(y, *bp["conv2"], kernel_size=3, stride=1)
            x = y + r
    return jnp.transpose(x, (0, 3, 1, 2))            # back to NCHW (tiny)


def darknet_body_forward(x_nchw, params):
    return _darknet_apply(x_nchw, params, _conv_bn_leaky)


# --------------------------------------------------------------------------
# Pure-JAX reference (eval-mode BatchNorm), for correctness checking
# --------------------------------------------------------------------------
def _conv_bn_leaky_ref(x, w, gamma, beta, mean, var, *, kernel_size, stride):
    if kernel_size == 3 and stride == 2:
        x = jnp.pad(x, ((0, 0), (1, 0), (1, 0), (0, 0)))
        padding = "VALID"
    elif kernel_size == 3:
        padding = ((1, 1), (1, 1))
    else:
        padding = "VALID"
    y = jax.lax.conv_general_dilated(
        x, jnp.transpose(w, (2, 3, 1, 0)),
        window_strides=(stride, stride), padding=padding,
        dimension_numbers=("NHWC", "HWIO", "NHWC"))
    inv = jax.lax.rsqrt(var + BN_EPS)
    y = y * (gamma * inv) + (beta - mean * gamma * inv)
    return jnp.where(y >= 0, y, LEAKY_SLOPE * y)


# --------------------------------------------------------------------------
# Deterministic synthetic parameters mirroring darknet_body.__init__
# --------------------------------------------------------------------------
def _init_conv_bn(key, cin, cout, k):
    kw_, kg, kb, km, kv = jax.random.split(key, 5)
    fan_in = cin * k * k
    w = jax.random.normal(kw_, (cout, cin, k, k), jnp.float32) / (fan_in ** 0.5)
    gamma = 1.0 + 0.1 * jax.random.normal(kg, (cout,), jnp.float32)
    beta = 0.05 * jax.random.normal(kb, (cout,), jnp.float32)
    mean = 0.1 * jax.random.normal(km, (cout,), jnp.float32)
    var = 1.0 + 0.3 * jnp.abs(jax.random.normal(kv, (cout,), jnp.float32))
    return (w, gamma, beta, mean, var)


def init_darknet_params(key):
    keys = iter(jax.random.split(key, 64))
    params = {"conv": _init_conv_bn(next(keys), 3, 32, 3)}

    def make_resblock(cin, nf, nblocks):
        p = {"down": _init_conv_bn(next(keys), cin, nf, 3), "blocks": []}
        for _ in range(nblocks):
            p["blocks"].append({
                "conv1": _init_conv_bn(next(keys), nf, nf // 2, 1),
                "conv2": _init_conv_bn(next(keys), nf // 2, nf, 3),
            })
        return p

    params["reblck1"] = make_resblock(32, 64, 1)
    params["reblck2"] = make_resblock(64, 128, 2)
    params["reblck3"] = make_resblock(128, 256, 8)
    params["reblck4"] = make_resblock(256, 512, 8)
    params["reblck5"] = make_resblock(512, 1024, 4)
    return params


if __name__ == "__main__":
    key = jax.random.PRNGKey(0)
    kp, kx = jax.random.split(key)
    params = init_darknet_params(kp)

    # Smallest spatial size that survives the 5 stride-2 downsamples: 32.
    x = jax.random.normal(kx, (2, 3, 32, 32), jnp.float32)

    _dy3_enabled()                      # resolve the fast-path probe up front

    out = darknet_body_forward(x, params)
    out = jax.block_until_ready(out)
    assert out.shape == (2, 1024, 1, 1), out.shape

    ref = _darknet_apply(x, params, _conv_bn_leaky_ref)
    ref = jax.block_until_ready(ref)

    err = float(jnp.max(jnp.abs(out - ref)))
    ref_scale = float(jnp.max(jnp.abs(ref))) + 1e-6
    assert err <= 2e-3 * ref_scale + 1e-3, (err, ref_scale)

    print("KERNEL_OK")
</pallas_src>

<mosaic_0001>
module attributes {stable_mosaic.version = 11 : i64} {
  func.func @_dy3_conv_kernel(%arg0: i32, %arg1: i32, %arg2: memref<1x288x8xf32, #tpu.memory_space<vmem>>, %arg3: memref<1x3x8x16xf32, #tpu.memory_space<vmem>>, %arg4: memref<1x16xf32, #tpu.memory_space<vmem>>, %arg5: memref<288x16xf32, #tpu.memory_space<vmem>>, %arg6: memref<288x16xf32, #tpu.memory_space<vmem>>) attributes {dimension_semantics = [#tpu.dimension_semantics<parallel>, #tpu.dimension_semantics<arbitrary>], iteration_bounds = array<i64: 2, 3>, scalar_prefetch = 0 : i64, scratch_operands = 1 : i64, tpu.core_type = #tpu.core_type<tc>, window_params = [{transform_indices = @transform_0, window_bounds = array<i64: 1, 288, 8>}, {transform_indices = @transform_1, window_bounds = array<i64: 1, 3, 8, 16>}, {pipeline_mode = #tpu.pipeline_mode<synchronous>, transform_indices = @transform_2, window_bounds = array<i64: 1, 16>}, {transform_indices = @transform_3, window_bounds = array<i64: 288, 16>}]} {
    %c0_i32 = arith.constant 0 : i32
    %0 = arith.cmpi eq, %arg1, %c0_i32 : i32
    %1 = arith.extui %0 : i1 to i32
    %c0_i32_0 = arith.constant 0 : i32
    %2 = arith.cmpi ne, %1, %c0_i32_0 : i32
    scf.if %2 {
      %cst_20 = arith.constant 0.000000e+00 : f32
      %28 = vector.broadcast %cst_20 : f32 to vector<288x16xf32>
      %c0_21 = arith.constant 0 : index
      %c0_22 = arith.constant 0 : index
      %29 = vector.load %arg6[%c0_21, %c0_22] : memref<288x16xf32, #tpu.memory_space<vmem>>, vector<288x16xf32>
      tpu.vector_store %arg6[%c0_21, %c0_22], %28 {strides = array<i32>} : memref<288x16xf32, #tpu.memory_space<vmem>>, vector<288x16xf32>,
    } else {
    }
    %c0 = arith.constant 0 : index
    %c0_1 = arith.constant 0 : index
    %c0_2 = arith.constant 0 : index
    %3 = vector.load %arg2[%c0, %c0_1, %c0_2] : memref<1x288x8xf32, #tpu.memory_space<vmem>>, vector<1x288x8xf32>
    %4 = vector.shape_cast %3 : vector<1x288x8xf32> to vector<288x8xf32>
    %c0_3 = arith.constant 0 : index
    %c0_4 = arith.constant 0 : index
    %5 = vector.load %arg6[%c0_3, %c0_4] : memref<288x16xf32, #tpu.memory_space<vmem>>, vector<288x16xf32>
    %c0_5 = arith.constant 0 : index
    %c0_6 = arith.constant 0 : index
    %c0_7 = arith.constant 0 : index
    %c0_8 = arith.constant 0 : index
    %6 = vector.load %arg3[%c0_5, %c0_6, %c0_7, %c0_8] : memref<1x3x8x16xf32, #tpu.memory_space<vmem>>, vector<1x1x8x16xf32>
    %7 = vector.shape_cast %6 : vector<1x1x8x16xf32> to vector<8x16xf32>
    %cst = arith.constant dense<0.000000e+00> : vector<288x16xf32>
    %8 = tpu.matmul %4, %7, %cst {dimension_numbers = #tpu.dot_dimension_numbers<[1], [0], [0], [1], [0, 0, 1, 1], [], []>} : vector<288x8xf32>, vector<8x16xf32>, vector<288x16xf32> -> vector<288x16xf32>
    %9 = arith.addf %5, %8 : vector<288x16xf32>
    %10 = vector.extract_strided_slice %4 {offsets = [1, 0], sizes = [287, 8], strides = [1, 1]} : vector<288x8xf32> to vector<287x8xf32>
    %11 = vector.extract_strided_slice %4 {offsets = [0, 0], sizes = [1, 8], strides = [1, 1]} : vector<288x8xf32> to vector<1x8xf32>
    %12 = tpu.concatenate %10, %11 in 0 : vector<287x8xf32>, vector<1x8xf32> -> vector<288x8xf32>
    %c0_9 = arith.constant 0 : index
    %c1 = arith.constant 1 : index
    %c0_10 = arith.constant 0 : index
    %c0_11 = arith.constant 0 : index
    %13 = vector.load %arg3[%c0_9, %c1, %c0_10, %c0_11] : memref<1x3x8x16xf32, #tpu.memory_space<vmem>>, vector<1x1x8x16xf32>
    %14 = vector.shape_cast %13 : vector<1x1x8x16xf32> to vector<8x16xf32>
    %cst_12 = arith.constant dense<0.000000e+00> : vector<288x16xf32>
    %15 = tpu.matmul %12, %14, %cst_12 {dimension_numbers = #tpu.dot_dimension_numbers<[1], [0], [0], [1], [0, 0, 1, 1], [], []>} : vector<288x8xf32>, vector<8x16xf32>, vector<288x16xf32> -> vector<288x16xf32>
    %16 = arith.addf %9, %15 : vector<288x16xf32>
    %17 = vector.extract_strided_slice %4 {offsets = [2, 0], sizes = [286, 8], strides = [1, 1]} : vector<288x8xf32> to vector<286x8xf32>
    %18 = vector.extract_strided_slice %4 {offsets = [0, 0], sizes = [2, 8], strides = [1, 1]} : vector<288x8xf32> to vector<2x8xf32>
    %19 = tpu.concatenate %17, %18 in 0 : vector<286x8xf32>, vector<2x8xf32> -> vector<288x8xf32>
    %c0_13 = arith.constant 0 : index
    %c2 = arith.constant 2 : index
    %c0_14 = arith.constant 0 : index
    %c0_15 = arith.constant 0 : index
    %20 = vector.load %arg3[%c0_13, %c2, %c0_14, %c0_15] : memref<1x3x8x16xf32, #tpu.memory_space<vmem>>, vector<1x1x8x16xf32>
    %21 = vector.shape_cast %20 : vector<1x1x8x16xf32> to vector<8x16xf32>
    %cst_16 = arith.constant dense<0.000000e+00> : vector<288x16xf32>
    %22 = tpu.matmul %19, %21, %cst_16 {dimension_numbers = #tpu.dot_dimension_numbers<[1], [0], [0], [1], [0, 0, 1, 1], [], []>} : vector<288x8xf32>, vector<8x16xf32>, vector<288x16xf32> -> vector<288x16xf32>
    %23 = arith.addf %16, %22 : vector<288x16xf32>
    %c0_17 = arith.constant 0 : index
    %c0_18 = arith.constant 0 : index
    %24 = vector.load %arg6[%c0_17, %c0_18] : memref<288x16xf32, #tpu.memory_space<vmem>>, vector<288x16xf32>
    tpu.vector_store %arg6[%c0_17, %c0_18], %23 {strides = array<i32>} : memref<288x16xf32, #tpu.memory_space<vmem>>, vector<288x16xf32>,
    %c2_i32 = arith.constant 2 : i32
    %25 = arith.cmpi eq, %arg1, %c2_i32 : i32
    %26 = arith.extui %25 : i1 to i32
    %c0_i32_19 = arith.constant 0 : i32
    %27 = arith.cmpi ne, %26, %c0_i32_19 : i32
    scf.if %27 {
      %c0_20 = arith.constant 0 : index
      %c0_21 = arith.constant 0 : index
      %28 = vector.load %arg6[%c0_20, %c0_21] : memref<288x16xf32, #tpu.memory_space<vmem>>, vector<288x16xf32>
      %c0_22 = arith.constant 0 : index
      %c0_23 = arith.constant 0 : index
      %29 = vector.load %arg4[%c0_22, %c0_23] : memref<1x16xf32, #tpu.memory_space<vmem>>, vector<1x16xf32>
      %30 = vector.broadcast %29 : vector<1x16xf32> to vector<288x16xf32>
      %31 = arith.addf %28, %30 : vector<288x16xf32>
      %cst_24 = arith.constant 0.000000e+00 : f32
      %32 = vector.broadcast %cst_24 : f32 to vector<288x16xf32>
      %33 = arith.cmpf oge, %31, %32 : vector<288x16xf32>
      %cst_25 = arith.constant 1.000000e-01 : f32
      %34 = vector.broadcast %cst_25 : f32 to vector<288x16xf32>
      %35 = arith.mulf %34, %31 : vector<288x16xf32>
      %36 = arith.select %33, %31, %35 : vector<288x16xi1>, vector<288x16xf32>
      %c0_26 = arith.constant 0 : index
      %c0_27 = arith.constant 0 : index
      %37 = vector.load %arg5[%c0_26, %c0_27] : memref<288x16xf32, #tpu.memory_space<vmem>>, vector<288x16xf32>
      tpu.vector_store %arg5[%c0_26, %c0_27], %36 {strides = array<i32>} : memref<288x16xf32, #tpu.memory_space<vmem>>, vector<288x16xf32>,
    } else {
    }
    return
  }
  func.func @transform_0(%arg0: i32, %arg1: i32) -> (i32, i32, i32) {
    %c0_i32 = arith.constant 0 : i32
    %c0_i32_0 = arith.constant 0 : i32
    return %arg1, %arg0, %c0_i32 : i32, i32, i32
  }
  func.func @transform_1(%arg0: i32, %arg1: i32) -> (i32, i32, i32, i32) {
    %c0_i32 = arith.constant 0 : i32
    %c0_i32_0 = arith.constant 0 : i32
    %c0_i32_1 = arith.constant 0 : i32
    %c0_i32_2 = arith.constant 0 : i32
    return %arg1, %c0_i32, %c0_i32_0, %c0_i32_1 : i32, i32, i32, i32
  }
  func.func @transform_2(%arg0: i32, %arg1: i32) -> (i32, i32) {
    %c0_i32 = arith.constant 0 : i32
    %c0_i32_0 = arith.constant 0 : i32
    %c0_i32_1 = arith.constant 0 : i32
    return %c0_i32, %c0_i32_0 : i32, i32
  }
  func.func @transform_3(%arg0: i32, %arg1: i32) -> (i32, i32) {
    %c0_i32 = arith.constant 0 : i32
    %c0_i32_0 = arith.constant 0 : i32
    return %arg0, %c0_i32 : i32, i32
  }
}

module attributes {stable_mosaic.version = 11 : i64} {
  func.func @_tap_conv_kernel(%arg0: i32, %arg1: i32, %arg2: memref<1x512x3xf32, #tpu.memory_space<vmem>>, %arg3: memref<1x3x32xf32, #tpu.memory_space<vmem>>, %arg4: memref<1x32xf32, #tpu.memory_space<vmem>>, %arg5: memref<512x32xf32, #tpu.memory_space<vmem>>, %arg6: memref<512x32xf32, #tpu.memory_space<vmem>>) attributes {dimension_semantics = [#tpu.dimension_semantics<parallel>, #tpu.dimension_semantics<arbitrary>], iteration_bounds = array<i64: 4, 9>, scalar_prefetch = 0 : i64, scratch_operands = 1 : i64, tpu.core_type = #tpu.core_type<tc>, window_params = [{transform_indices = @transform_0, window_bounds = array<i64: 1, 512, 3>}, {transform_indices = @transform_1, window_bounds = array<i64: 1, 3, 32>}, {pipeline_mode = #tpu.pipeline_mode<synchronous>, transform_indices = @transform_2, window_bounds = array<i64: 1, 32>}, {transform_indices = @transform_3, window_bounds = array<i64: 512, 32>}]} {
    %c0_i32 = arith.constant 0 : i32
    %0 = arith.cmpi eq, %arg1, %c0_i32 : i32
    %1 = arith.extui %0 : i1 to i32
    %c0_i32_0 = arith.constant 0 : i32
    %2 = arith.cmpi ne, %1, %c0_i32_0 : i32
    scf.if %2 {
      %cst_11 = arith.constant 0.000000e+00 : f32
      %14 = vector.broadcast %cst_11 : f32 to vector<512x32xf32>
      %c0_12 = arith.constant 0 : index
      %c0_13 = arith.constant 0 : index
      %15 = vector.load %arg6[%c0_12, %c0_13] : memref<512x32xf32, #tpu.memory_space<vmem>>, vector<512x32xf32>
      tpu.vector_store %arg6[%c0_12, %c0_13], %14 {strides = array<i32>} : memref<512x32xf32, #tpu.memory_space<vmem>>, vector<512x32xf32>,
    } else {
    }
    %c0 = arith.constant 0 : index
    %c0_1 = arith.constant 0 : index
    %3 = vector.load %arg6[%c0, %c0_1] : memref<512x32xf32, #tpu.memory_space<vmem>>, vector<512x32xf32>
    %c0_2 = arith.constant 0 : index
    %c0_3 = arith.constant 0 : index
    %c0_4 = arith.constant 0 : index
    %4 = vector.load %arg2[%c0_2, %c0_3, %c0_4] : memref<1x512x3xf32, #tpu.memory_space<vmem>>, vector<1x512x3xf32>
    %5 = vector.shape_cast %4 : vector<1x512x3xf32> to vector<512x3xf32>
    %c0_5 = arith.constant 0 : index
    %c0_6 = arith.constant 0 : index
    %c0_7 = arith.constant 0 : index
    %6 = vector.load %arg3[%c0_5, %c0_6, %c0_7] : memref<1x3x32xf32, #tpu.memory_space<vmem>>, vector<1x3x32xf32>
    %7 = vector.shape_cast %6 : vector<1x3x32xf32> to vector<3x32xf32>
    %cst = arith.constant dense<0.000000e+00> : vector<512x32xf32>
    %8 = tpu.matmul %5, %7, %cst {dimension_numbers = #tpu.dot_dimension_numbers<[1], [0], [0], [1], [0, 0, 1, 1], [], []>} : vector<512x3xf32>, vector<3x32xf32>, vector<512x32xf32> -> vector<512x32xf32>
    %9 = arith.addf %3, %8 : vector<512x32xf32>
    %c0_8 = arith.constant 0 : index
    %c0_9 = arith.constant 0 : index
    %10 = vector.load %arg6[%c0_8, %c0_9] : memref<512x32xf32, #tpu.memory_space<vmem>>, vector<512x32xf32>
    tpu.vector_store %arg6[%c0_8, %c0_9], %9 {strides = array<i32>} : memref<512x32xf32, #tpu.memory_space<vmem>>, vector<512x32xf32>,
    %c8_i32 = arith.constant 8 : i32
    %11 = arith.cmpi eq, %arg1, %c8_i32 : i32
    %12 = arith.extui %11 : i1 to i32
    %c0_i32_10 = arith.constant 0 : i32
    %13 = arith.cmpi ne, %12, %c0_i32_10 : i32
    scf.if %13 {
      %c0_11 = arith.constant 0 : index
      %c0_12 = arith.constant 0 : index
      %14 = vector.load %arg6[%c0_11, %c0_12] : memref<512x32xf32, #tpu.memory_space<vmem>>, vector<512x32xf32>
      %c0_13 = arith.constant 0 : index
      %c0_14 = arith.constant 0 : index
      %15 = vector.load %arg4[%c0_13, %c0_14] : memref<1x32xf32, #tpu.memory_space<vmem>>, vector<1x32xf32>
      %16 = vector.broadcast %15 : vector<1x32xf32> to vector<512x32xf32>
      %17 = arith.addf %14, %16 : vector<512x32xf32>
      %cst_15 = arith.constant 0.000000e+00 : f32
      %18 = vector.broadcast %cst_15 : f32 to vector<512x32xf32>
      %19 = arith.cmpf oge, %17, %18 : vector<512x32xf32>
      %cst_16 = arith.constant 1.000000e-01 : f32
      %20 = vector.broadcast %cst_16 : f32 to vector<512x32xf32>
      %21 = arith.mulf %20, %17 : vector<512x32xf32>
      %22 = arith.select %19, %17, %21 : vector<512x32xi1>, vector<512x32xf32>
      %c0_17 = arith.constant 0 : index
      %c0_18 = arith.constant 0 : index
      %23 = vector.load %arg5[%c0_17, %c0_18] : memref<512x32xf32, #tpu.memory_space<vmem>>, vector<512x32xf32>
      tpu.vector_store %arg5[%c0_17, %c0_18], %22 {strides = array<i32>} : memref<512x32xf32, #tpu.memory_space<vmem>>, vector<512x32xf32>,
    } else {
    }
    return
  }
  func.func @transform_0(%arg0: i32, %arg1: i32) -> (i32, i32, i32) {
    %c0_i32 = arith.constant 0 : i32
    %c0_i32_0 = arith.constant 0 : i32
    return %arg1, %arg0, %c0_i32 : i32, i32, i32
  }
  func.func @transform_1(%arg0: i32, %arg1: i32) -> (i32, i32, i32) {
    %c0_i32 = arith.constant 0 : i32
    %c0_i32_0 = arith.constant 0 : i32
    %c0_i32_1 = arith.constant 0 : i32
    return %arg1, %c0_i32, %c0_i32_0 : i32, i32, i32
  }
  func.func @transform_2(%arg0: i32, %arg1: i32) -> (i32, i32) {
    %c0_i32 = arith.constant 0 : i32
    %c0_i32_0 = arith.constant 0 : i32
    %c0_i32_1 = arith.constant 0 : i32
    return %c0_i32, %c0_i32_0 : i32, i32
  }
  func.func @transform_3(%arg0: i32, %arg1: i32) -> (i32, i32) {
    %c0_i32 = arith.constant 0 : i32
    %c0_i32_0 = arith.constant 0 : i32
    return %arg0, %c0_i32 : i32, i32
  }
}

</mosaic_0001>

<llo_original>
// kernel: tpu_custom_call.1
$region0: #{tpu_custom_call.1}
  #allocation0 [shape = 'u32[]', space=smem, size = 0x4, offset = 0x4, fixed_abs, tag = 'smem constant byte address 0x4 - core index']
  #allocation1 [shape = 'u32[72,128]{1,0:T(1,128)}', space=vmem, size = 0x9000, scoped, tag = 'internal scratch']
  #allocation2 [shape = 'f32[288,16]{1,0:T(8,128)}', space=vmem, size = 0x24000, scoped, tag = 'scratch operand']
  %s0 = inlined_call_operand.vmem [shape: f32[3,576,8], index: 0, kind: input, shape index: {}]
  %s1 = inlined_call_operand.vmem [shape: f32[3,3,8,16], index: 1, kind: input, shape index: {}]
  %s2 = inlined_call_operand.vmem [shape: f32[1,16], index: 2, kind: input, shape index: {}]
  %s3 = inlined_call_operand.vmem [shape: f32[576,16], index: 3, kind: output, shape index: {}]
  %s4 = sld [smem:[#allocation0]]
  $region53: #{tpu_custom_call.1} parent=0
    _
  %s6 = ssub.s32 1, %s4
  %s7 = scalar_select 0, %s6, %s4
  loop: start=0, step=1, limit=8
  $region2: #{tpu_custom_call.1} parent=0 // loop_pre_header
    _
  $region3: #{tpu_custom_call.1} parent=0 // loop_header
    %s9 = sphi 0, %s13
    %p10 = scmp.ge.s32.totalorder %s9, 8
    %s16 = sphi 0, %s28
    %s17 = sphi 0, %s24
    %s18 = sphi 0, %s16
    %s19 = sphi 0, %s17
    %s20 = sphi 0, %s18
    %s21 = sphi 0, %s19
    %s33 = sphi 0, %s35
    %s36 = sphi 0, %s33
    %s37 = sphi 0, %s36
    %s53 = sphi 0, %s37
    %s59 = sphi 0, %s61
    %s62 = sphi 0, %s59
    %s63 = sphi 0, %s62
    %s79 = sphi 0, %s63
    %s83 = sphi 0, %s83
    %s85 = sphi 0, %s83
    %s86 = sphi 0, %s85
    %s100 = sphi 0, %s86
    %s106 = sphi 0, %s108
    %s109 = sphi 0, %s106
    %s110 = sphi 0, %s109
    %s126 = sphi 0, %s110
  $region4: #{tpu_custom_call.1} parent=0 // loop_header_branch
    %12 = sbr.rel (%p10) target = $region8
  $region5: #{tpu_custom_call.1} parent=0 // loop_body
    %s14 = ssub.s32 %s9, 1
    %s15 = ssub.s32 %s9, 2
    %s22 = sadd.s32 1, %s17
    %p23 = scmp.ge.s32.totalorder %s22, 3
    %s24 = scalar_select %p23, 0, %s22
    %s25 = sadd.s32 1, %s16
    %s26 = scalar_select %p23, %s25, %s16
    %p27 = scmp.ge.s32.totalorder %s26, 2
    %s28 = scalar_select %p27, 0, %s26
    %s29 = ssub.s32 %s17, %s24
    %s30 = ssub.s32 %s16, %s28
    %s31 = sor.u32 %s29, %s30
    %p32 = scmp.eq.s32.totalorder %s31, 0
    %s34 = sadd.s32 %s33, 1
    %s35 = scalar_select %p32, %s33, %s34
    %p38 = pneg %p32
    %p39 = scmp.eq.s32.totalorder %s9, 5
    %p40 = por %p38, %p39
    %p41 = scmp.ne.s32.totalorder %s33, %s36
    %p42 = scmp.eq.s32.totalorder %s9, 0
    %p43 = por %p41, %p42
    %p44 = scmp.ne.s32.totalorder %s33, %s36
    %p45 = scmp.eq.s32.totalorder %s14, 5
    %p46 = por %p44, %p45
    %p47 = scmp.ne.s32.totalorder %s36, %s37
    %p48 = scmp.eq.s32.totalorder %s14, 0
    %p49 = por %p47, %p48
    %p50 = scmp.ne.s32.totalorder %s36, %s37
    %p51 = scmp.eq.s32.totalorder %s15, 5
    %p52 = por %p50, %p51
    %p54 = scmp.ne.s32.totalorder %s37, %s53
    %p55 = scmp.eq.s32.totalorder %s15, 0
    %p56 = por %p54, %p55
    %s57 = ssub.s32 %s17, %s24
    %p58 = scmp.eq.s32.totalorder %s57, 0
    %s60 = sadd.s32 %s59, 1
    %s61 = scalar_select %p58, %s59, %s60
    %p64 = pneg %p58
    %p65 = scmp.eq.s32.totalorder %s9, 5
    %p66 = por %p64, %p65
    %p67 = scmp.ne.s32.totalorder %s59, %s62
    %p68 = scmp.eq.s32.totalorder %s9, 0
    %p69 = por %p67, %p68
    %p70 = scmp.ne.s32.totalorder %s59, %s62
    %p71 = scmp.eq.s32.totalorder %s14, 5
    %p72 = por %p70, %p71
    %p73 = scmp.ne.s32.totalorder %s62, %s63
    %p74 = scmp.eq.s32.totalorder %s14, 0
    %p75 = por %p73, %p74
    %p76 = scmp.ne.s32.totalorder %s62, %s63
    %p77 = scmp.eq.s32.totalorder %s15, 5
    %p78 = por %p76, %p77
    %p80 = scmp.ne.s32.totalorder %s63, %s79
    %p81 = scmp.eq.s32.totalorder %s15, 0
    %p82 = por %p80, %p81
    %s84 = sadd.s32 %s83, 1
    %p87 = scmp.eq.s32.totalorder %s9, 5
    %p88 = scmp.ne.s32.totalorder %s83, %s85
    %p89 = scmp.eq.s32.totalorder %s9, 0
    %p90 = por %p88, %p89
    %p91 = scmp.ne.s32.totalorder %s83, %s85
    %p92 = scmp.eq.s32.totalorder %s14, 5
    %p93 = por %p91, %p92
    %p94 = scmp.ne.s32.totalorder %s85, %s86
    %p95 = scmp.eq.s32.totalorder %s14, 0
    %p96 = por %p94, %p95
    %p97 = scmp.ne.s32.totalorder %s85, %s86
    %p98 = scmp.eq.s32.totalorder %s15, 5
    %p99 = por %p97, %p98
    %p101 = scmp.ne.s32.totalorder %s86, %s100
    %p102 = scmp.eq.s32.totalorder %s15, 0
    %p103 = por %p101, %p102
    %s104 = ssub.s32 %s16, %s28
    %p105 = scmp.eq.s32.totalorder %s104, 0
    %s107 = sadd.s32 %s106, 1
    %s108 = scalar_select %p105, %s106, %s107
    %p111 = pneg %p105
    %p112 = scmp.eq.s32.totalorder %s9, 5
    %p113 = por %p111, %p112
    %p114 = scmp.ne.s32.totalorder %s106, %s109
    %p115 = scmp.eq.s32.totalorder %s9, 0
    %p116 = por %p114, %p115
    %p117 = scmp.ne.s32.totalorder %s106, %s109
    %p118 = scmp.eq.s32.totalorder %s14, 5
    %p119 = por %p117, %p118
    %p120 = scmp.ne.s32.totalorder %s109, %s110
    %p121 = scmp.eq.s32.totalorder %s14, 0
    %p122 = por %p120, %p121
    %p123 = scmp.ne.s32.totalorder %s109, %s110
    %p124 = scmp.eq.s32.totalorder %s15, 5
    %p125 = por %p123, %p124
    %p127 = scmp.ne.s32.totalorder %s110, %s126
    %p128 = scmp.eq.s32.totalorder %s15, 0
    %p129 = por %p127, %p128
    %p130 = scmp.le.s32.totalorder 1, %s9
    %p131 = scmp.lt.s32.totalorder %s9, 7
    %p132 = pnand %p130, %p131
    %p133 = pneg %p132
    // Predicated region
    $region9: #{tpu_custom_call.1} parent=5 // pred_check
      _
    $region10: #{tpu_custom_call.1} parent=5 // pred_check_branch
      %135 = sbr.rel (%p132) target = $region12
    $region11: #{tpu_custom_call.1} parent=5 // pred_region
      %s136 = ssub.s32 %s9, 1
      // Predicated region
      $region13: #{tpu_custom_call.1} parent=11 // pred_check
        %p137 = pneg %p96
      $region14: #{tpu_custom_call.1} parent=11 // pred_check_branch
        %139 = sbr.rel (%p137) target = $region16
      $region15: #{tpu_custom_call.1} parent=11 // pred_region
        _
      $region16: #{tpu_custom_call.1} parent=11 // pred_fallthru
        _
    $region12: #{tpu_custom_call.1} parent=5 // pred_fallthru
      _
    %p140 = scmp.lt.s32.totalorder %s9, 6
    // Predicated region
    $region17: #{tpu_custom_call.1} parent=5 // pred_check
      %p141 = pneg %p140
    $region18: #{tpu_custom_call.1} parent=5 // pred_check_branch
      %143 = sbr.rel (%p141) target = $region20
    $region19: #{tpu_custom_call.1} parent=5 // pred_region
      // Predicated region
      $region21: #{tpu_custom_call.1} parent=19 // pred_check
        %p144 = pneg %p43
      $region22: #{tpu_custom_call.1} parent=19 // pred_check_branch
        %146 = sbr.rel (%p144) target = $region24
      $region23: #{tpu_custom_call.1} parent=19 // pred_region
        %s147 = smul.u32 36, %s16
        %p148 = scmp.lt.s32.totalorder %s17, 2
        %s149 = scalar_select %p148, %s17, 2
        %p150 = scmp.lt.s32.totalorder %s147, 71
        %s151 = scalar_select %p150, %s147, 71
        %s152 = smul.addr %s149, 72
        %s153 = sadd.s32 %s151, %s152
        %s154 = smul.addr %s153, 8
        %s155 = scalar_lea.vmem %s0, %s154
        %s156 = smul.u32 36, %s16
      $region24: #{tpu_custom_call.1} parent=19 // pred_fallthru
        _
      // Predicated region
      $region25: #{tpu_custom_call.1} parent=19 // pred_check
        %p157 = pneg %p69
      $region26: #{tpu_custom_call.1} parent=19 // pred_check_branch
        %159 = sbr.rel (%p157) target = $region28
      $region27: #{tpu_custom_call.1} parent=19 // pred_region
        %p160 = scmp.lt.s32.totalorder %s17, 2
        %s161 = scalar_select %p160, %s17, 2
        %s162 = smul.addr %s161, 3
        %s163 = smul.addr %s162, 8
        %s164 = scalar_lea.vmem %s1, %s163
      $region28: #{tpu_custom_call.1} parent=19 // pred_fallthru
        _
    $region20: #{tpu_custom_call.1} parent=5 // pred_fallthru
      _
    %p165 = scmp.le.s32.totalorder 1, %s9
    %p166 = scmp.lt.s32.totalorder %s9, 7
    %p167 = pnand %p165, %p166
    %p168 = pneg %p167
    // Predicated region
    $region29: #{tpu_custom_call.1} parent=5 // pred_check
      _
    $region30: #{tpu_custom_call.1} parent=5 // pred_check_branch
      %170 = sbr.rel (%p167) target = $region32
    $region31: #{tpu_custom_call.1} parent=5 // pred_region
      %s171 = ssub.s32 %s9, 1
      %s172 = smul.u32 36, %s18
      %p173 = scmp.lt.s32.totalorder %s19, 2
      %s174 = scalar_select %p173, %s19, 2
      %p175 = scmp.lt.s32.totalorder %s172, 71
      %s176 = scalar_select %p175, %s172, 71
      %s177 = smul.addr %s174, 72
      %s178 = sadd.s32 %s176, %s177
      %s179 = smul.addr %s178, 8
      %s180 = scalar_lea.vmem %s0, %s179
      %p181 = pneg %p49
      %p182 = pneg %p46
      %p183 = scmp.lt.s32.totalorder %s19, 2
      %s184 = scalar_select %p183, %s19, 2
      %s185 = smul.addr %s184, 3
      %s186 = smul.addr %s185, 8
      %s187 = scalar_lea.vmem %s1, %s186
      %p188 = pneg %p75
      %p189 = pneg %p72
      %p190 = pneg %p96
      %p191 = pneg %p93
      %p192 = pneg %p122
      %p193 = pneg %p119
      %s194 = smul.u32 36, %s18
      %p195 = scmp.lt.s32.totalorder %s194, 71
      %s196 = scalar_select %p195, %s194, 71
      %s197 = smul.addr %s196, 8
      %s198 = scalar_lea.vmem %s3, %s197
      %s199 = smul.u32 36, %s18
      %p200 = scmp.lt.s32.totalorder %s19, 2
      %s201 = scalar_select %p200, %s19, 2
      %p202 = scmp.lt.s32.totalorder %s199, 71
      %s203 = scalar_select %p202, %s199, 71
      %s204 = smul.addr %s201, 72
      %s205 = sadd.s32 %s203, %s204
      %s206 = smul.addr %s205, 8
      %s207 = scalar_lea.vmem %s0, %s206
      %s208 = smul.u32 36, %s18
      %p209 = scmp.lt.s32.totalorder %s19, 2
      %s210 = scalar_select %p209, %s19, 2
      %s211 = smul.addr %s210, 3
      %s212 = smul.addr %s211, 8
      %s213 = scalar_lea.vmem %s1, %s212
      %s214 = smul.u32 36, %s18
      %p215 = scmp.lt.s32.totalorder %s214, 71
      %s216 = scalar_select %p215, %s214, 71
      %s217 = smul.addr %s216, 8
      %s218 = scalar_lea.vmem %s3, %s217
      %s219 = smul.u32 36, %s18
      %p220 = scmp.eq.s32.totalorder %s19, 0
      // Predicated region
      $region33: #{tpu_custom_call.1} parent=31 // pred_check
        %p221 = pneg %p220
      $region34: #{tpu_custom_call.1} parent=31 // pred_check_branch
        %223 = sbr.rel (%p221) target = $region36
      $region35: #{tpu_custom_call.1} parent=31 // pred_region
        %vm224 = vcmask 130048
        %225 = vst.msk [vmem:[#allocation2] sm:$0xff] %vm224, 0.0
        %226 = vst.msk [vmem:[#allocation2 + $0x8] sm:$0xff] %vm224, 0.0
        %227 = vst.msk [vmem:[#allocation2 + $0x10] sm:$0xff] %vm224, 0.0
        %228 = vst.msk [vmem:[#allocation2 + $0x18] sm:$0xff] %vm224, 0.0
        %229 = vst.msk [vmem:[#allocation2 + $0x20] sm:$0xff] %vm224, 0.0
        %230 = vst.msk [vmem:[#allocation2 + $0x28] sm:$0xff] %vm224, 0.0
        %231 = vst.msk [vmem:[#allocation2 + $0x30] sm:$0xff] %vm224, 0.0
        %232 = vst.msk [vmem:[#allocation2 + $0x38] sm:$0xff] %vm224, 0.0
        %233 = vst.msk [vmem:[#allocation2 + $0x40] sm:$0xff] %vm224, 0.0
        %234 = vst.msk [vmem:[#allocation2 + $0x48] sm:$0xff] %vm224, 0.0
        %235 = vst.msk [vmem:[#allocation2 + $0x50] sm:$0xff] %vm224, 0.0
        %236 = vst.msk [vmem:[#allocation2 + $0x58] sm:$0xff] %vm224, 0.0
        %237 = vst.msk [vmem:[#allocation2 + $0x60] sm:$0xff] %vm224, 0.0
        %238 = vst.msk [vmem:[#allocation2 + $0x68] sm:$0xff] %vm224, 0.0
        %239 = vst.msk [vmem:[#allocation2 + $0x70] sm:$0xff] %vm224, 0.0
        %240 = vst.msk [vmem:[#allocation2 + $0x78] sm:$0xff] %vm224, 0.0
        %241 = vst.msk [vmem:[#allocation2 + $0x80] sm:$0xff] %vm224, 0.0
        %242 = vst.msk [vmem:[#allocation2 + $0x88] sm:$0xff] %vm224, 0.0
        %243 = vst.msk [vmem:[#allocation2 + $0x90] sm:$0xff] %vm224, 0.0
        %244 = vst.msk [vmem:[#allocation2 + $0x98] sm:$0xff] %vm224, 0.0
        %245 = vst.msk [vmem:[#allocation2 + $0xa0] sm:$0xff] %vm224, 0.0
        %246 = vst.msk [vmem:[#allocation2 + $0xa8] sm:$0xff] %vm224, 0.0
        %247 = vst.msk [vmem:[#allocation2 + $0xb0] sm:$0xff] %vm224, 0.0
        %248 = vst.msk [vmem:[#allocation2 + $0xb8] sm:$0xff] %vm224, 0.0
        %249 = vst.msk [vmem:[#allocation2 + $0xc0] sm:$0xff] %vm224, 0.0
        %250 = vst.msk [vmem:[#allocation2 + $0xc8] sm:$0xff] %vm224, 0.0
        %251 = vst.msk [vmem:[#allocation2 + $0xd0] sm:$0xff] %vm224, 0.0
        %252 = vst.msk [vmem:[#allocation2 + $0xd8] sm:$0xff] %vm224, 0.0
        %253 = vst.msk [vmem:[#allocation2 + $0xe0] sm:$0xff] %vm224, 0.0
        %254 = vst.msk [vmem:[#allocation2 + $0xe8] sm:$0xff] %vm224, 0.0
        %255 = vst.msk [vmem:[#allocation2 + $0xf0] sm:$0xff] %vm224, 0.0
        %256 = vst.msk [vmem:[#allocation2 + $0xf8] sm:$0xff] %vm224, 0.0
        %257 = vst.msk [vmem:[#allocation2 + $0x100] sm:$0xff] %vm224, 0.0
        %258 = vst.msk [vmem:[#allocation2 + $0x108] sm:$0xff] %vm224, 0.0
        %259 = vst.msk [vmem:[#allocation2 + $0x110] sm:$0xff] %vm224, 0.0
        %260 = vst.msk [vmem:[#allocation2 + $0x118] sm:$0xff] %vm224, 0.0
      $region36: #{tpu_custom_call.1} parent=31 // pred_fallthru
        _
      %v261 = vld [vmem:[%s207] sm:$0xff]
      %v262 = vld [vmem:[%s207 + $0x8] sm:$0xff]
      %v263 = vld [vmem:[%s207 + $0x10] sm:$0xff]
      %v264 = vld [vmem:[%s207 + $0x18] sm:$0xff]
      %v265 = vld [vmem:[%s207 + $0x20] sm:$0xff]
      %v266 = vld [vmem:[%s207 + $0x28] sm:$0xff]
      %v267 = vld [vmem:[%s207 + $0x30] sm:$0xff]
      %v268 = vld [vmem:[%s207 + $0x38] sm:$0xff]
      %v269 = vld [vmem:[%s207 + $0x40] sm:$0xff]
      %v270 = vld [vmem:[%s207 + $0x48] sm:$0xff]
      %v271 = vld [vmem:[%s207 + $0x50] sm:$0xff]
      %v272 = vld [vmem:[%s207 + $0x58] sm:$0xff]
      %v273 = vld [vmem:[%s207 + $0x60] sm:$0xff]
      %v274 = vld [vmem:[%s207 + $0x68] sm:$0xff]
      %v275 = vld [vmem:[%s207 + $0x70] sm:$0xff]
      %v276 = vld [vmem:[%s207 + $0x78] sm:$0xff]
      %v277 = vld [vmem:[%s207 + $0x80] sm:$0xff]
      %v278 = vld [vmem:[%s207 + $0x88] sm:$0xff]
      %v279 = vld [vmem:[%s207 + $0x90] sm:$0xff]
      %v280 = vld [vmem:[%s207 + $0x98] sm:$0xff]
      %v281 = vld [vmem:[%s207 + $0xa0] sm:$0xff]
      %v282 = vld [vmem:[%s207 + $0xa8] sm:$0xff]
      %v283 = vld [vmem:[%s207 + $0xb0] sm:$0xff]
      %v284 = vld [vmem:[%s207 + $0xb8] sm:$0xff]
      %v285 = vld [vmem:[%s207 + $0xc0] sm:$0xff]
      %v286 = vld [vmem:[%s207 + $0xc8] sm:$0xff]
      %v287 = vld [vmem:[%s207 + $0xd0] sm:$0xff]
      %v288 = vld [vmem:[%s207 + $0xd8] sm:$0xff]
      %v289 = vld [vmem:[%s207 + $0xe0] sm:$0xff]
      %v290 = vld [vmem:[%s207 + $0xe8] sm:$0xff]
      %v291 = vld [vmem:[%s207 + $0xf0] sm:$0xff]
      %v292 = vld [vmem:[%s207 + $0xf8] sm:$0xff]
      %v293 = vld [vmem:[%s207 + $0x100] sm:$0xff]
      %v294 = vld [vmem:[%s207 + $0x108] sm:$0xff]
      %v295 = vld [vmem:[%s207 + $0x110] sm:$0xff]
      %v296 = vld [vmem:[%s207 + $0x118] sm:$0xff]
      %v297 = vld [vmem:[#allocation2] sm:$0xff]
      %v298 = vld [vmem:[#allocation2 + $0x8] sm:$0xff]
      %v299 = vld [vmem:[#allocation2 + $0x10] sm:$0xff]
      %v300 = vld [vmem:[#allocation2 + $0x18] sm:$0xff]
      %v301 = vld [vmem:[#allocation2 + $0x20] sm:$0xff]
      %v302 = vld [vmem:[#allocation2 + $0x28] sm:$0xff]
      %v303 = vld [vmem:[#allocation2 + $0x30] sm:$0xff]
      %v304 = vld [vmem:[#allocation2 + $0x38] sm:$0xff]
      %v305 = vld [vmem:[#allocation2 + $0x40] sm:$0xff]
      %v306 = vld [vmem:[#allocation2 + $0x48] sm:$0xff]
      %v307 = vld [vmem:[#allocation2 + $0x50] sm:$0xff]
      %v308 = vld [vmem:[#allocation2 + $0x58] sm:$0xff]
      %v309 = vld [vmem:[#allocation2 + $0x60] sm:$0xff]
      %v310 = vld [vmem:[#allocation2 + $0x68] sm:$0xff]
      %v311 = vld [vmem:[#allocation2 + $0x70] sm:$0xff]
      %v312 = vld [vmem:[#allocation2 + $0x78] sm:$0xff]
      %v313 = vld [vmem:[#allocation2 + $0x80] sm:$0xff]
      %v314 = vld [vmem:[#allocation2 + $0x88] sm:$0xff]
      %v315 = vld [vmem:[#allocation2 + $0x90] sm:$0xff]
      %v316 = vld [vmem:[#allocation2 + $0x98] sm:$0xff]
      %v317 = vld [vmem:[#allocation2 + $0xa0] sm:$0xff]
      %v318 = vld [vmem:[#allocation2 + $0xa8] sm:$0xff]
      %v319 = vld [vmem:[#allocation2 + $0xb0] sm:$0xff]
      %v320 = vld [vmem:[#allocation2 + $0xb8] sm:$0xff]
      %v321 = vld [vmem:[#allocation2 + $0xc0] sm:$0xff]
      %v322 = vld [vmem:[#allocation2 + $0xc8] sm:$0xff]
      %v323 = vld [vmem:[#allocation2 + $0xd0] sm:$0xff]
      %v324 = vld [vmem:[#allocation2 + $0xd8] sm:$0xff]
      %v325 = vld [vmem:[#allocation2 + $0xe0] sm:$0xff]
      %v326 = vld [vmem:[#allocation2 + $0xe8] sm:$0xff]
      %v327 = vld [vmem:[#allocation2 + $0xf0] sm:$0xff]
      %v328 = vld [vmem:[#allocation2 + $0xf8] sm:$0xff]
      %v329 = vld [vmem:[#allocation2 + $0x100] sm:$0xff]
      %v330 = vld [vmem:[#allocation2 + $0x108] sm:$0xff]
      %v331 = vld [vmem:[#allocation2 + $0x110] sm:$0xff]
      %v332 = vld [vmem:[#allocation2 + $0x118] sm:$0xff]
      %v333 = vld [vmem:[%s213] sm:$0xff]
      %vm334 = vcmask 64512
      %v336 = vsel %vm334, %v261, 0
      %v339 = vsel %vm334, %v262, 0
      %v342 = vsel %vm334, %v263, 0
      %v345 = vsel %vm334, %v264, 0
      %v348 = vsel %vm334, %v265, 0
      %v351 = vsel %vm334, %v266, 0
      %v354 = vsel %vm334, %v267, 0
      %v357 = vsel %vm334, %v268, 0
      %v360 = vsel %vm334, %v269, 0
      %v363 = vsel %vm334, %v270, 0
      %v366 = vsel %vm334, %v271, 0
      %v369 = vsel %vm334, %v272, 0
      %v372 = vsel %vm334, %v273, 0
      %v375 = vsel %vm334, %v274, 0
      %v378 = vsel %vm334, %v275, 0
      %v381 = vsel %vm334, %v276, 0
      %v384 = vsel %vm334, %v277, 0
      %v387 = vsel %vm334, %v278, 0
      %v390 = vsel %vm334, %v279, 0
      %v393 = vsel %vm334, %v280, 0
      %v396 = vsel %vm334, %v281, 0
      %v399 = vsel %vm334, %v282, 0
      %v402 = vsel %vm334, %v283, 0
      %v405 = vsel %vm334, %v284, 0
      %v408 = vsel %vm334, %v285, 0
      %v411 = vsel %vm334, %v286, 0
      %v414 = vsel %vm334, %v287, 0
      %v417 = vsel %vm334, %v288, 0
      %v420 = vsel %vm334, %v289, 0
      %v423 = vsel %vm334, %v290, 0
      %v426 = vsel %vm334, %v291, 0
      %v429 = vsel %vm334, %v292, 0
      %v432 = vsel %vm334, %v293, 0
      %v435 = vsel %vm334, %v294, 0
      %v438 = vsel %vm334, %v295, 0
      %v441 = vsel %vm334, %v296, 0
      %443 = vmatpush.msra.mxu0 0.0
      %444 = vmatpush.msra.mxu0 0.0
      %445 = vmatpush.msra.mxu0 0.0
      %446 = vmatpush.msra.mxu0 0.0
      %447 = vmatpush.msra.mxu0 0.0
      %448 = vmatpush.msra.mxu0 0.0
      %449 = vmatpush.msra.mxu0 0.0
      %450 = vmatpush.msra.mxu0 0.0
      %451 = vmatpush.msra.mxu0 0.0
      %452 = vmatpush.msra.mxu0 0.0
      %453 = vmatpush.msra.mxu0 0.0
      %454 = vmatpush.msra.mxu0 0.0
      %455 = vmatpush.msra.mxu0 0.0
      %456 = vmatpush.msra.mxu0 0.0
      %457 = vmatpush.msra.mxu0 0.0
      %458 = vmatpush.msra.mxu0 %v333
      %459 = vmatmul.f32.gmra.mxu0 %v336
      %v460 = vpop.f32.mrf.mxu0
      %v461 = vadd.f32 0.0, %v460
      %462 = vmatmul.f32.gmra.mxu0 %v339
      %v463 = vpop.f32.mrf.mxu0
      %v464 = vadd.f32 0.0, %v463
      %465 = vmatmul.f32.gmra.mxu0 %v342
      %v466 = vpop.f32.mrf.mxu0
      %v467 = vadd.f32 0.0, %v466
      %468 = vmatmul.f32.gmra.mxu0 %v345
      %v469 = vpop.f32.mrf.mxu0
      %v470 = vadd.f32 0.0, %v469
      %471 = vmatmul.f32.gmra.mxu0 %v348
      %v472 = vpop.f32.mrf.mxu0
      %v473 = vadd.f32 0.0, %v472
      %474 = vmatmul.f32.gmra.mxu0 %v351
      %v475 = vpop.f32.mrf.mxu0
      %v476 = vadd.f32 0.0, %v475
      %477 = vmatmul.f32.gmra.mxu0 %v354
      %v478 = vpop.f32.mrf.mxu0
      %v479 = vadd.f32 0.0, %v478
      %480 = vmatmul.f32.gmra.mxu0 %v357
      %v481 = vpop.f32.mrf.mxu0
      %v482 = vadd.f32 0.0, %v481
      %483 = vmatmul.f32.gmra.mxu0 %v360
      %v484 = vpop.f32.mrf.mxu0
      %v485 = vadd.f32 0.0, %v484
      %486 = vmatmul.f32.gmra.mxu0 %v363
      %v487 = vpop.f32.mrf.mxu0
      %v488 = vadd.f32 0.0, %v487
      %489 = vmatmul.f32.gmra.mxu0 %v366
      %v490 = vpop.f32.mrf.mxu0
      %v491 = vadd.f32 0.0, %v490
      %492 = vmatmul.f32.gmra.mxu0 %v369
      %v493 = vpop.f32.mrf.mxu0
      %v494 = vadd.f32 0.0, %v493
      %495 = vmatmul.f32.gmra.mxu0 %v372
      %v496 = vpop.f32.mrf.mxu0
      %v497 = vadd.f32 0.0, %v496
      %498 = vmatmul.f32.gmra.mxu0 %v375
      %v499 = vpop.f32.mrf.mxu0
      %v500 = vadd.f32 0.0, %v499
      %501 = vmatmul.f32.gmra.mxu0 %v378
      %v502 = vpop.f32.mrf.mxu0
      %v503 = vadd.f32 0.0, %v502
      %504 = vmatmul.f32.gmra.mxu0 %v381
      %v505 = vpop.f32.mrf.mxu0
      %v506 = vadd.f32 0.0, %v505
      %507 = vmatmul.f32.gmra.mxu0 %v384
      %v508 = vpop.f32.mrf.mxu0
      %v509 = vadd.f32 0.0, %v508
      %510 = vmatmul.f32.gmra.mxu0 %v387
      %v511 = vpop.f32.mrf.mxu0
      %v512 = vadd.f32 0.0, %v511
      %513 = vmatmul.f32.gmra.mxu0 %v390
      %v514 = vpop.f32.mrf.mxu0
      %v515 = vadd.f32 0.0, %v514
      %516 = vmatmul.f32.gmra.mxu0 %v393
      %v517 = vpop.f32.mrf.mxu0
      %v518 = vadd.f32 0.0, %v517
      %519 = vmatmul.f32.gmra.mxu0 %v396
      %v520 = vpop.f32.mrf.mxu0
      %v521 = vadd.f32 0.0, %v520
      %522 = vmatmul.f32.gmra.mxu0 %v399
      %v523 = vpop.f32.mrf.mxu0
      %v524 = vadd.f32 0.0, %v523
      %525 = vmatmul.f32.gmra.mxu0 %v402
      %v526 = vpop.f32.mrf.mxu0
      %v527 = vadd.f32 0.0, %v526
      %528 = vmatmul.f32.gmra.mxu0 %v405
      %v529 = vpop.f32.mrf.mxu0
      %v530 = vadd.f32 0.0, %v529
      %531 = vmatmul.f32.gmra.mxu0 %v408
      %v532 = vpop.f32.mrf.mxu0
      %v533 = vadd.f32 0.0, %v532
      %534 = vmatmul.f32.gmra.mxu0 %v411
      %v535 = vpop.f32.mrf.mxu0
      %v536 = vadd.f32 0.0, %v535
      %537 = vmatmul.f32.gmra.mxu0 %v414
      %v538 = vpop.f32.mrf.mxu0
      %v539 = vadd.f32 0.0, %v538
      %540 = vmatmul.f32.gmra.mxu0 %v417
      %v541 = vpop.f32.mrf.mxu0
      %v542 = vadd.f32 0.0, %v541
      %543 = vmatmul.f32.gmra.mxu0 %v420
      %v544 = vpop.f32.mrf.mxu0
      %v545 = vadd.f32 0.0, %v544
      %546 = vmatmul.f32.gmra.mxu0 %v423
      %v547 = vpop.f32.mrf.mxu0
      %v548 = vadd.f32 0.0, %v547
      %549 = vmatmul.f32.gmra.mxu0 %v426
      %v550 = vpop.f32.mrf.mxu0
      %v551 = vadd.f32 0.0, %v550
      %552 = vmatmul.f32.gmra.mxu0 %v429
      %v553 = vpop.f32.mrf.mxu0
      %v554 = vadd.f32 0.0, %v553
      %555 = vmatmul.f32.gmra.mxu0 %v432
      %v556 = vpop.f32.mrf.mxu0
      %v557 = vadd.f32 0.0, %v556
      %558 = vmatmul.f32.gmra.mxu0 %v435
      %v559 = vpop.f32.mrf.mxu0
      %v560 = vadd.f32 0.0, %v559
      %561 = vmatmul.f32.gmra.mxu0 %v438
      %v562 = vpop.f32.mrf.mxu0
      %v563 = vadd.f32 0.0, %v562
      %564 = vmatmul.f32.gmra.mxu0 %v441
      %v565 = vpop.f32.mrf.mxu0
      %v566 = vadd.f32 0.0, %v565
      %567 = vdwg.mxu0
      %v568 = vadd.f32 %v297, %v461
      %v569 = vadd.f32 %v298, %v464
      %v570 = vadd.f32 %v299, %v467
      %v571 = vadd.f32 %v300, %v470
      %v572 = vadd.f32 %v301, %v473
      %v573 = vadd.f32 %v302, %v476
      %v574 = vadd.f32 %v303, %v479
      %v575 = vadd.f32 %v304, %v482
      %v576 = vadd.f32 %v305, %v485
      %v577 = vadd.f32 %v306, %v488
      %v578 = vadd.f32 %v307, %v491
      %v579 = vadd.f32 %v308, %v494
      %v580 = vadd.f32 %v309, %v497
      %v581 = vadd.f32 %v310, %v500
      %v582 = vadd.f32 %v311, %v503
      %v583 = vadd.f32 %v312, %v506
      %v584 = vadd.f32 %v313, %v509
      %v585 = vadd.f32 %v314, %v512
      %v586 = vadd.f32 %v315, %v515
      %v587 = vadd.f32 %v316, %v518
      %v588 = vadd.f32 %v317, %v521
      %v589 = vadd.f32 %v318, %v524
      %v590 = vadd.f32 %v319, %v527
      %v591 = vadd.f32 %v320, %v530
      %v592 = vadd.f32 %v321, %v533
      %v593 = vadd.f32 %v322, %v536
      %v594 = vadd.f32 %v323, %v539
      %v595 = vadd.f32 %v324, %v542
      %v596 = vadd.f32 %v325, %v545
      %v597 = vadd.f32 %v326, %v548
      %v598 = vadd.f32 %v327, %v551
      %v599 = vadd.f32 %v328, %v554
      %v600 = vadd.f32 %v329, %v557
      %v601 = vadd.f32 %v330, %v560
      %v602 = vadd.f32 %v331, %v563
      %v603 = vadd.f32 %v332, %v566
      %vm604 = vcmask 1046528
      %v605 = vrot.slane %v261, 1
      %v606 = vrot.slane %v262, 1
      %v607 = vsel %vm604, %v605, %v606
      %v608 = vrot.slane %v263, 1
      %v609 = vsel %vm604, %v606, %v608
      %v610 = vrot.slane %v264, 1
      %v611 = vsel %vm604, %v608, %v610
      %v612 = vrot.slane %v265, 1
      %v613 = vsel %vm604, %v610, %v612
      %v614 = vrot.slane %v266, 1
      %v615 = vsel %vm604, %v612, %v614
      %v616 = vrot.slane %v267, 1
      %v617 = vsel %vm604, %v614, %v616
      %v618 = vrot.slane %v268, 1
      %v619 = vsel %vm604, %v616, %v618
      %v620 = vrot.slane %v269, 1
      %v621 = vsel %vm604, %v618, %v620
      %v622 = vrot.slane %v270, 1
      %v623 = vsel %vm604, %v620, %v622
      %v624 = vrot.slane %v271, 1
      %v625 = vsel %vm604, %v622, %v624
      %v626 = vrot.slane %v272, 1
      %v627 = vsel %vm604, %v624, %v626
      %v628 = vrot.slane %v273, 1
      %v629 = vsel %vm604, %v626, %v628
      %v630 = vrot.slane %v274, 1
      %v631 = vsel %vm604, %v628, %v630
      %v632 = vrot.slane %v275, 1
      %v633 = vsel %vm604, %v630, %v632
      %v634 = vrot.slane %v276, 1
      %v635 = vsel %vm604, %v632, %v634
      %v636 = vrot.slane %v277, 1
      %v637 = vsel %vm604, %v634, %v636
      %v638 = vrot.slane %v278, 1
      %v639 = vsel %vm604, %v636, %v638
      %v640 = vrot.slane %v279, 1
      %v641 = vsel %vm604, %v638, %v640
      %v642 = vrot.slane %v280, 1
      %v643 = vsel %vm604, %v640, %v642
      %v644 = vrot.slane %v281, 1
      %v645 = vsel %vm604, %v642, %v644
      %v646 = vrot.slane %v282, 1
      %v647 = vsel %vm604, %v644, %v646
      %v648 = vrot.slane %v283, 1
      %v649 = vsel %vm604, %v646, %v648
      %v650 = vrot.slane %v284, 1
      %v651 = vsel %vm604, %v648, %v650
      %v652 = vrot.slane %v285, 1
      %v653 = vsel %vm604, %v650, %v652
      %v654 = vrot.slane %v286, 1
      %v655 = vsel %vm604, %v652, %v654
      %v656 = vrot.slane %v287, 1
      %v657 = vsel %vm604, %v654, %v656
      %v658 = vrot.slane %v288, 1
      %v659 = vsel %vm604, %v656, %v658
      %v660 = vrot.slane %v289, 1
      %v661 = vsel %vm604, %v658, %v660
      %v662 = vrot.slane %v290, 1
      %v663 = vsel %vm604, %v660, %v662
      %v664 = vrot.slane %v291, 1
      %v665 = vsel %vm604, %v662, %v664
      %v666 = vrot.slane %v292, 1
      %v667 = vsel %vm604, %v664, %v666
      %v668 = vrot.slane %v293, 1
      %v669 = vsel %vm604, %v666, %v668
      %v670 = vrot.slane %v294, 1
      %v671 = vsel %vm604, %v668, %v670
      %v672 = vrot.slane %v295, 1
      %v673 = vsel %vm604, %v670, %v672
      %v674 = vrot.slane %v296, 1
      %v675 = vsel %vm604, %v672, %v674
      %v678 = vsel %vm604, %v674, %v605
      %s679 = scalar_lea.vmem %s213, 8
      %v680 = vld [vmem:[%s679] sm:$0xff]
      %v681 = vsel %vm334, %v607, 0
      %v683 = vsel %vm334, %v609, 0
      %v685 = vsel %vm334, %v611, 0
      %v687 = vsel %vm334, %v613, 0
      %v689 = vsel %vm334, %v615, 0
      %v691 = vsel %vm334, %v617, 0
      %v693 = vsel %vm334, %v619, 0
      %v695 = vsel %vm334, %v621, 0
      %v697 = vsel %vm334, %v623, 0
      %v699 = vsel %vm334, %v625, 0
      %v701 = vsel %vm334, %v627, 0
      %v703 = vsel %vm334, %v629, 0
      %v705 = vsel %vm334, %v631, 0
      %v707 = vsel %vm334, %v633, 0
      %v709 = vsel %vm334, %v635, 0
      %v711 = vsel %vm334, %v637, 0
      %v713 = vsel %vm334, %v639, 0
      %v715 = vsel %vm334, %v641, 0
      %v717 = vsel %vm334, %v643, 0
      %v719 = vsel %vm334, %v645, 0
      %v721 = vsel %vm334, %v647, 0
      %v723 = vsel %vm334, %v649, 0
      %v725 = vsel %vm334, %v651, 0
      %v727 = vsel %vm334, %v653, 0
      %v729 = vsel %vm334, %v655, 0
      %v731 = vsel %vm334, %v657, 0
      %v733 = vsel %vm334, %v659, 0
      %v735 = vsel %vm334, %v661, 0
      %v737 = vsel %vm334, %v663, 0
      %v739 = vsel %vm334, %v665, 0
      %v741 = vsel %vm334, %v667, 0
      %v743 = vsel %vm334, %v669, 0
      %v745 = vsel %vm334, %v671, 0
      %v747 = vsel %vm334, %v673, 0
      %v749 = vsel %vm334, %v675, 0
      %v752 = vsel %vm334, %v678, 0
      %754 = vmatpush.msra.mxu0 0.0
      %755 = vmatpush.msra.mxu0 0.0
      %756 = vmatpush.msra.mxu0 0.0
      %757 = vmatpush.msra.mxu0 0.0
      %758 = vmatpush.msra.mxu0 0.0
      %759 = vmatpush.msra.mxu0 0.0
      %760 = vmatpush.msra.mxu0 0.0
      %761 = vmatpush.msra.mxu0 0.0
      %762 = vmatpush.msra.mxu0 0.0
      %763 = vmatpush.msra.mxu0 0.0
      %764 = vmatpush.msra.mxu0 0.0
      %765 = vmatpush.msra.mxu0 0.0
      %766 = vmatpush.msra.mxu0 0.0
      %767 = vmatpush.msra.mxu0 0.0
      %768 = vmatpush.msra.mxu0 0.0
      %769 = vmatpush.msra.mxu0 %v680
      %770 = vmatmul.f32.gmra.mxu0 %v681
      %v771 = vpop.f32.mrf.mxu0
      %v772 = vadd.f32 0.0, %v771
      %773 = vmatmul.f32.gmra.mxu0 %v683
      %v774 = vpop.f32.mrf.mxu0
      %v775 = vadd.f32 0.0, %v774
      %776 = vmatmul.f32.gmra.mxu0 %v685
      %v777 = vpop.f32.mrf.mxu0
      %v778 = vadd.f32 0.0, %v777
      %779 = vmatmul.f32.gmra.mxu0 %v687
      %v780 = vpop.f32.mrf.mxu0
      %v781 = vadd.f32 0.0, %v780
      %782 = vmatmul.f32.gmra.mxu0 %v689
      %v783 = vpop.f32.mrf.mxu0
      %v784 = vadd.f32 0.0, %v783
      %785 = vmatmul.f32.gmra.mxu0 %v691
      %v786 = vpop.f32.mrf.mxu0
      %v787 = vadd.f32 0.0, %v786
      %788 = vmatmul.f32.gmra.mxu0 %v693
      %v789 = vpop.f32.mrf.mxu0
      %v790 = vadd.f32 0.0, %v789
      %791 = vmatmul.f32.gmra.mxu0 %v695
      %v792 = vpop.f32.mrf.mxu0
      %v793 = vadd.f32 0.0, %v792
      %794 = vmatmul.f32.gmra.mxu0 %v697
      %v795 = vpop.f32.mrf.mxu0
      %v796 = vadd.f32 0.0, %v795
      %797 = vmatmul.f32.gmra.mxu0 %v699
      %v798 = vpop.f32.mrf.mxu0
      %v799 = vadd.f32 0.0, %v798
      %800 = vmatmul.f32.gmra.mxu0 %v701
      %v801 = vpop.f32.mrf.mxu0
      %v802 = vadd.f32 0.0, %v801
      %803 = vmatmul.f32.gmra.mxu0 %v703
      %v804 = vpop.f32.mrf.mxu0
      %v805 = vadd.f32 0.0, %v804
      %806 = vmatmul.f32.gmra.mxu0 %v705
      %v807 = vpop.f32.mrf.mxu0
      %v808 = vadd.f32 0.0, %v807
      %809 = vmatmul.f32.gmra.mxu0 %v707
      %v810 = vpop.f32.mrf.mxu0
      %v811 = vadd.f32 0.0, %v810
      %812 = vmatmul.f32.gmra.mxu0 %v709
      %v813 = vpop.f32.mrf.mxu0
      %v814 = vadd.f32 0.0, %v813
      %815 = vmatmul.f32.gmra.mxu0 %v711
      %v816 = vpop.f32.mrf.mxu0
      %v817 = vadd.f32 0.0, %v816
      %818 = vmatmul.f32.gmra.mxu0 %v713
      %v819 = vpop.f32.mrf.mxu0
      %v820 = vadd.f32 0.0, %v819
      %821 = vmatmul.f32.gmra.mxu0 %v715
      %v822 = vpop.f32.mrf.mxu0
      %v823 = vadd.f32 0.0, %v822
      %824 = vmatmul.f32.gmra.mxu0 %v717
      %v825 = vpop.f32.mrf.mxu0
      %v826 = vadd.f32 0.0, %v825
      %827 = vmatmul.f32.gmra.mxu0 %v719
      %v828 = vpop.f32.mrf.mxu0
      %v829 = vadd.f32 0.0, %v828
      %830 = vmatmul.f32.gmra.mxu0 %v721
      %v831 = vpop.f32.mrf.mxu0
      %v832 = vadd.f32 0.0, %v831
      %833 = vmatmul.f32.gmra.mxu0 %v723
      %v834 = vpop.f32.mrf.mxu0
      %v835 = vadd.f32 0.0, %v834
      %836 = vmatmul.f32.gmra.mxu0 %v725
      %v837 = vpop.f32.mrf.mxu0
      %v838 = vadd.f32 0.0, %v837
      %839 = vmatmul.f32.gmra.mxu0 %v727
      %v840 = vpop.f32.mrf.mxu0
      %v841 = vadd.f32 0.0, %v840
      %842 = vmatmul.f32.gmra.mxu0 %v729
      %v843 = vpop.f32.mrf.mxu0
      %v844 = vadd.f32 0.0, %v843
      %845 = vmatmul.f32.gmra.mxu0 %v731
      %v846 = vpop.f32.mrf.mxu0
      %v847 = vadd.f32 0.0, %v846
      %848 = vmatmul.f32.gmra.mxu0 %v733
      %v849 = vpop.f32.mrf.mxu0
      %v850 = vadd.f32 0.0, %v849
      %851 = vmatmul.f32.gmra.mxu0 %v735
      %v852 = vpop.f32.mrf.mxu0
      %v853 = vadd.f32 0.0, %v852
      %854 = vmatmul.f32.gmra.mxu0 %v737
      %v855 = vpop.f32.mrf.mxu0
      %v856 = vadd.f32 0.0, %v855
      %857 = vmatmul.f32.gmra.mxu0 %v739
      %v858 = vpop.f32.mrf.mxu0
      %v859 = vadd.f32 0.0, %v858
      %860 = vmatmul.f32.gmra.mxu0 %v741
      %v861 = vpop.f32.mrf.mxu0
      %v862 = vadd.f32 0.0, %v861
      %863 = vmatmul.f32.gmra.mxu0 %v743
      %v864 = vpop.f32.mrf.mxu0
      %v865 = vadd.f32 0.0, %v864
      %866 = vmatmul.f32.gmra.mxu0 %v745
      %v867 = vpop.f32.mrf.mxu0
      %v868 = vadd.f32 0.0, %v867
      %869 = vmatmul.f32.gmra.mxu0 %v747
      %v870 = vpop.f32.mrf.mxu0
      %v871 = vadd.f32 0.0, %v870
      %872 = vmatmul.f32.gmra.mxu0 %v749
      %v873 = vpop.f32.mrf.mxu0
      %v874 = vadd.f32 0.0, %v873
      %875 = vmatmul.f32.gmra.mxu0 %v752
      %v876 = vpop.f32.mrf.mxu0
      %v877 = vadd.f32 0.0, %v876
      %878 = vdwg.mxu0
      %v879 = vadd.f32 %v568, %v772
      %v880 = vadd.f32 %v569, %v775
      %v881 = vadd.f32 %v570, %v778
      %v882 = vadd.f32 %v571, %v781
      %v883 = vadd.f32 %v572, %v784
      %v884 = vadd.f32 %v573, %v787
      %v885 = vadd.f32 %v574, %v790
      %v886 = vadd.f32 %v575, %v793
      %v887 = vadd.f32 %v576, %v796
      %v888 = vadd.f32 %v577, %v799
      %v889 = vadd.f32 %v578, %v802
      %v890 = vadd.f32 %v579, %v805
      %v891 = vadd.f32 %v580, %v808
      %v892 = vadd.f32 %v581, %v811
      %v893 = vadd.f32 %v582, %v814
      %v894 = vadd.f32 %v583, %v817
      %v895 = vadd.f32 %v584, %v820
      %v896 = vadd.f32 %v585, %v823
      %v897 = vadd.f32 %v586, %v826
      %v898 = vadd.f32 %v587, %v829
      %v899 = vadd.f32 %v588, %v832
      %v900 = vadd.f32 %v589, %v835
      %v901 = vadd.f32 %v590, %v838
      %v902 = vadd.f32 %v591, %v841
      %v903 = vadd.f32 %v592, %v844
      %v904 = vadd.f32 %v593, %v847
      %v905 = vadd.f32 %v594, %v850
      %v906 = vadd.f32 %v595, %v853
      %v907 = vadd.f32 %v596, %v856
      %v908 = vadd.f32 %v597, %v859
      %v909 = vadd.f32 %v598, %v862
      %v910 = vadd.f32 %v599, %v865
      %v911 = vadd.f32 %v600, %v868
      %v912 = vadd.f32 %v601, %v871
      %v913 = vadd.f32 %v602, %v874
      %v914 = vadd.f32 %v603, %v877
      %vm915 = vcmask 1045504
      %v916 = vrot.slane %v261, 2
      %v917 = vrot.slane %v262, 2
      %v918 = vsel %vm915, %v916, %v917
      %v919 = vrot.slane %v263, 2
      %v920 = vsel %vm915, %v917, %v919
      %v921 = vrot.slane %v264, 2
      %v922 = vsel %vm915, %v919, %v921
      %v923 = vrot.slane %v265, 2
      %v924 = vsel %vm915, %v921, %v923
      %v925 = vrot.slane %v266, 2
      %v926 = vsel %vm915, %v923, %v925
      %v927 = vrot.slane %v267, 2
      %v928 = vsel %vm915, %v925, %v927
      %v929 = vrot.slane %v268, 2
      %v930 = vsel %vm915, %v927, %v929
      %v931 = vrot.slane %v269, 2
      %v932 = vsel %vm915, %v929, %v931
      %v933 = vrot.slane %v270, 2
      %v934 = vsel %vm915, %v931, %v933
      %v935 = vrot.slane %v271, 2
      %v936 = vsel %vm915, %v933, %v935
      %v937 = vrot.slane %v272, 2
      %v938 = vsel %vm915, %v935, %v937
      %v939 = vrot.slane %v273, 2
      %v940 = vsel %vm915, %v937, %v939
      %v941 = vrot.slane %v274, 2
      %v942 = vsel %vm915, %v939, %v941
      %v943 = vrot.slane %v275, 2
      %v944 = vsel %vm915, %v941, %v943
      %v945 = vrot.slane %v276, 2
      %v946 = vsel %vm915, %v943, %v945
      %v947 = vrot.slane %v277, 2
      %v948 = vsel %vm915, %v945, %v947
      %v949 = vrot.slane %v278, 2
      %v950 = vsel %vm915, %v947, %v949
      %v951 = vrot.slane %v279, 2
      %v952 = vsel %vm915, %v949, %v951
      %v953 = vrot.slane %v280, 2
      %v954 = vsel %vm915, %v951, %v953
      %v955 = vrot.slane %v281, 2
      %v956 = vsel %vm915, %v953, %v955
      %v957 = vrot.slane %v282, 2
      %v958 = vsel %vm915, %v955, %v957
      %v959 = vrot.slane %v283, 2
      %v960 = vsel %vm915, %v957, %v959
      %v961 = vrot.slane %v284, 2
      %v962 = vsel %vm915, %v959, %v961
      %v963 = vrot.slane %v285, 2
      %v964 = vsel %vm915, %v961, %v963
      %v965 = vrot.slane %v286, 2
      %v966 = vsel %vm915, %v963, %v965
      %v967 = vrot.slane %v287, 2
      %v968 = vsel %vm915, %v965, %v967
      %v969 = vrot.slane %v288, 2
      %v970 = vsel %vm915, %v967, %v969
      %v971 = vrot.slane %v289, 2
      %v972 = vsel %vm915, %v969, %v971
      %v973 = vrot.slane %v290, 2
      %v974 = vsel %vm915, %v971, %v973
      %v975 = vrot.slane %v291, 2
      %v976 = vsel %vm915, %v973, %v975
      %v977 = vrot.slane %v292, 2
      %v978 = vsel %vm915, %v975, %v977
      %v979 = vrot.slane %v293, 2
      %v980 = vsel %vm915, %v977, %v979
      %v981 = vrot.slane %v294, 2
      %v982 = vsel %vm915, %v979, %v981
      %v983 = vrot.slane %v295, 2
      %v984 = vsel %vm915, %v981, %v983
      %v985 = vrot.slane %v296, 2
      %v986 = vsel %vm915, %v983, %v985
      %v989 = vsel %vm915, %v985, %v916
      %s990 = scalar_lea.vmem %s213, 16
      %v991 = vld [vmem:[%s990] sm:$0xff]
      %v992 = vsel %vm334, %v918, 0
      %v994 = vsel %vm334, %v920, 0
      %v996 = vsel %vm334, %v922, 0
      %v998 = vsel %vm334, %v924, 0
      %v1000 = vsel %vm334, %v926, 0
      %v1002 = vsel %vm334, %v928, 0
      %v1004 = vsel %vm334, %v930, 0
      %v1006 = vsel %vm334, %v932, 0
      %v1008 = vsel %vm334, %v934, 0
      %v1010 = vsel %vm334, %v936, 0
      %v1012 = vsel %vm334, %v938, 0
      %v1014 = vsel %vm334, %v940, 0
      %v1016 = vsel %vm334, %v942, 0
      %v1018 = vsel %vm334, %v944, 0
      %v1020 = vsel %vm334, %v946, 0
      %v1022 = vsel %vm334, %v948, 0
      %v1024 = vsel %vm334, %v950, 0
      %v1026 = vsel %vm334, %v952, 0
      %v1028 = vsel %vm334, %v954, 0
      %v1030 = vsel %vm334, %v956, 0
      %v1032 = vsel %vm334, %v958, 0
      %v1034 = vsel %vm334, %v960, 0
      %v1036 = vsel %vm334, %v962, 0
      %v1038 = vsel %vm334, %v964, 0
      %v1040 = vsel %vm334, %v966, 0
      %v1042 = vsel %vm334, %v968, 0
      %v1044 = vsel %vm334, %v970, 0
      %v1046 = vsel %vm334, %v972, 0
      %v1048 = vsel %vm334, %v974, 0
      %v1050 = vsel %vm334, %v976, 0
      %v1052 = vsel %vm334, %v978, 0
      %v1054 = vsel %vm334, %v980, 0
      %v1056 = vsel %vm334, %v982, 0
      %v1058 = vsel %vm334, %v984, 0
      %v1060 = vsel %vm334, %v986, 0
      %v1063 = vsel %vm334, %v989, 0
      %1065 = vmatpush.msra.mxu0 0.0
      %1066 = vmatpush.msra.mxu0 0.0
      %1067 = vmatpush.msra.mxu0 0.0
      %1068 = vmatpush.msra.mxu0 0.0
      %1069 = vmatpush.msra.mxu0 0.0
      %1070 = vmatpush.msra.mxu0 0.0
      %1071 = vmatpush.msra.mxu0 0.0
      %1072 = vmatpush.msra.mxu0 0.0
      %1073 = vmatpush.msra.mxu0 0.0
      %1074 = vmatpush.msra.mxu0 0.0
      %1075 = vmatpush.msra.mxu0 0.0
      %1076 = vmatpush.msra.mxu0 0.0
      %1077 = vmatpush.msra.mxu0 0.0
      %1078 = vmatpush.msra.mxu0 0.0
      %1079 = vmatpush.msra.mxu0 0.0
      %1080 = vmatpush.msra.mxu0 %v991
      %1081 = vmatmul.f32.gmra.mxu0 %v992
      %v1082 = vpop.f32.mrf.mxu0
      %v1083 = vadd.f32 0.0, %v1082
      %1084 = vmatmul.f32.gmra.mxu0 %v994
      %v1085 = vpop.f32.mrf.mxu0
      %v1086 = vadd.f32 0.0, %v1085
      %1087 = vmatmul.f32.gmra.mxu0 %v996
      %v1088 = vpop.f32.mrf.mxu0
      %v1089 = vadd.f32 0.0, %v1088
      %1090 = vmatmul.f32.gmra.mxu0 %v998
      %v1091 = vpop.f32.mrf.mxu0
      %v1092 = vadd.f32 0.0, %v1091
      %1093 = vmatmul.f32.gmra.mxu0 %v1000
      %v1094 = vpop.f32.mrf.mxu0
      %v1095 = vadd.f32 0.0, %v1094
      %1096 = vmatmul.f32.gmra.mxu0 %v1002
      %v1097 = vpop.f32.mrf.mxu0
      %v1098 = vadd.f32 0.0, %v1097
      %1099 = vmatmul.f32.gmra.mxu0 %v1004
      %v1100 = vpop.f32.mrf.mxu0
      %v1101 = vadd.f32 0.0, %v1100
      %1102 = vmatmul.f32.gmra.mxu0 %v1006
      %v1103 = vpop.f32.mrf.mxu0
      %v1104 = vadd.f32 0.0, %v1103
      %1105 = vmatmul.f32.gmra.mxu0 %v1008
      %v1106 = vpop.f32.mrf.mxu0
      %v1107 = vadd.f32 0.0, %v1106
      %1108 = vmatmul.f32.gmra.mxu0 %v1010
      %v1109 = vpop.f32.mrf.mxu0
      %v1110 = vadd.f32 0.0, %v1109
      %1111 = vmatmul.f32.gmra.mxu0 %v1012
      %v1112 = vpop.f32.mrf.mxu0
      %v1113 = vadd.f32 0.0, %v1112
      %1114 = vmatmul.f32.gmra.mxu0 %v1014
      %v1115 = vpop.f32.mrf.mxu0
      %v1116 = vadd.f32 0.0, %v1115
      %1117 = vmatmul.f32.gmra.mxu0 %v1016
      %v1118 = vpop.f32.mrf.mxu0
      %v1119 = vadd.f32 0.0, %v1118
      %1120 = vmatmul.f32.gmra.mxu0 %v1018
      %v1121 = vpop.f32.mrf.mxu0
      %v1122 = vadd.f32 0.0, %v1121
      %1123 = vmatmul.f32.gmra.mxu0 %v1020
      %v1124 = vpop.f32.mrf.mxu0
      %v1125 = vadd.f32 0.0, %v1124
      %1126 = vmatmul.f32.gmra.mxu0 %v1022
      %v1127 = vpop.f32.mrf.mxu0
      %v1128 = vadd.f32 0.0, %v1127
      %1129 = vmatmul.f32.gmra.mxu0 %v1024
      %v1130 = vpop.f32.mrf.mxu0
      %v1131 = vadd.f32 0.0, %v1130
      %1132 = vmatmul.f32.gmra.mxu0 %v1026
      %v1133 = vpop.f32.mrf.mxu0
      %v1134 = vadd.f32 0.0, %v1133
      %1135 = vmatmul.f32.gmra.mxu0 %v1028
      %v1136 = vpop.f32.mrf.mxu0
      %v1137 = vadd.f32 0.0, %v1136
      %1138 = vmatmul.f32.gmra.mxu0 %v1030
      %v1139 = vpop.f32.mrf.mxu0
      %v1140 = vadd.f32 0.0, %v1139
      %1141 = vmatmul.f32.gmra.mxu0 %v1032
      %v1142 = vpop.f32.mrf.mxu0
      %v1143 = vadd.f32 0.0, %v1142
      %1144 = vmatmul.f32.gmra.mxu0 %v1034
      %v1145 = vpop.f32.mrf.mxu0
      %v1146 = vadd.f32 0.0, %v1145
      %1147 = vmatmul.f32.gmra.mxu0 %v1036
      %v1148 = vpop.f32.mrf.mxu0
      %v1149 = vadd.f32 0.0, %v1148
      %1150 = vmatmul.f32.gmra.mxu0 %v1038
      %v1151 = vpop.f32.mrf.mxu0
      %v1152 = vadd.f32 0.0, %v1151
      %1153 = vmatmul.f32.gmra.mxu0 %v1040
      %v1154 = vpop.f32.mrf.mxu0
      %v1155 = vadd.f32 0.0, %v1154
      %1156 = vmatmul.f32.gmra.mxu0 %v1042
      %v1157 = vpop.f32.mrf.mxu0
      %v1158 = vadd.f32 0.0, %v1157
      %1159 = vmatmul.f32.gmra.mxu0 %v1044
      %v1160 = vpop.f32.mrf.mxu0
      %v1161 = vadd.f32 0.0, %v1160
      %1162 = vmatmul.f32.gmra.mxu0 %v1046
      %v1163 = vpop.f32.mrf.mxu0
      %v1164 = vadd.f32 0.0, %v1163
      %1165 = vmatmul.f32.gmra.mxu0 %v1048
      %v1166 = vpop.f32.mrf.mxu0
      %v1167 = vadd.f32 0.0, %v1166
      %1168 = vmatmul.f32.gmra.mxu0 %v1050
      %v1169 = vpop.f32.mrf.mxu0
      %v1170 = vadd.f32 0.0, %v1169
      %1171 = vmatmul.f32.gmra.mxu0 %v1052
      %v1172 = vpop.f32.mrf.mxu0
      %v1173 = vadd.f32 0.0, %v1172
      %1174 = vmatmul.f32.gmra.mxu0 %v1054
      %v1175 = vpop.f32.mrf.mxu0
      %v1176 = vadd.f32 0.0, %v1175
      %1177 = vmatmul.f32.gmra.mxu0 %v1056
      %v1178 = vpop.f32.mrf.mxu0
      %v1179 = vadd.f32 0.0, %v1178
      %1180 = vmatmul.f32.gmra.mxu0 %v1058
      %v1181 = vpop.f32.mrf.mxu0
      %v1182 = vadd.f32 0.0, %v1181
      %1183 = vmatmul.f32.gmra.mxu0 %v1060
      %v1184 = vpop.f32.mrf.mxu0
      %v1185 = vadd.f32 0.0, %v1184
      %1186 = vmatmul.f32.gmra.mxu0 %v1063
      %v1187 = vpop.f32.mrf.mxu0
      %v1188 = vadd.f32 0.0, %v1187
      %1189 = vdwg.mxu0
      %v1190 = vadd.f32 %v879, %v1083
      %v1191 = vadd.f32 %v880, %v1086
      %v1192 = vadd.f32 %v881, %v1089
      %v1193 = vadd.f32 %v882, %v1092
      %v1194 = vadd.f32 %v883, %v1095
      %v1195 = vadd.f32 %v884, %v1098
      %v1196 = vadd.f32 %v885, %v1101
      %v1197 = vadd.f32 %v886, %v1104
      %v1198 = vadd.f32 %v887, %v1107
      %v1199 = vadd.f32 %v888, %v1110
      %v1200 = vadd.f32 %v889, %v1113
      %v1201 = vadd.f32 %v890, %v1116
      %v1202 = vadd.f32 %v891, %v1119
      %v1203 = vadd.f32 %v892, %v1122
      %v1204 = vadd.f32 %v893, %v1125
      %v1205 = vadd.f32 %v894, %v1128
      %v1206 = vadd.f32 %v895, %v1131
      %v1207 = vadd.f32 %v896, %v1134
      %v1208 = vadd.f32 %v897, %v1137
      %v1209 = vadd.f32 %v898, %v1140
      %v1210 = vadd.f32 %v899, %v1143
      %v1211 = vadd.f32 %v900, %v1146
      %v1212 = vadd.f32 %v901, %v1149
      %v1213 = vadd.f32 %v902, %v1152
      %v1214 = vadd.f32 %v903, %v1155
      %v1215 = vadd.f32 %v904, %v1158
      %v1216 = vadd.f32 %v905, %v1161
      %v1217 = vadd.f32 %v906, %v1164
      %v1218 = vadd.f32 %v907, %v1167
      %v1219 = vadd.f32 %v908, %v1170
      %v1220 = vadd.f32 %v909, %v1173
      %v1221 = vadd.f32 %v910, %v1176
      %v1222 = vadd.f32 %v911, %v1179
      %v1223 = vadd.f32 %v912, %v1182
      %v1224 = vadd.f32 %v913, %v1185
      %v1225 = vadd.f32 %v914, %v1188
      %vm1226 = vcmask 130048
      %1227 = vst.msk [vmem:[#allocation2] sm:$0xff] %vm1226, %v1190
      %1228 = vst.msk [vmem:[#allocation2 + $0x8] sm:$0xff] %vm1226, %v1191
      %1229 = vst.msk [vmem:[#allocation2 + $0x10] sm:$0xff] %vm1226, %v1192
      %1230 = vst.msk [vmem:[#allocation2 + $0x18] sm:$0xff] %vm1226, %v1193
      %1231 = vst.msk [vmem:[#allocation2 + $0x20] sm:$0xff] %vm1226, %v1194
      %1232 = vst.msk [vmem:[#allocation2 + $0x28] sm:$0xff] %vm1226, %v1195
      %1233 = vst.msk [vmem:[#allocation2 + $0x30] sm:$0xff] %vm1226, %v1196
      %1234 = vst.msk [vmem:[#allocation2 + $0x38] sm:$0xff] %vm1226, %v1197
      %1235 = vst.msk [vmem:[#allocation2 + $0x40] sm:$0xff] %vm1226, %v1198
      %1236 = vst.msk [vmem:[#allocation2 + $0x48] sm:$0xff] %vm1226, %v1199
      %1237 = vst.msk [vmem:[#allocation2 + $0x50] sm:$0xff] %vm1226, %v1200
      %1238 = vst.msk [vmem:[#allocation2 + $0x58] sm:$0xff] %vm1226, %v1201
      %1239 = vst.msk [vmem:[#allocation2 + $0x60] sm:$0xff] %vm1226, %v1202
      %1240 = vst.msk [vmem:[#allocation2 + $0x68] sm:$0xff] %vm1226, %v1203
      %1241 = vst.msk [vmem:[#allocation2 + $0x70] sm:$0xff] %vm1226, %v1204
      %1242 = vst.msk [vmem:[#allocation2 + $0x78] sm:$0xff] %vm1226, %v1205
      %1243 = vst.msk [vmem:[#allocation2 + $0x80] sm:$0xff] %vm1226, %v1206
      %1244 = vst.msk [vmem:[#allocation2 + $0x88] sm:$0xff] %vm1226, %v1207
      %1245 = vst.msk [vmem:[#allocation2 + $0x90] sm:$0xff] %vm1226, %v1208
      %1246 = vst.msk [vmem:[#allocation2 + $0x98] sm:$0xff] %vm1226, %v1209
      %1247 = vst.msk [vmem:[#allocation2 + $0xa0] sm:$0xff] %vm1226, %v1210
      %1248 = vst.msk [vmem:[#allocation2 + $0xa8] sm:$0xff] %vm1226, %v1211
      %1249 = vst.msk [vmem:[#allocation2 + $0xb0] sm:$0xff] %vm1226, %v1212
      %1250 = vst.msk [vmem:[#allocation2 + $0xb8] sm:$0xff] %vm1226, %v1213
      %1251 = vst.msk [vmem:[#allocation2 + $0xc0] sm:$0xff] %vm1226, %v1214
      %1252 = vst.msk [vmem:[#allocation2 + $0xc8] sm:$0xff] %vm1226, %v1215
      %1253 = vst.msk [vmem:[#allocation2 + $0xd0] sm:$0xff] %vm1226, %v1216
      %1254 = vst.msk [vmem:[#allocation2 + $0xd8] sm:$0xff] %vm1226, %v1217
      %1255 = vst.msk [vmem:[#allocation2 + $0xe0] sm:$0xff] %vm1226, %v1218
      %1256 = vst.msk [vmem:[#allocation2 + $0xe8] sm:$0xff] %vm1226, %v1219
      %1257 = vst.msk [vmem:[#allocation2 + $0xf0] sm:$0xff] %vm1226, %v1220
      %1258 = vst.msk [vmem:[#allocation2 + $0xf8] sm:$0xff] %vm1226, %v1221
      %1259 = vst.msk [vmem:[#allocation2 + $0x100] sm:$0xff] %vm1226, %v1222
      %1260 = vst.msk [vmem:[#allocation2 + $0x108] sm:$0xff] %vm1226, %v1223
      %1261 = vst.msk [vmem:[#allocation2 + $0x110] sm:$0xff] %vm1226, %v1224
      %1262 = vst.msk [vmem:[#allocation2 + $0x118] sm:$0xff] %vm1226, %v1225
      %p1263 = scmp.eq.s32.totalorder %s19, 2
      // Predicated region
      $region37: #{tpu_custom_call.1} parent=31 // pred_check
        %p1264 = pneg %p1263
      $region38: #{tpu_custom_call.1} parent=31 // pred_check_branch
        %1266 = sbr.rel (%p1264) target = $region40
      $region39: #{tpu_custom_call.1} parent=31 // pred_region
        %v1267 = vld [vmem:[#allocation2] sm:$0xff]
        %v1268 = vld [vmem:[#allocation2 + $0x8] sm:$0xff]
        %v1269 = vld [vmem:[#allocation2 + $0x10] sm:$0xff]
        %v1270 = vld [vmem:[#allocation2 + $0x18] sm:$0xff]
        %v1271 = vld [vmem:[#allocation2 + $0x20] sm:$0xff]
        %v1272 = vld [vmem:[#allocation2 + $0x28] sm:$0xff]
        %v1273 = vld [vmem:[#allocation2 + $0x30] sm:$0xff]
        %v1274 = vld [vmem:[#allocation2 + $0x38] sm:$0xff]
        %v1275 = vld [vmem:[#allocation2 + $0x40] sm:$0xff]
        %v1276 = vld [vmem:[#allocation2 + $0x48] sm:$0xff]
        %v1277 = vld [vmem:[#allocation2 + $0x50] sm:$0xff]
        %v1278 = vld [vmem:[#allocation2 + $0x58] sm:$0xff]
        %v1279 = vld [vmem:[#allocation2 + $0x60] sm:$0xff]
        %v1280 = vld [vmem:[#allocation2 + $0x68] sm:$0xff]
        %v1281 = vld [vmem:[#allocation2 + $0x70] sm:$0xff]
        %v1282 = vld [vmem:[#allocation2 + $0x78] sm:$0xff]
        %v1283 = vld [vmem:[#allocation2 + $0x80] sm:$0xff]
        %v1284 = vld [vmem:[#allocation2 + $0x88] sm:$0xff]
        %v1285 = vld [vmem:[#allocation2 + $0x90] sm:$0xff]
        %v1286 = vld [vmem:[#allocation2 + $0x98] sm:$0xff]
        %v1287 = vld [vmem:[#allocation2 + $0xa0] sm:$0xff]
        %v1288 = vld [vmem:[#allocation2 + $0xa8] sm:$0xff]
        %v1289 = vld [vmem:[#allocation2 + $0xb0] sm:$0xff]
        %v1290 = vld [vmem:[#allocation2 + $0xb8] sm:$0xff]
        %v1291 = vld [vmem:[#allocation2 + $0xc0] sm:$0xff]
        %v1292 = vld [vmem:[#allocation2 + $0xc8] sm:$0xff]
        %v1293 = vld [vmem:[#allocation2 + $0xd0] sm:$0xff]
        %v1294 = vld [vmem:[#allocation2 + $0xd8] sm:$0xff]
        %v1295 = vld [vmem:[#allocation2 + $0xe0] sm:$0xff]
        %v1296 = vld [vmem:[#allocation2 + $0xe8] sm:$0xff]
        %v1297 = vld [vmem:[#allocation2 + $0xf0] sm:$0xff]
        %v1298 = vld [vmem:[#allocation2 + $0xf8] sm:$0xff]
        %v1299 = vld [vmem:[#allocation2 + $0x100] sm:$0xff]
        %v1300 = vld [vmem:[#allocation2 + $0x108] sm:$0xff]
        %v1301 = vld [vmem:[#allocation2 + $0x110] sm:$0xff]
        %v1302 = vld [vmem:[#allocation2 + $0x118] sm:$0xff]
        %v1303 = vld [vmem:[%s2] sm:$0x1]
        %v1305 = vperm.slane %v1303, 0
        %v1307 = vadd.f32 %v1267, %v1305
        %v1308 = vadd.f32 %v1268, %v1305
        %v1309 = vadd.f32 %v1269, %v1305
        %v1310 = vadd.f32 %v1270, %v1305
        %v1311 = vadd.f32 %v1271, %v1305
        %v1312 = vadd.f32 %v1272, %v1305
        %v1313 = vadd.f32 %v1273, %v1305
        %v1314 = vadd.f32 %v1274, %v1305
        %v1315 = vadd.f32 %v1275, %v1305
        %v1316 = vadd.f32 %v1276, %v1305
        %v1317 = vadd.f32 %v1277, %v1305
        %v1318 = vadd.f32 %v1278, %v1305
        %v1319 = vadd.f32 %v1279, %v1305
        %v1320 = vadd.f32 %v1280, %v1305
        %v1321 = vadd.f32 %v1281, %v1305
        %v1322 = vadd.f32 %v1282, %v1305
        %v1323 = vadd.f32 %v1283, %v1305
        %v1324 = vadd.f32 %v1284, %v1305
        %v1325 = vadd.f32 %v1285, %v1305
        %v1326 = vadd.f32 %v1286, %v1305
        %v1327 = vadd.f32 %v1287, %v1305
        %v1328 = vadd.f32 %v1288, %v1305
        %v1329 = vadd.f32 %v1289, %v1305
        %v1330 = vadd.f32 %v1290, %v1305
        %v1331 = vadd.f32 %v1291, %v1305
        %v1332 = vadd.f32 %v1292, %v1305
        %v1333 = vadd.f32 %v1293, %v1305
        %v1334 = vadd.f32 %v1294, %v1305
        %v1335 = vadd.f32 %v1295, %v1305
        %v1336 = vadd.f32 %v1296, %v1305
        %v1337 = vadd.f32 %v1297, %v1305
        %v1338 = vadd.f32 %v1298, %v1305
        %v1339 = vadd.f32 %v1299, %v1305
        %v1340 = vadd.f32 %v1300, %v1305
        %v1341 = vadd.f32 %v1301, %v1305
        %v1342 = vadd.f32 %v1302, %v1305
        %vm1343 = vcmp.ge.f32.partialorder %v1307, 0.0
        %vm1344 = vcmp.ge.f32.partialorder %v1308, 0.0
        %vm1345 = vcmp.ge.f32.partialorder %v1309, 0.0
        %vm1346 = vcmp.ge.f32.partialorder %v1310, 0.0
        %vm1347 = vcmp.ge.f32.partialorder %v1311, 0.0
        %vm1348 = vcmp.ge.f32.partialorder %v1312, 0.0
        %vm1349 = vcmp.ge.f32.partialorder %v1313, 0.0
        %vm1350 = vcmp.ge.f32.partialorder %v1314, 0.0
        %vm1351 = vcmp.ge.f32.partialorder %v1315, 0.0
        %vm1352 = vcmp.ge.f32.partialorder %v1316, 0.0
        %vm1353 = vcmp.ge.f32.partialorder %v1317, 0.0
        %vm1354 = vcmp.ge.f32.partialorder %v1318, 0.0
        %vm1355 = vcmp.ge.f32.partialorder %v1319, 0.0
        %vm1356 = vcmp.ge.f32.partialorder %v1320, 0.0
        %vm1357 = vcmp.ge.f32.partialorder %v1321, 0.0
        %vm1358 = vcmp.ge.f32.partialorder %v1322, 0.0
        %vm1359 = vcmp.ge.f32.partialorder %v1323, 0.0
        %vm1360 = vcmp.ge.f32.partialorder %v1324, 0.0
        %vm1361 = vcmp.ge.f32.partialorder %v1325, 0.0
        %vm1362 = vcmp.ge.f32.partialorder %v1326, 0.0
        %vm1363 = vcmp.ge.f32.partialorder %v1327, 0.0
        %vm1364 = vcmp.ge.f32.partialorder %v1328, 0.0
        %vm1365 = vcmp.ge.f32.partialorder %v1329, 0.0
        %vm1366 = vcmp.ge.f32.partialorder %v1330, 0.0
        %vm1367 = vcmp.ge.f32.partialorder %v1331, 0.0
        %vm1368 = vcmp.ge.f32.partialorder %v1332, 0.0
        %vm1369 = vcmp.ge.f32.partialorder %v1333, 0.0
        %vm1370 = vcmp.ge.f32.partialorder %v1334, 0.0
        %vm1371 = vcmp.ge.f32.partialorder %v1335, 0.0
        %vm1372 = vcmp.ge.f32.partialorder %v1336, 0.0
        %vm1373 = vcmp.ge.f32.partialorder %v1337, 0.0
        %vm1374 = vcmp.ge.f32.partialorder %v1338, 0.0
        %vm1375 = vcmp.ge.f32.partialorder %v1339, 0.0
        %vm1376 = vcmp.ge.f32.partialorder %v1340, 0.0
        %vm1377 = vcmp.ge.f32.partialorder %v1341, 0.0
        %vm1378 = vcmp.ge.f32.partialorder %v1342, 0.0
        %v1379 = vmul.f32 %v1307, 0.1
        %v1380 = vmul.f32 %v1308, 0.1
        %v1381 = vmul.f32 %v1309, 0.1
        %v1382 = vmul.f32 %v1310, 0.1
        %v1383 = vmul.f32 %v1311, 0.1
        %v1384 = vmul.f32 %v1312, 0.1
        %v1385 = vmul.f32 %v1313, 0.1
        %v1386 = vmul.f32 %v1314, 0.1
        %v1387 = vmul.f32 %v1315, 0.1
        %v1388 = vmul.f32 %v1316, 0.1
        %v1389 = vmul.f32 %v1317, 0.1
        %v1390 = vmul.f32 %v1318, 0.1
        %v1391 = vmul.f32 %v1319, 0.1
        %v1392 = vmul.f32 %v1320, 0.1
        %v1393 = vmul.f32 %v1321, 0.1
        %v1394 = vmul.f32 %v1322, 0.1
        %v1395 = vmul.f32 %v1323, 0.1
        %v1396 = vmul.f32 %v1324, 0.1
        %v1397 = vmul.f32 %v1325, 0.1
        %v1398 = vmul.f32 %v1326, 0.1
        %v1399 = vmul.f32 %v1327, 0.1
        %v1400 = vmul.f32 %v1328, 0.1
        %v1401 = vmul.f32 %v1329, 0.1
        %v1402 = vmul.f32 %v1330, 0.1
        %v1403 = vmul.f32 %v1331, 0.1
        %v1404 = vmul.f32 %v1332, 0.1
        %v1405 = vmul.f32 %v1333, 0.1
        %v1406 = vmul.f32 %v1334, 0.1
        %v1407 = vmul.f32 %v1335, 0.1
        %v1408 = vmul.f32 %v1336, 0.1
        %v1409 = vmul.f32 %v1337, 0.1
        %v1410 = vmul.f32 %v1338, 0.1
        %v1411 = vmul.f32 %v1339, 0.1
        %v1412 = vmul.f32 %v1340, 0.1
        %v1413 = vmul.f32 %v1341, 0.1
        %v1414 = vmul.f32 %v1342, 0.1
        %v1415 = vsel %vm1343, %v1307, %v1379
        %v1416 = vsel %vm1344, %v1308, %v1380
        %v1417 = vsel %vm1345, %v1309, %v1381
        %v1418 = vsel %vm1346, %v1310, %v1382
        %v1419 = vsel %vm1347, %v1311, %v1383
        %v1420 = vsel %vm1348, %v1312, %v1384
        %v1421 = vsel %vm1349, %v1313, %v1385
        %v1422 = vsel %vm1350, %v1314, %v1386
        %v1423 = vsel %vm1351, %v1315, %v1387
        %v1424 = vsel %vm1352, %v1316, %v1388
        %v1425 = vsel %vm1353, %v1317, %v1389
        %v1426 = vsel %vm1354, %v1318, %v1390
        %v1427 = vsel %vm1355, %v1319, %v1391
        %v1428 = vsel %vm1356, %v1320, %v1392
        %v1429 = vsel %vm1357, %v1321, %v1393
        %v1430 = vsel %vm1358, %v1322, %v1394
        %v1431 = vsel %vm1359, %v1323, %v1395
        %v1432 = vsel %vm1360, %v1324, %v1396
        %v1433 = vsel %vm1361, %v1325, %v1397
        %v1434 = vsel %vm1362, %v1326, %v1398
        %v1435 = vsel %vm1363, %v1327, %v1399
        %v1436 = vsel %vm1364, %v1328, %v1400
        %v1437 = vsel %vm1365, %v1329, %v1401
        %v1438 = vsel %vm1366, %v1330, %v1402
        %v1439 = vsel %vm1367, %v1331, %v1403
        %v1440 = vsel %vm1368, %v1332, %v1404
        %v1441 = vsel %vm1369, %v1333, %v1405
        %v1442 = vsel %vm1370, %v1334, %v1406
        %v1443 = vsel %vm1371, %v1335, %v1407
        %v1444 = vsel %vm1372, %v1336, %v1408
        %v1445 = vsel %vm1373, %v1337, %v1409
        %v1446 = vsel %vm1374, %v1338, %v1410
        %v1447 = vsel %vm1375, %v1339, %v1411
        %v1448 = vsel %vm1376, %v1340, %v1412
        %v1449 = vsel %vm1377, %v1341, %v1413
        %v1450 = vsel %vm1378, %v1342, %v1414
        %1451 = vst.msk [vmem:[%s218] sm:$0xff] %vm1226, %v1415
        %1452 = vst.msk [vmem:[%s218 + $0x8] sm:$0xff] %vm1226, %v1416
        %1453 = vst.msk [vmem:[%s218 + $0x10] sm:$0xff] %vm1226, %v1417
        %1454 = vst.msk [vmem:[%s218 + $0x18] sm:$0xff] %vm1226, %v1418
        %1455 = vst.msk [vmem:[%s218 + $0x20] sm:$0xff] %vm1226, %v1419
        %1456 = vst.msk [vmem:[%s218 + $0x28] sm:$0xff] %vm1226, %v1420
        %1457 = vst.msk [vmem:[%s218 + $0x30] sm:$0xff] %vm1226, %v1421
        %1458 = vst.msk [vmem:[%s218 + $0x38] sm:$0xff] %vm1226, %v1422
        %1459 = vst.msk [vmem:[%s218 + $0x40] sm:$0xff] %vm1226, %v1423
        %1460 = vst.msk [vmem:[%s218 + $0x48] sm:$0xff] %vm1226, %v1424
        %1461 = vst.msk [vmem:[%s218 + $0x50] sm:$0xff] %vm1226, %v1425
        %1462 = vst.msk [vmem:[%s218 + $0x58] sm:$0xff] %vm1226, %v1426
        %1463 = vst.msk [vmem:[%s218 + $0x60] sm:$0xff] %vm1226, %v1427
        %1464 = vst.msk [vmem:[%s218 + $0x68] sm:$0xff] %vm1226, %v1428
        %1465 = vst.msk [vmem:[%s218 + $0x70] sm:$0xff] %vm1226, %v1429
        %1466 = vst.msk [vmem:[%s218 + $0x78] sm:$0xff] %vm1226, %v1430
        %1467 = vst.msk [vmem:[%s218 + $0x80] sm:$0xff] %vm1226, %v1431
        %1468 = vst.msk [vmem:[%s218 + $0x88] sm:$0xff] %vm1226, %v1432
        %1469 = vst.msk [vmem:[%s218 + $0x90] sm:$0xff] %vm1226, %v1433
        %1470 = vst.msk [vmem:[%s218 + $0x98] sm:$0xff] %vm1226, %v1434
        %1471 = vst.msk [vmem:[%s218 + $0xa0] sm:$0xff] %vm1226, %v1435
        %1472 = vst.msk [vmem:[%s218 + $0xa8] sm:$0xff] %vm1226, %v1436
        %1473 = vst.msk [vmem:[%s218 + $0xb0] sm:$0xff] %vm1226, %v1437
        %1474 = vst.msk [vmem:[%s218 + $0xb8] sm:$0xff] %vm1226, %v1438
        %1475 = vst.msk [vmem:[%s218 + $0xc0] sm:$0xff] %vm1226, %v1439
        %1476 = vst.msk [vmem:[%s218 + $0xc8] sm:$0xff] %vm1226, %v1440
        %1477 = vst.msk [vmem:[%s218 + $0xd0] sm:$0xff] %vm1226, %v1441
        %1478 = vst.msk [vmem:[%s218 + $0xd8] sm:$0xff] %vm1226, %v1442
        %1479 = vst.msk [vmem:[%s218 + $0xe0] sm:$0xff] %vm1226, %v1443
        %1480 = vst.msk [vmem:[%s218 + $0xe8] sm:$0xff] %vm1226, %v1444
        %1481 = vst.msk [vmem:[%s218 + $0xf0] sm:$0xff] %vm1226, %v1445
        %1482 = vst.msk [vmem:[%s218 + $0xf8] sm:$0xff] %vm1226, %v1446
        %1483 = vst.msk [vmem:[%s218 + $0x100] sm:$0xff] %vm1226, %v1447
        %1484 = vst.msk [vmem:[%s218 + $0x108] sm:$0xff] %vm1226, %v1448
        %1485 = vst.msk [vmem:[%s218 + $0x110] sm:$0xff] %vm1226, %v1449
        %1486 = vst.msk [vmem:[%s218 + $0x118] sm:$0xff] %vm1226, %v1450
      $region40: #{tpu_custom_call.1} parent=31 // pred_fallthru
        _
      %s1487 = smul.u32 36, %s18
      %p1488 = scmp.lt.s32.totalorder %s1487, 71
      %s1489 = scalar_select %p1488, %s1487, 71
      %s1490 = smul.addr %s1489, 8
      %s1491 = scalar_lea.vmem %s3, %s1490
      // Predicated region
      $region41: #{tpu_custom_call.1} parent=31 // pred_check
        %p1492 = pneg %p119
      $region42: #{tpu_custom_call.1} parent=31 // pred_check_branch
        %1494 = sbr.rel (%p1492) target = $region44
      $region43: #{tpu_custom_call.1} parent=31 // pred_region
        %s1495 = smul.u32 36, %s18
      $region44: #{tpu_custom_call.1} parent=31 // pred_fallthru
        _
    $region32: #{tpu_custom_call.1} parent=5 // pred_fallthru
      _
    %p1496 = scmp.le.s32.totalorder 2, %s9
    // Predicated region
    $region45: #{tpu_custom_call.1} parent=5 // pred_check
      %p1497 = pneg %p1496
    $region46: #{tpu_custom_call.1} parent=5 // pred_check_branch
      %1499 = sbr.rel (%p1497) target = $region48
    $region47: #{tpu_custom_call.1} parent=5 // pred_region
      %s1500 = ssub.s32 %s9, 2
      // Predicated region
      $region49: #{tpu_custom_call.1} parent=47 // pred_check
        %p1501 = pneg %p125
      $region50: #{tpu_custom_call.1} parent=47 // pred_check_branch
        %1503 = sbr.rel (%p1501) target = $region52
      $region51: #{tpu_custom_call.1} parent=47 // pred_region
        %s1504 = smul.u32 36, %s20
        %p1505 = scmp.lt.s32.totalorder %s1504, 71
        %s1506 = scalar_select %p1505, %s1504, 71
        %s1507 = smul.addr %s1506, 8
        %s1508 = scalar_lea.vmem %s3, %s1507
      $region52: #{tpu_custom_call.1} parent=47 // pred_fallthru
        _
    $region48: #{tpu_custom_call.1} parent=5 // pred_fallthru
      _
  $region6: #{tpu_custom_call.1} parent=0 // loop_footer
    %s13 = sadd.s32 1, %s9
  $region7: #{tpu_custom_call.1} parent=0 // loop_footer_branch
    %8 = sbr.rel target = $region3
  $region8: #{tpu_custom_call.1} parent=0 // loop_exit
    _

// kernel: _conv_bn_leaky.1
$region0: #{_conv_bn_leaky.1}
  #allocation0 [shape = 'u32[]', space=smem, size = 0x4, offset = 0x4, fixed_abs, tag = 'smem constant byte address 0x4 - core index']
  #allocation1 [shape = 'u32[72,128]{1,0:T(1,128)}', space=vmem, size = 0x9000, scoped, tag = 'internal scratch']
  #allocation2 [shape = 'f32[512,32]{1,0:T(8,128)}', space=vmem, size = 0x40000, scoped, tag = 'scratch operand']
  %s0 = inlined_call_operand.vmem [shape: f32[9,2048,3], index: 0, kind: input, shape index: {}]
  %s1 = inlined_call_operand.vmem [shape: f32[9,3,32], index: 1, kind: input, shape index: {}]
  %s2 = inlined_call_operand.vmem [shape: f32[1,32], index: 2, kind: input, shape index: {}]
  %s3 = inlined_call_operand.hbm [shape: f32[2048,32], index: 3, kind: output, shape index: {}]
  %s4 = sld [smem:[#allocation0]]
  $region53: #{_conv_bn_leaky.1} parent=0
    _
  %s6 = ssub.s32 1, %s4
  %s7 = scalar_select 0, %s6, %s4
  $region1: #{_conv_bn_leaky.1} parent=0
    #allocation3 [shape = 'u8[524288]{0}', space=vmem, size = 0x80000, scoped, tag = 'output window, operand 0']
    #allocation4 [shape = 's32[2]{0}', space=sflag, size = 0x8, scoped, tag = 'scoped memory for _conv_bn_leaky.1']
    %8 = vsyncpa [#allocation4], 0
    %s9 = scalar_lea.sflag [#allocation4], 1
    %10 = vsyncpa %s9, 0
    loop: start=0, step=1, limit=38
    $region2: #{_conv_bn_leaky.1} parent=1 // loop_pre_header
      _
    $region3: #{_conv_bn_leaky.1} parent=1 // loop_header
      %s12 = sphi 0, %s16
      %p13 = scmp.ge.s32.totalorder %s12, 38
      %s19 = sphi 0, %s31
      %s20 = sphi 0, %s27
      %s21 = sphi 0, %s19
      %s22 = sphi 0, %s20
      %s23 = sphi 0, %s21
      %s24 = sphi 0, %s22
      %s36 = sphi 0, %s38
      %s39 = sphi 0, %s36
      %s40 = sphi 0, %s39
      %s56 = sphi 0, %s40
      %s62 = sphi 0, %s64
      %s65 = sphi 0, %s62
      %s66 = sphi 0, %s65
      %s82 = sphi 0, %s66
      %s86 = sphi 0, %s86
      %s88 = sphi 0, %s86
      %s89 = sphi 0, %s88
      %s103 = sphi 0, %s89
      %s109 = sphi 0, %s111
      %s112 = sphi 0, %s109
      %s113 = sphi 0, %s112
      %s129 = sphi 0, %s113
    $region4: #{_conv_bn_leaky.1} parent=1 // loop_header_branch
      %15 = sbr.rel (%p13) target = $region8
    $region5: #{_conv_bn_leaky.1} parent=1 // loop_body
      %s17 = ssub.s32 %s12, 1
      %s18 = ssub.s32 %s12, 2
      %s25 = sadd.s32 1, %s20
      %p26 = scmp.ge.s32.totalorder %s25, 9
      %s27 = scalar_select %p26, 0, %s25
      %s28 = sadd.s32 1, %s19
      %s29 = scalar_select %p26, %s28, %s19
      %p30 = scmp.ge.s32.totalorder %s29, 4
      %s31 = scalar_select %p30, 0, %s29
      %s32 = ssub.s32 %s20, %s27
      %s33 = ssub.s32 %s19, %s31
      %s34 = sor.u32 %s32, %s33
      %p35 = scmp.eq.s32.totalorder %s34, 0
      %s37 = sadd.s32 %s36, 1
      %s38 = scalar_select %p35, %s36, %s37
      %p41 = pneg %p35
      %p42 = scmp.eq.s32.totalorder %s12, 35
      %p43 = por %p41, %p42
      %p44 = scmp.ne.s32.totalorder %s36, %s39
      %p45 = scmp.eq.s32.totalorder %s12, 0
      %p46 = por %p44, %p45
      %p47 = scmp.ne.s32.totalorder %s36, %s39
      %p48 = scmp.eq.s32.totalorder %s17, 35
      %p49 = por %p47, %p48
      %p50 = scmp.ne.s32.totalorder %s39, %s40
      %p51 = scmp.eq.s32.totalorder %s17, 0
      %p52 = por %p50, %p51
      %p53 = scmp.ne.s32.totalorder %s39, %s40
      %p54 = scmp.eq.s32.totalorder %s18, 35
      %p55 = por %p53, %p54
      %p57 = scmp.ne.s32.totalorder %s40, %s56
      %p58 = scmp.eq.s32.totalorder %s18, 0
      %p59 = por %p57, %p58
      %s60 = ssub.s32 %s20, %s27
      %p61 = scmp.eq.s32.totalorder %s60, 0
      %s63 = sadd.s32 %s62, 1
      %s64 = scalar_select %p61, %s62, %s63
      %p67 = pneg %p61
      %p68 = scmp.eq.s32.totalorder %s12, 35
      %p69 = por %p67, %p68
      %p70 = scmp.ne.s32.totalorder %s62, %s65
      %p71 = scmp.eq.s32.totalorder %s12, 0
      %p72 = por %p70, %p71
      %p73 = scmp.ne.s32.totalorder %s62, %s65
      %p74 = scmp.eq.s32.totalorder %s17, 35
      %p75 = por %p73, %p74
      %p76 = scmp.ne.s32.totalorder %s65, %s66
      %p77 = scmp.eq.s32.totalorder %s17, 0
      %p78 = por %p76, %p77
      %p79 = scmp.ne.s32.totalorder %s65, %s66
      %p80 = scmp.eq.s32.totalorder %s18, 35
      %p81 = por %p79, %p80
      %p83 = scmp.ne.s32.totalorder %s66, %s82
      %p84 = scmp.eq.s32.totalorder %s18, 0
      %p85 = por %p83, %p84
      %s87 = sadd.s32 %s86, 1
      %p90 = scmp.eq.s32.totalorder %s12, 35
      %p91 = scmp.ne.s32.totalorder %s86, %s88
      %p92 = scmp.eq.s32.totalorder %s12, 0
      %p93 = por %p91, %p92
      %p94 = scmp.ne.s32.totalorder %s86, %s88
      %p95 = scmp.eq.s32.totalorder %s17, 35
      %p96 = por %p94, %p95
      %p97 = scmp.ne.s32.totalorder %s88, %s89
      %p98 = scmp.eq.s32.totalorder %s17, 0
      %p99 = por %p97, %p98
      %p100 = scmp.ne.s32.totalorder %s88, %s89
      %p101 = scmp.eq.s32.totalorder %s18, 35
      %p102 = por %p100, %p101
      %p104 = scmp.ne.s32.totalorder %s89, %s103
      %p105 = scmp.eq.s32.totalorder %s18, 0
      %p106 = por %p104, %p105
      %s107 = ssub.s32 %s19, %s31
      %p108 = scmp.eq.s32.totalorder %s107, 0
      %s110 = sadd.s32 %s109, 1
      %s111 = scalar_select %p108, %s109, %s110
      %p114 = pneg %p108
      %p115 = scmp.eq.s32.totalorder %s12, 35
      %p116 = por %p114, %p115
      %p117 = scmp.ne.s32.totalorder %s109, %s112
      %p118 = scmp.eq.s32.totalorder %s12, 0
      %p119 = por %p117, %p118
      %p120 = scmp.ne.s32.totalorder %s109, %s112
      %p121 = scmp.eq.s32.totalorder %s17, 35
      %p122 = por %p120, %p121
      %p123 = scmp.ne.s32.totalorder %s112, %s113
      %p124 = scmp.eq.s32.totalorder %s17, 0
      %p125 = por %p123, %p124
      %p126 = scmp.ne.s32.totalorder %s112, %s113
      %p127 = scmp.eq.s32.totalorder %s18, 35
      %p128 = por %p126, %p127
      %p130 = scmp.ne.s32.totalorder %s113, %s129
      %p131 = scmp.eq.s32.totalorder %s18, 0
      %p132 = por %p130, %p131
      %p133 = scmp.le.s32.totalorder 1, %s12
      %p134 = scmp.lt.s32.totalorder %s12, 37
      %p135 = pnand %p133, %p134
      %p136 = pneg %p135
      // Predicated region
      $region9: #{_conv_bn_leaky.1} parent=5 // pred_check
        _
      $region10: #{_conv_bn_leaky.1} parent=5 // pred_check_branch
        %138 = sbr.rel (%p135) target = $region12
      $region11: #{_conv_bn_leaky.1} parent=5 // pred_region
        %s139 = ssub.s32 %s12, 1
        // Predicated region
        $region13: #{_conv_bn_leaky.1} parent=11 // pred_check
          %p140 = pneg %p99
        $region14: #{_conv_bn_leaky.1} parent=11 // pred_check_branch
          %142 = sbr.rel (%p140) target = $region16
        $region15: #{_conv_bn_leaky.1} parent=11 // pred_region
          _
        $region16: #{_conv_bn_leaky.1} parent=11 // pred_fallthru
          _
      $region12: #{_conv_bn_leaky.1} parent=5 // pred_fallthru
        _
      %p143 = scmp.lt.s32.totalorder %s12, 36
      // Predicated region
      $region17: #{_conv_bn_leaky.1} parent=5 // pred_check
        %p144 = pneg %p143
      $region18: #{_conv_bn_leaky.1} parent=5 // pred_check_branch
        %146 = sbr.rel (%p144) target = $region20
      $region19: #{_conv_bn_leaky.1} parent=5 // pred_region
        // Predicated region
        $region21: #{_conv_bn_leaky.1} parent=19 // pred_check
          %p147 = pneg %p46
        $region22: #{_conv_bn_leaky.1} parent=19 // pred_check_branch
          %149 = sbr.rel (%p147) target = $region24
        $region23: #{_conv_bn_leaky.1} parent=19 // pred_region
          %s150 = smul.u32 64, %s19
          %p151 = scmp.lt.s32.totalorder %s20, 8
          %s152 = scalar_select %p151, %s20, 8
          %p153 = scmp.lt.s32.totalorder %s150, 255
          %s154 = scalar_select %p153, %s150, 255
          %s155 = smul.addr %s152, 256
          %s156 = sadd.s32 %s154, %s155
          %s157 = smul.addr %s156, 8
          %s158 = scalar_lea.vmem %s0, %s157
          %s159 = smul.u32 64, %s19
        $region24: #{_conv_bn_leaky.1} parent=19 // pred_fallthru
          _
        // Predicated region
        $region25: #{_conv_bn_leaky.1} parent=19 // pred_check
          %p160 = pneg %p72
        $region26: #{_conv_bn_leaky.1} parent=19 // pred_check_branch
          %162 = sbr.rel (%p160) target = $region28
        $region27: #{_conv_bn_leaky.1} parent=19 // pred_region
          %p163 = scmp.lt.s32.totalorder %s20, 8
          %s164 = scalar_select %p163, %s20, 8
          %s165 = smul.addr %s164, 4
          %s166 = scalar_lea.vmem %s1, %s165
        $region28: #{_conv_bn_leaky.1} parent=19 // pred_fallthru
          _
      $region20: #{_conv_bn_leaky.1} parent=5 // pred_fallthru
        _
      %p167 = scmp.le.s32.totalorder 1, %s12
      %p168 = scmp.lt.s32.totalorder %s12, 37
      %p169 = pnand %p167, %p168
      %p170 = pneg %p169
      // Predicated region
      $region29: #{_conv_bn_leaky.1} parent=5 // pred_check
        _
      $region30: #{_conv_bn_leaky.1} parent=5 // pred_check_branch
        %172 = sbr.rel (%p169) target = $region32
      $region31: #{_conv_bn_leaky.1} parent=5 // pred_region
        %s173 = ssub.s32 %s12, 1
        %s174 = smul.u32 64, %s21
        %p175 = scmp.lt.s32.totalorder %s22, 8
        %s176 = scalar_select %p175, %s22, 8
        %p177 = scmp.lt.s32.totalorder %s174, 255
        %s178 = scalar_select %p177, %s174, 255
        %s179 = smul.addr %s176, 256
        %s180 = sadd.s32 %s178, %s179
        %s181 = smul.addr %s180, 8
        %s182 = scalar_lea.vmem %s0, %s181
        %p183 = pneg %p52
        %p184 = pneg %p49
        %p185 = scmp.lt.s32.totalorder %s22, 8
        %s186 = scalar_select %p185, %s22, 8
        %s187 = smul.addr %s186, 4
        %s188 = scalar_lea.vmem %s1, %s187
        %p189 = pneg %p78
        %p190 = pneg %p75
        %p191 = pneg %p99
        %p192 = pneg %p96
        %p193 = pneg %p125
        %p194 = pneg %p122
        %s195 = sand.u32 %s112, 1
        %s196 = scalar_lea.sflag [#allocation4], %s195
        %s197 = sand.u32 %s112, 1
        %s198 = smul.addr %s197, 512
        %s199 = scalar_lea.vmem [#allocation3], %s198
        %s200 = smul.u32 64, %s21
        %p201 = scmp.lt.s32.totalorder %s22, 8
        %s202 = scalar_select %p201, %s22, 8
        %p203 = scmp.lt.s32.totalorder %s200, 255
        %s204 = scalar_select %p203, %s200, 255
        %s205 = smul.addr %s202, 256
        %s206 = sadd.s32 %s204, %s205
        %s207 = smul.addr %s206, 8
        %s208 = scalar_lea.vmem %s0, %s207
        %s209 = smul.u32 64, %s21
        %p210 = scmp.lt.s32.totalorder %s22, 8
        %s211 = scalar_select %p210, %s22, 8
        %s212 = smul.addr %s211, 4
        %s213 = scalar_lea.vmem %s1, %s212
        %s214 = smul.u32 64, %s21
        %p215 = scmp.eq.s32.totalorder %s22, 0
        // Predicated region
        $region33: #{_conv_bn_leaky.1} parent=31 // pred_check
          %p216 = pneg %p215
        $region34: #{_conv_bn_leaky.1} parent=31 // pred_check_branch
          %218 = sbr.rel (%p216) target = $region36
        $region35: #{_conv_bn_leaky.1} parent=31 // pred_region
          %vm219 = vcmask 261120
          %220 = vst.msk [vmem:[#allocation2] sm:$0xff] %vm219, 0.0
          %221 = vst.msk [vmem:[#allocation2 + $0x8] sm:$0xff] %vm219, 0.0
          %222 = vst.msk [vmem:[#allocation2 + $0x10] sm:$0xff] %vm219, 0.0
          %223 = vst.msk [vmem:[#allocation2 + $0x18] sm:$0xff] %vm219, 0.0
          %224 = vst.msk [vmem:[#allocation2 + $0x20] sm:$0xff] %vm219, 0.0
          %225 = vst.msk [vmem:[#allocation2 + $0x28] sm:$0xff] %vm219, 0.0
          %226 = vst.msk [vmem:[#allocation2 + $0x30] sm:$0xff] %vm219, 0.0
          %227 = vst.msk [vmem:[#allocation2 + $0x38] sm:$0xff] %vm219, 0.0
          %228 = vst.msk [vmem:[#allocation2 + $0x40] sm:$0xff] %vm219, 0.0
          %229 = vst.msk [vmem:[#allocation2 + $0x48] sm:$0xff] %vm219, 0.0
          %230 = vst.msk [vmem:[#allocation2 + $0x50] sm:$0xff] %vm219, 0.0
          %231 = vst.msk [vmem:[#allocation2 + $0x58] sm:$0xff] %vm219, 0.0
          %232 = vst.msk [vmem:[#allocation2 + $0x60] sm:$0xff] %vm219, 0.0
          %233 = vst.msk [vmem:[#allocation2 + $0x68] sm:$0xff] %vm219, 0.0
          %234 = vst.msk [vmem:[#allocation2 + $0x70] sm:$0xff] %vm219, 0.0
          %235 = vst.msk [vmem:[#allocation2 + $0x78] sm:$0xff] %vm219, 0.0
          %236 = vst.msk [vmem:[#allocation2 + $0x80] sm:$0xff] %vm219, 0.0
          %237 = vst.msk [vmem:[#allocation2 + $0x88] sm:$0xff] %vm219, 0.0
          %238 = vst.msk [vmem:[#allocation2 + $0x90] sm:$0xff] %vm219, 0.0
          %239 = vst.msk [vmem:[#allocation2 + $0x98] sm:$0xff] %vm219, 0.0
          %240 = vst.msk [vmem:[#allocation2 + $0xa0] sm:$0xff] %vm219, 0.0
          %241 = vst.msk [vmem:[#allocation2 + $0xa8] sm:$0xff] %vm219, 0.0
          %242 = vst.msk [vmem:[#allocation2 + $0xb0] sm:$0xff] %vm219, 0.0
          %243 = vst.msk [vmem:[#allocation2 + $0xb8] sm:$0xff] %vm219, 0.0
          %244 = vst.msk [vmem:[#allocation2 + $0xc0] sm:$0xff] %vm219, 0.0
          %245 = vst.msk [vmem:[#allocation2 + $0xc8] sm:$0xff] %vm219, 0.0
          %246 = vst.msk [vmem:[#allocation2 + $0xd0] sm:$0xff] %vm219, 0.0
          %247 = vst.msk [vmem:[#allocation2 + $0xd8] sm:$0xff] %vm219, 0.0
          %248 = vst.msk [vmem:[#allocation2 + $0xe0] sm:$0xff] %vm219, 0.0
          %249 = vst.msk [vmem:[#allocation2 + $0xe8] sm:$0xff] %vm219, 0.0
          %250 = vst.msk [vmem:[#allocation2 + $0xf0] sm:$0xff] %vm219, 0.0
          %251 = vst.msk [vmem:[#allocation2 + $0xf8] sm:$0xff] %vm219, 0.0
          %252 = vst.msk [vmem:[#allocation2 + $0x100] sm:$0xff] %vm219, 0.0
          %253 = vst.msk [vmem:[#allocation2 + $0x108] sm:$0xff] %vm219, 0.0
          %254 = vst.msk [vmem:[#allocation2 + $0x110] sm:$0xff] %vm219, 0.0
          %255 = vst.msk [vmem:[#allocation2 + $0x118] sm:$0xff] %vm219, 0.0
          %256 = vst.msk [vmem:[#allocation2 + $0x120] sm:$0xff] %vm219, 0.0
          %257 = vst.msk [vmem:[#allocation2 + $0x128] sm:$0xff] %vm219, 0.0
          %258 = vst.msk [vmem:[#allocation2 + $0x130] sm:$0xff] %vm219, 0.0
          %259 = vst.msk [vmem:[#allocation2 + $0x138] sm:$0xff] %vm219, 0.0
          %260 = vst.msk [vmem:[#allocation2 + $0x140] sm:$0xff] %vm219, 0.0
          %261 = vst.msk [vmem:[#allocation2 + $0x148] sm:$0xff] %vm219, 0.0
          %262 = vst.msk [vmem:[#allocation2 + $0x150] sm:$0xff] %vm219, 0.0
          %263 = vst.msk [vmem:[#allocation2 + $0x158] sm:$0xff] %vm219, 0.0
          %264 = vst.msk [vmem:[#allocation2 + $0x160] sm:$0xff] %vm219, 0.0
          %265 = vst.msk [vmem:[#allocation2 + $0x168] sm:$0xff] %vm219, 0.0
          %266 = vst.msk [vmem:[#allocation2 + $0x170] sm:$0xff] %vm219, 0.0
          %267 = vst.msk [vmem:[#allocation2 + $0x178] sm:$0xff] %vm219, 0.0
          %268 = vst.msk [vmem:[#allocation2 + $0x180] sm:$0xff] %vm219, 0.0
          %269 = vst.msk [vmem:[#allocation2 + $0x188] sm:$0xff] %vm219, 0.0
          %270 = vst.msk [vmem:[#allocation2 + $0x190] sm:$0xff] %vm219, 0.0
          %271 = vst.msk [vmem:[#allocation2 + $0x198] sm:$0xff] %vm219, 0.0
          %272 = vst.msk [vmem:[#allocation2 + $0x1a0] sm:$0xff] %vm219, 0.0
          %273 = vst.msk [vmem:[#allocation2 + $0x1a8] sm:$0xff] %vm219, 0.0
          %274 = vst.msk [vmem:[#allocation2 + $0x1b0] sm:$0xff] %vm219, 0.0
          %275 = vst.msk [vmem:[#allocation2 + $0x1b8] sm:$0xff] %vm219, 0.0
          %276 = vst.msk [vmem:[#allocation2 + $0x1c0] sm:$0xff] %vm219, 0.0
          %277 = vst.msk [vmem:[#allocation2 + $0x1c8] sm:$0xff] %vm219, 0.0
          %278 = vst.msk [vmem:[#allocation2 + $0x1d0] sm:$0xff] %vm219, 0.0
          %279 = vst.msk [vmem:[#allocation2 + $0x1d8] sm:$0xff] %vm219, 0.0
          %280 = vst.msk [vmem:[#allocation2 + $0x1e0] sm:$0xff] %vm219, 0.0
          %281 = vst.msk [vmem:[#allocation2 + $0x1e8] sm:$0xff] %vm219, 0.0
          %282 = vst.msk [vmem:[#allocation2 + $0x1f0] sm:$0xff] %vm219, 0.0
          %283 = vst.msk [vmem:[#allocation2 + $0x1f8] sm:$0xff] %vm219, 0.0
        $region36: #{_conv_bn_leaky.1} parent=31 // pred_fallthru
          _
        %v284 = vld [vmem:[#allocation2] sm:$0xff]
        %v285 = vld [vmem:[#allocation2 + $0x8] sm:$0xff]
        %v286 = vld [vmem:[#allocation2 + $0x10] sm:$0xff]
        %v287 = vld [vmem:[#allocation2 + $0x18] sm:$0xff]
        %v288 = vld [vmem:[#allocation2 + $0x20] sm:$0xff]
        %v289 = vld [vmem:[#allocation2 + $0x28] sm:$0xff]
        %v290 = vld [vmem:[#allocation2 + $0x30] sm:$0xff]
        %v291 = vld [vmem:[#allocation2 + $0x38] sm:$0xff]
        %v292 = vld [vmem:[#allocation2 + $0x40] sm:$0xff]
        %v293 = vld [vmem:[#allocation2 + $0x48] sm:$0xff]
        %v294 = vld [vmem:[#allocation2 + $0x50] sm:$0xff]
        %v295 = vld [vmem:[#allocation2 + $0x58] sm:$0xff]
        %v296 = vld [vmem:[#allocation2 + $0x60] sm:$0xff]
        %v297 = vld [vmem:[#allocation2 + $0x68] sm:$0xff]
        %v298 = vld [vmem:[#allocation2 + $0x70] sm:$0xff]
        %v299 = vld [vmem:[#allocation2 + $0x78] sm:$0xff]
        %v300 = vld [vmem:[#allocation2 + $0x80] sm:$0xff]
        %v301 = vld [vmem:[#allocation2 + $0x88] sm:$0xff]
        %v302 = vld [vmem:[#allocation2 + $0x90] sm:$0xff]
        %v303 = vld [vmem:[#allocation2 + $0x98] sm:$0xff]
        %v304 = vld [vmem:[#allocation2 + $0xa0] sm:$0xff]
        %v305 = vld [vmem:[#allocation2 + $0xa8] sm:$0xff]
        %v306 = vld [vmem:[#allocation2 + $0xb0] sm:$0xff]
        %v307 = vld [vmem:[#allocation2 + $0xb8] sm:$0xff]
        %v308 = vld [vmem:[#allocation2 + $0xc0] sm:$0xff]
        %v309 = vld [vmem:[#allocation2 + $0xc8] sm:$0xff]
        %v310 = vld [vmem:[#allocation2 + $0xd0] sm:$0xff]
        %v311 = vld [vmem:[#allocation2 + $0xd8] sm:$0xff]
        %v312 = vld [vmem:[#allocation2 + $0xe0] sm:$0xff]
        %v313 = vld [vmem:[#allocation2 + $0xe8] sm:$0xff]
        %v314 = vld [vmem:[#allocation2 + $0xf0] sm:$0xff]
        %v315 = vld [vmem:[#allocation2 + $0xf8] sm:$0xff]
        %v316 = vld [vmem:[#allocation2 + $0x100] sm:$0xff]
        %v317 = vld [vmem:[#allocation2 + $0x108] sm:$0xff]
        %v318 = vld [vmem:[#allocation2 + $0x110] sm:$0xff]
        %v319 = vld [vmem:[#allocation2 + $0x118] sm:$0xff]
        %v320 = vld [vmem:[#allocation2 + $0x120] sm:$0xff]
        %v321 = vld [vmem:[#allocation2 + $0x128] sm:$0xff]
        %v322 = vld [vmem:[#allocation2 + $0x130] sm:$0xff]
        %v323 = vld [vmem:[#allocation2 + $0x138] sm:$0xff]
        %v324 = vld [vmem:[#allocation2 + $0x140] sm:$0xff]
        %v325 = vld [vmem:[#allocation2 + $0x148] sm:$0xff]
        %v326 = vld [vmem:[#allocation2 + $0x150] sm:$0xff]
        %v327 = vld [vmem:[#allocation2 + $0x158] sm:$0xff]
        %v328 = vld [vmem:[#allocation2 + $0x160] sm:$0xff]
        %v329 = vld [vmem:[#allocation2 + $0x168] sm:$0xff]
        %v330 = vld [vmem:[#allocation2 + $0x170] sm:$0xff]
        %v331 = vld [vmem:[#allocation2 + $0x178] sm:$0xff]
        %v332 = vld [vmem:[#allocation2 + $0x180] sm:$0xff]
        %v333 = vld [vmem:[#allocation2 + $0x188] sm:$0xff]
        %v334 = vld [vmem:[#allocation2 + $0x190] sm:$0xff]
        %v335 = vld [vmem:[#allocation2 + $0x198] sm:$0xff]
        %v336 = vld [vmem:[#allocation2 + $0x1a0] sm:$0xff]
        %v337 = vld [vmem:[#allocation2 + $0x1a8] sm:$0xff]
        %v338 = vld [vmem:[#allocation2 + $0x1b0] sm:$0xff]
        %v339 = vld [vmem:[#allocation2 + $0x1b8] sm:$0xff]
        %v340 = vld [vmem:[#allocation2 + $0x1c0] sm:$0xff]
        %v341 = vld [vmem:[#allocation2 + $0x1c8] sm:$0xff]
        %v342 = vld [vmem:[#allocation2 + $0x1d0] sm:$0xff]
        %v343 = vld [vmem:[#allocation2 + $0x1d8] sm:$0xff]
        %v344 = vld [vmem:[#allocation2 + $0x1e0] sm:$0xff]
        %v345 = vld [vmem:[#allocation2 + $0x1e8] sm:$0xff]
        %v346 = vld [vmem:[#allocation2 + $0x1f0] sm:$0xff]
        %v347 = vld [vmem:[#allocation2 + $0x1f8] sm:$0xff]
        %v348 = vld [vmem:[%s208] sm:$0xff]
        %v349 = vld [vmem:[%s208 + $0x8] sm:$0xff]
        %v350 = vld [vmem:[%s208 + $0x10] sm:$0xff]
        %v351 = vld [vmem:[%s208 + $0x18] sm:$0xff]
        %v352 = vld [vmem:[%s208 + $0x20] sm:$0xff]
        %v353 = vld [vmem:[%s208 + $0x28] sm:$0xff]
        %v354 = vld [vmem:[%s208 + $0x30] sm:$0xff]
        %v355 = vld [vmem:[%s208 + $0x38] sm:$0xff]
        %v356 = vld [vmem:[%s208 + $0x40] sm:$0xff]
        %v357 = vld [vmem:[%s208 + $0x48] sm:$0xff]
        %v358 = vld [vmem:[%s208 + $0x50] sm:$0xff]
        %v359 = vld [vmem:[%s208 + $0x58] sm:$0xff]
        %v360 = vld [vmem:[%s208 + $0x60] sm:$0xff]
        %v361 = vld [vmem:[%s208 + $0x68] sm:$0xff]
        %v362 = vld [vmem:[%s208 + $0x70] sm:$0xff]
        %v363 = vld [vmem:[%s208 + $0x78] sm:$0xff]
        %v364 = vld [vmem:[%s208 + $0x80] sm:$0xff]
        %v365 = vld [vmem:[%s208 + $0x88] sm:$0xff]
        %v366 = vld [vmem:[%s208 + $0x90] sm:$0xff]
        %v367 = vld [vmem:[%s208 + $0x98] sm:$0xff]
        %v368 = vld [vmem:[%s208 + $0xa0] sm:$0xff]
        %v369 = vld [vmem:[%s208 + $0xa8] sm:$0xff]
        %v370 = vld [vmem:[%s208 + $0xb0] sm:$0xff]
        %v371 = vld [vmem:[%s208 + $0xb8] sm:$0xff]
        %v372 = vld [vmem:[%s208 + $0xc0] sm:$0xff]
        %v373 = vld [vmem:[%s208 + $0xc8] sm:$0xff]
        %v374 = vld [vmem:[%s208 + $0xd0] sm:$0xff]
        %v375 = vld [vmem:[%s208 + $0xd8] sm:$0xff]
        %v376 = vld [vmem:[%s208 + $0xe0] sm:$0xff]
        %v377 = vld [vmem:[%s208 + $0xe8] sm:$0xff]
        %v378 = vld [vmem:[%s208 + $0xf0] sm:$0xff]
        %v379 = vld [vmem:[%s208 + $0xf8] sm:$0xff]
        %v380 = vld [vmem:[%s208 + $0x100] sm:$0xff]
        %v381 = vld [vmem:[%s208 + $0x108] sm:$0xff]
        %v382 = vld [vmem:[%s208 + $0x110] sm:$0xff]
        %v383 = vld [vmem:[%s208 + $0x118] sm:$0xff]
        %v384 = vld [vmem:[%s208 + $0x120] sm:$0xff]
        %v385 = vld [vmem:[%s208 + $0x128] sm:$0xff]
        %v386 = vld [vmem:[%s208 + $0x130] sm:$0xff]
        %v387 = vld [vmem:[%s208 + $0x138] sm:$0xff]
        %v388 = vld [vmem:[%s208 + $0x140] sm:$0xff]
        %v389 = vld [vmem:[%s208 + $0x148] sm:$0xff]
        %v390 = vld [vmem:[%s208 + $0x150] sm:$0xff]
        %v391 = vld [vmem:[%s208 + $0x158] sm:$0xff]
        %v392 = vld [vmem:[%s208 + $0x160] sm:$0xff]
        %v393 = vld [vmem:[%s208 + $0x168] sm:$0xff]
        %v394 = vld [vmem:[%s208 + $0x170] sm:$0xff]
        %v395 = vld [vmem:[%s208 + $0x178] sm:$0xff]
        %v396 = vld [vmem:[%s208 + $0x180] sm:$0xff]
        %v397 = vld [vmem:[%s208 + $0x188] sm:$0xff]
        %v398 = vld [vmem:[%s208 + $0x190] sm:$0xff]
        %v399 = vld [vmem:[%s208 + $0x198] sm:$0xff]
        %v400 = vld [vmem:[%s208 + $0x1a0] sm:$0xff]
        %v401 = vld [vmem:[%s208 + $0x1a8] sm:$0xff]
        %v402 = vld [vmem:[%s208 + $0x1b0] sm:$0xff]
        %v403 = vld [vmem:[%s208 + $0x1b8] sm:$0xff]
        %v404 = vld [vmem:[%s208 + $0x1c0] sm:$0xff]
        %v405 = vld [vmem:[%s208 + $0x1c8] sm:$0xff]
        %v406 = vld [vmem:[%s208 + $0x1d0] sm:$0xff]
        %v407 = vld [vmem:[%s208 + $0x1d8] sm:$0xff]
        %v408 = vld [vmem:[%s208 + $0x1e0] sm:$0xff]
        %v409 = vld [vmem:[%s208 + $0x1e8] sm:$0xff]
        %v410 = vld [vmem:[%s208 + $0x1f0] sm:$0xff]
        %v411 = vld [vmem:[%s208 + $0x1f8] sm:$0xff]
        %v412 = vld [vmem:[%s213] sm:$0x7]
        %vm413 = vcmask 23552
        %v415 = vsel %vm413, %v348, 0
        %v418 = vsel %vm413, %v349, 0
        %v421 = vsel %vm413, %v350, 0
        %v424 = vsel %vm413, %v351, 0
        %v427 = vsel %vm413, %v352, 0
        %v430 = vsel %vm413, %v353, 0
        %v433 = vsel %vm413, %v354, 0
        %v436 = vsel %vm413, %v355, 0
        %v439 = vsel %vm413, %v356, 0
        %v442 = vsel %vm413, %v357, 0
        %v445 = vsel %vm413, %v358, 0
        %v448 = vsel %vm413, %v359, 0
        %v451 = vsel %vm413, %v360, 0
        %v454 = vsel %vm413, %v361, 0
        %v457 = vsel %vm413, %v362, 0
        %v460 = vsel %vm413, %v363, 0
        %v463 = vsel %vm413, %v364, 0
        %v466 = vsel %vm413, %v365, 0
        %v469 = vsel %vm413, %v366, 0
        %v472 = vsel %vm413, %v367, 0
        %v475 = vsel %vm413, %v368, 0
        %v478 = vsel %vm413, %v369, 0
        %v481 = vsel %vm413, %v370, 0
        %v484 = vsel %vm413, %v371, 0
        %v487 = vsel %vm413, %v372, 0
        %v490 = vsel %vm413, %v373, 0
        %v493 = vsel %vm413, %v374, 0
        %v496 = vsel %vm413, %v375, 0
        %v499 = vsel %vm413, %v376, 0
        %v502 = vsel %vm413, %v377, 0
        %v505 = vsel %vm413, %v378, 0
        %v508 = vsel %vm413, %v379, 0
        %v511 = vsel %vm413, %v380, 0
        %v514 = vsel %vm413, %v381, 0
        %v517 = vsel %vm413, %v382, 0
        %v520 = vsel %vm413, %v383, 0
        %v523 = vsel %vm413, %v384, 0
        %v526 = vsel %vm413, %v385, 0
        %v529 = vsel %vm413, %v386, 0
        %v532 = vsel %vm413, %v387, 0
        %v535 = vsel %vm413, %v388, 0
        %v538 = vsel %vm413, %v389, 0
        %v541 = vsel %vm413, %v390, 0
        %v544 = vsel %vm413, %v391, 0
        %v547 = vsel %vm413, %v392, 0
        %v550 = vsel %vm413, %v393, 0
        %v553 = vsel %vm413, %v394, 0
        %v556 = vsel %vm413, %v395, 0
        %v559 = vsel %vm413, %v396, 0
        %v562 = vsel %vm413, %v397, 0
        %v565 = vsel %vm413, %v398, 0
        %v568 = vsel %vm413, %v399, 0
        %v571 = vsel %vm413, %v400, 0
        %v574 = vsel %vm413, %v401, 0
        %v577 = vsel %vm413, %v402, 0
        %v580 = vsel %vm413, %v403, 0
        %v583 = vsel %vm413, %v404, 0
        %v586 = vsel %vm413, %v405, 0
        %v589 = vsel %vm413, %v406, 0
        %v592 = vsel %vm413, %v407, 0
        %v595 = vsel %vm413, %v408, 0
        %v598 = vsel %vm413, %v409, 0
        %v601 = vsel %vm413, %v410, 0
        %v604 = vsel %vm413, %v411, 0
        %vm606 = vcmask 1042432
        %v608 = vsel %vm606, %v412, 0
        %610 = vmatpush.msra.mxu0 0.0
        %611 = vmatpush.msra.mxu0 0.0
        %612 = vmatpush.msra.mxu0 0.0
        %613 = vmatpush.msra.mxu0 0.0
        %614 = vmatpush.msra.mxu0 0.0
        %615 = vmatpush.msra.mxu0 0.0
        %616 = vmatpush.msra.mxu0 0.0
        %617 = vmatpush.msra.mxu0 0.0
        %618 = vmatpush.msra.mxu0 0.0
        %619 = vmatpush.msra.mxu0 0.0
        %620 = vmatpush.msra.mxu0 0.0
        %621 = vmatpush.msra.mxu0 0.0
        %622 = vmatpush.msra.mxu0 0.0
        %623 = vmatpush.msra.mxu0 0.0
        %624 = vmatpush.msra.mxu0 0.0
        %625 = vmatpush.msra.mxu0 %v608
        %626 = vmatmul.f32.gmra.mxu0 %v415
        %v627 = vpop.f32.mrf.mxu0
        %v628 = vadd.f32 0.0, %v627
        %629 = vmatmul.f32.gmra.mxu0 %v418
        %v630 = vpop.f32.mrf.mxu0
        %v631 = vadd.f32 0.0, %v630
        %632 = vmatmul.f32.gmra.mxu0 %v421
        %v633 = vpop.f32.mrf.mxu0
        %v634 = vadd.f32 0.0, %v633
        %635 = vmatmul.f32.gmra.mxu0 %v424
        %v636 = vpop.f32.mrf.mxu0
        %v637 = vadd.f32 0.0, %v636
        %638 = vmatmul.f32.gmra.mxu0 %v427
        %v639 = vpop.f32.mrf.mxu0
        %v640 = vadd.f32 0.0, %v639
        %641 = vmatmul.f32.gmra.mxu0 %v430
        %v642 = vpop.f32.mrf.mxu0
        %v643 = vadd.f32 0.0, %v642
        %644 = vmatmul.f32.gmra.mxu0 %v433
        %v645 = vpop.f32.mrf.mxu0
        %v646 = vadd.f32 0.0, %v645
        %647 = vmatmul.f32.gmra.mxu0 %v436
        %v648 = vpop.f32.mrf.mxu0
        %v649 = vadd.f32 0.0, %v648
        %650 = vmatmul.f32.gmra.mxu0 %v439
        %v651 = vpop.f32.mrf.mxu0
        %v652 = vadd.f32 0.0, %v651
        %653 = vmatmul.f32.gmra.mxu0 %v442
        %v654 = vpop.f32.mrf.mxu0
        %v655 = vadd.f32 0.0, %v654
        %656 = vmatmul.f32.gmra.mxu0 %v445
        %v657 = vpop.f32.mrf.mxu0
        %v658 = vadd.f32 0.0, %v657
        %659 = vmatmul.f32.gmra.mxu0 %v448
        %v660 = vpop.f32.mrf.mxu0
        %v661 = vadd.f32 0.0, %v660
        %662 = vmatmul.f32.gmra.mxu0 %v451
        %v663 = vpop.f32.mrf.mxu0
        %v664 = vadd.f32 0.0, %v663
        %665 = vmatmul.f32.gmra.mxu0 %v454
        %v666 = vpop.f32.mrf.mxu0
        %v667 = vadd.f32 0.0, %v666
        %668 = vmatmul.f32.gmra.mxu0 %v457
        %v669 = vpop.f32.mrf.mxu0
        %v670 = vadd.f32 0.0, %v669
        %671 = vmatmul.f32.gmra.mxu0 %v460
        %v672 = vpop.f32.mrf.mxu0
        %v673 = vadd.f32 0.0, %v672
        %674 = vmatmul.f32.gmra.mxu0 %v463
        %v675 = vpop.f32.mrf.mxu0
        %v676 = vadd.f32 0.0, %v675
        %677 = vmatmul.f32.gmra.mxu0 %v466
        %v678 = vpop.f32.mrf.mxu0
        %v679 = vadd.f32 0.0, %v678
        %680 = vmatmul.f32.gmra.mxu0 %v469
        %v681 = vpop.f32.mrf.mxu0
        %v682 = vadd.f32 0.0, %v681
        %683 = vmatmul.f32.gmra.mxu0 %v472
        %v684 = vpop.f32.mrf.mxu0
        %v685 = vadd.f32 0.0, %v684
        %686 = vmatmul.f32.gmra.mxu0 %v475
        %v687 = vpop.f32.mrf.mxu0
        %v688 = vadd.f32 0.0, %v687
        %689 = vmatmul.f32.gmra.mxu0 %v478
        %v690 = vpop.f32.mrf.mxu0
        %v691 = vadd.f32 0.0, %v690
        %692 = vmatmul.f32.gmra.mxu0 %v481
        %v693 = vpop.f32.mrf.mxu0
        %v694 = vadd.f32 0.0, %v693
        %695 = vmatmul.f32.gmra.mxu0 %v484
        %v696 = vpop.f32.mrf.mxu0
        %v697 = vadd.f32 0.0, %v696
        %698 = vmatmul.f32.gmra.mxu0 %v487
        %v699 = vpop.f32.mrf.mxu0
        %v700 = vadd.f32 0.0, %v699
        %701 = vmatmul.f32.gmra.mxu0 %v490
        %v702 = vpop.f32.mrf.mxu0
        %v703 = vadd.f32 0.0, %v702
        %704 = vmatmul.f32.gmra.mxu0 %v493
        %v705 = vpop.f32.mrf.mxu0
        %v706 = vadd.f32 0.0, %v705
        %707 = vmatmul.f32.gmra.mxu0 %v496
        %v708 = vpop.f32.mrf.mxu0
        %v709 = vadd.f32 0.0, %v708
        %710 = vmatmul.f32.gmra.mxu0 %v499
        %v711 = vpop.f32.mrf.mxu0
        %v712 = vadd.f32 0.0, %v711
        %713 = vmatmul.f32.gmra.mxu0 %v502
        %v714 = vpop.f32.mrf.mxu0
        %v715 = vadd.f32 0.0, %v714
        %716 = vmatmul.f32.gmra.mxu0 %v505
        %v717 = vpop.f32.mrf.mxu0
        %v718 = vadd.f32 0.0, %v717
        %719 = vmatmul.f32.gmra.mxu0 %v508
        %v720 = vpop.f32.mrf.mxu0
        %v721 = vadd.f32 0.0, %v720
        %722 = vmatmul.f32.gmra.mxu0 %v511
        %v723 = vpop.f32.mrf.mxu0
        %v724 = vadd.f32 0.0, %v723
        %725 = vmatmul.f32.gmra.mxu0 %v514
        %v726 = vpop.f32.mrf.mxu0
        %v727 = vadd.f32 0.0, %v726
        %728 = vmatmul.f32.gmra.mxu0 %v517
        %v729 = vpop.f32.mrf.mxu0
        %v730 = vadd.f32 0.0, %v729
        %731 = vmatmul.f32.gmra.mxu0 %v520
        %v732 = vpop.f32.mrf.mxu0
        %v733 = vadd.f32 0.0, %v732
        %734 = vmatmul.f32.gmra.mxu0 %v523
        %v735 = vpop.f32.mrf.mxu0
        %v736 = vadd.f32 0.0, %v735
        %737 = vmatmul.f32.gmra.mxu0 %v526
        %v738 = vpop.f32.mrf.mxu0
        %v739 = vadd.f32 0.0, %v738
        %740 = vmatmul.f32.gmra.mxu0 %v529
        %v741 = vpop.f32.mrf.mxu0
        %v742 = vadd.f32 0.0, %v741
        %743 = vmatmul.f32.gmra.mxu0 %v532
        %v744 = vpop.f32.mrf.mxu0
        %v745 = vadd.f32 0.0, %v744
        %746 = vmatmul.f32.gmra.mxu0 %v535
        %v747 = vpop.f32.mrf.mxu0
        %v748 = vadd.f32 0.0, %v747
        %749 = vmatmul.f32.gmra.mxu0 %v538
        %v750 = vpop.f32.mrf.mxu0
        %v751 = vadd.f32 0.0, %v750
        %752 = vmatmul.f32.gmra.mxu0 %v541
        %v753 = vpop.f32.mrf.mxu0
        %v754 = vadd.f32 0.0, %v753
        %755 = vmatmul.f32.gmra.mxu0 %v544
        %v756 = vpop.f32.mrf.mxu0
        %v757 = vadd.f32 0.0, %v756
        %758 = vmatmul.f32.gmra.mxu0 %v547
        %v759 = vpop.f32.mrf.mxu0
        %v760 = vadd.f32 0.0, %v759
        %761 = vmatmul.f32.gmra.mxu0 %v550
        %v762 = vpop.f32.mrf.mxu0
        %v763 = vadd.f32 0.0, %v762
        %764 = vmatmul.f32.gmra.mxu0 %v553
        %v765 = vpop.f32.mrf.mxu0
        %v766 = vadd.f32 0.0, %v765
        %767 = vmatmul.f32.gmra.mxu0 %v556
        %v768 = vpop.f32.mrf.mxu0
        %v769 = vadd.f32 0.0, %v768
        %770 = vmatmul.f32.gmra.mxu0 %v559
        %v771 = vpop.f32.mrf.mxu0
        %v772 = vadd.f32 0.0, %v771
        %773 = vmatmul.f32.gmra.mxu0 %v562
        %v774 = vpop.f32.mrf.mxu0
        %v775 = vadd.f32 0.0, %v774
        %776 = vmatmul.f32.gmra.mxu0 %v565
        %v777 = vpop.f32.mrf.mxu0
        %v778 = vadd.f32 0.0, %v777
        %779 = vmatmul.f32.gmra.mxu0 %v568
        %v780 = vpop.f32.mrf.mxu0
        %v781 = vadd.f32 0.0, %v780
        %782 = vmatmul.f32.gmra.mxu0 %v571
        %v783 = vpop.f32.mrf.mxu0
        %v784 = vadd.f32 0.0, %v783
        %785 = vmatmul.f32.gmra.mxu0 %v574
        %v786 = vpop.f32.mrf.mxu0
        %v787 = vadd.f32 0.0, %v786
        %788 = vmatmul.f32.gmra.mxu0 %v577
        %v789 = vpop.f32.mrf.mxu0
        %v790 = vadd.f32 0.0, %v789
        %791 = vmatmul.f32.gmra.mxu0 %v580
        %v792 = vpop.f32.mrf.mxu0
        %v793 = vadd.f32 0.0, %v792
        %794 = vmatmul.f32.gmra.mxu0 %v583
        %v795 = vpop.f32.mrf.mxu0
        %v796 = vadd.f32 0.0, %v795
        %797 = vmatmul.f32.gmra.mxu0 %v586
        %v798 = vpop.f32.mrf.mxu0
        %v799 = vadd.f32 0.0, %v798
        %800 = vmatmul.f32.gmra.mxu0 %v589
        %v801 = vpop.f32.mrf.mxu0
        %v802 = vadd.f32 0.0, %v801
        %803 = vmatmul.f32.gmra.mxu0 %v592
        %v804 = vpop.f32.mrf.mxu0
        %v805 = vadd.f32 0.0, %v804
        %806 = vmatmul.f32.gmra.mxu0 %v595
        %v807 = vpop.f32.mrf.mxu0
        %v808 = vadd.f32 0.0, %v807
        %809 = vmatmul.f32.gmra.mxu0 %v598
        %v810 = vpop.f32.mrf.mxu0
        %v811 = vadd.f32 0.0, %v810
        %812 = vmatmul.f32.gmra.mxu0 %v601
        %v813 = vpop.f32.mrf.mxu0
        %v814 = vadd.f32 0.0, %v813
        %815 = vmatmul.f32.gmra.mxu0 %v604
        %v816 = vpop.f32.mrf.mxu0
        %v817 = vadd.f32 0.0, %v816
        %818 = vdwg.mxu0
        %v819 = vadd.f32 %v284, %v628
        %v820 = vadd.f32 %v285, %v631
        %v821 = vadd.f32 %v286, %v634
        %v822 = vadd.f32 %v287, %v637
        %v823 = vadd.f32 %v288, %v640
        %v824 = vadd.f32 %v289, %v643
        %v825 = vadd.f32 %v290, %v646
        %v826 = vadd.f32 %v291, %v649
        %v827 = vadd.f32 %v292, %v652
        %v828 = vadd.f32 %v293, %v655
        %v829 = vadd.f32 %v294, %v658
        %v830 = vadd.f32 %v295, %v661
        %v831 = vadd.f32 %v296, %v664
        %v832 = vadd.f32 %v297, %v667
        %v833 = vadd.f32 %v298, %v670
        %v834 = vadd.f32 %v299, %v673
        %v835 = vadd.f32 %v300, %v676
        %v836 = vadd.f32 %v301, %v679
        %v837 = vadd.f32 %v302, %v682
        %v838 = vadd.f32 %v303, %v685
        %v839 = vadd.f32 %v304, %v688
        %v840 = vadd.f32 %v305, %v691
        %v841 = vadd.f32 %v306, %v694
        %v842 = vadd.f32 %v307, %v697
        %v843 = vadd.f32 %v308, %v700
        %v844 = vadd.f32 %v309, %v703
        %v845 = vadd.f32 %v310, %v706
        %v846 = vadd.f32 %v311, %v709
        %v847 = vadd.f32 %v312, %v712
        %v848 = vadd.f32 %v313, %v715
        %v849 = vadd.f32 %v314, %v718
        %v850 = vadd.f32 %v315, %v721
        %v851 = vadd.f32 %v316, %v724
        %v852 = vadd.f32 %v317, %v727
        %v853 = vadd.f32 %v318, %v730
        %v854 = vadd.f32 %v319, %v733
        %v855 = vadd.f32 %v320, %v736
        %v856 = vadd.f32 %v321, %v739
        %v857 = vadd.f32 %v322, %v742
        %v858 = vadd.f32 %v323, %v745
        %v859 = vadd.f32 %v324, %v748
        %v860 = vadd.f32 %v325, %v751
        %v861 = vadd.f32 %v326, %v754
        %v862 = vadd.f32 %v327, %v757
        %v863 = vadd.f32 %v328, %v760
        %v864 = vadd.f32 %v329, %v763
        %v865 = vadd.f32 %v330, %v766
        %v866 = vadd.f32 %v331, %v769
        %v867 = vadd.f32 %v332, %v772
        %v868 = vadd.f32 %v333, %v775
        %v869 = vadd.f32 %v334, %v778
        %v870 = vadd.f32 %v335, %v781
        %v871 = vadd.f32 %v336, %v784
        %v872 = vadd.f32 %v337, %v787
        %v873 = vadd.f32 %v338, %v790
        %v874 = vadd.f32 %v339, %v793
        %v875 = vadd.f32 %v340, %v796
        %v876 = vadd.f32 %v341, %v799
        %v877 = vadd.f32 %v342, %v802
        %v878 = vadd.f32 %v343, %v805
        %v879 = vadd.f32 %v344, %v808
        %v880 = vadd.f32 %v345, %v811
        %v881 = vadd.f32 %v346, %v814
        %v882 = vadd.f32 %v347, %v817
        %vm883 = vcmask 261120
        %884 = vst.msk [vmem:[#allocation2] sm:$0xff] %vm883, %v819
        %885 = vst.msk [vmem:[#allocation2 + $0x8] sm:$0xff] %vm883, %v820
        %886 = vst.msk [vmem:[#allocation2 + $0x10] sm:$0xff] %vm883, %v821
        %887 = vst.msk [vmem:[#allocation2 + $0x18] sm:$0xff] %vm883, %v822
        %888 = vst.msk [vmem:[#allocation2 + $0x20] sm:$0xff] %vm883, %v823
        %889 = vst.msk [vmem:[#allocation2 + $0x28] sm:$0xff] %vm883, %v824
        %890 = vst.msk [vmem:[#allocation2 + $0x30] sm:$0xff] %vm883, %v825
        %891 = vst.msk [vmem:[#allocation2 + $0x38] sm:$0xff] %vm883, %v826
        %892 = vst.msk [vmem:[#allocation2 + $0x40] sm:$0xff] %vm883, %v827
        %893 = vst.msk [vmem:[#allocation2 + $0x48] sm:$0xff] %vm883, %v828
        %894 = vst.msk [vmem:[#allocation2 + $0x50] sm:$0xff] %vm883, %v829
        %895 = vst.msk [vmem:[#allocation2 + $0x58] sm:$0xff] %vm883, %v830
        %896 = vst.msk [vmem:[#allocation2 + $0x60] sm:$0xff] %vm883, %v831
        %897 = vst.msk [vmem:[#allocation2 + $0x68] sm:$0xff] %vm883, %v832
        %898 = vst.msk [vmem:[#allocation2 + $0x70] sm:$0xff] %vm883, %v833
        %899 = vst.msk [vmem:[#allocation2 + $0x78] sm:$0xff] %vm883, %v834
        %900 = vst.msk [vmem:[#allocation2 + $0x80] sm:$0xff] %vm883, %v835
        %901 = vst.msk [vmem:[#allocation2 + $0x88] sm:$0xff] %vm883, %v836
        %902 = vst.msk [vmem:[#allocation2 + $0x90] sm:$0xff] %vm883, %v837
        %903 = vst.msk [vmem:[#allocation2 + $0x98] sm:$0xff] %vm883, %v838
        %904 = vst.msk [vmem:[#allocation2 + $0xa0] sm:$0xff] %vm883, %v839
        %905 = vst.msk [vmem:[#allocation2 + $0xa8] sm:$0xff] %vm883, %v840
        %906 = vst.msk [vmem:[#allocation2 + $0xb0] sm:$0xff] %vm883, %v841
        %907 = vst.msk [vmem:[#allocation2 + $0xb8] sm:$0xff] %vm883, %v842
        %908 = vst.msk [vmem:[#allocation2 + $0xc0] sm:$0xff] %vm883, %v843
        %909 = vst.msk [vmem:[#allocation2 + $0xc8] sm:$0xff] %vm883, %v844
        %910 = vst.msk [vmem:[#allocation2 + $0xd0] sm:$0xff] %vm883, %v845
        %911 = vst.msk [vmem:[#allocation2 + $0xd8] sm:$0xff] %vm883, %v846
        %912 = vst.msk [vmem:[#allocation2 + $0xe0] sm:$0xff] %vm883, %v847
        %913 = vst.msk [vmem:[#allocation2 + $0xe8] sm:$0xff] %vm883, %v848
        %914 = vst.msk [vmem:[#allocation2 + $0xf0] sm:$0xff] %vm883, %v849
        %915 = vst.msk [vmem:[#allocation2 + $0xf8] sm:$0xff] %vm883, %v850
        %916 = vst.msk [vmem:[#allocation2 + $0x100] sm:$0xff] %vm883, %v851
        %917 = vst.msk [vmem:[#allocation2 + $0x108] sm:$0xff] %vm883, %v852
        %918 = vst.msk [vmem:[#allocation2 + $0x110] sm:$0xff] %vm883, %v853
        %919 = vst.msk [vmem:[#allocation2 + $0x118] sm:$0xff] %vm883, %v854
        %920 = vst.msk [vmem:[#allocation2 + $0x120] sm:$0xff] %vm883, %v855
        %921 = vst.msk [vmem:[#allocation2 + $0x128] sm:$0xff] %vm883, %v856
        %922 = vst.msk [vmem:[#allocation2 + $0x130] sm:$0xff] %vm883, %v857
        %923 = vst.msk [vmem:[#allocation2 + $0x138] sm:$0xff] %vm883, %v858
        %924 = vst.msk [vmem:[#allocation2 + $0x140] sm:$0xff] %vm883, %v859
        %925 = vst.msk [vmem:[#allocation2 + $0x148] sm:$0xff] %vm883, %v860
        %926 = vst.msk [vmem:[#allocation2 + $0x150] sm:$0xff] %vm883, %v861
        %927 = vst.msk [vmem:[#allocation2 + $0x158] sm:$0xff] %vm883, %v862
        %928 = vst.msk [vmem:[#allocation2 + $0x160] sm:$0xff] %vm883, %v863
        %929 = vst.msk [vmem:[#allocation2 + $0x168] sm:$0xff] %vm883, %v864
        %930 = vst.msk [vmem:[#allocation2 + $0x170] sm:$0xff] %vm883, %v865
        %931 = vst.msk [vmem:[#allocation2 + $0x178] sm:$0xff] %vm883, %v866
        %932 = vst.msk [vmem:[#allocation2 + $0x180] sm:$0xff] %vm883, %v867
        %933 = vst.msk [vmem:[#allocation2 + $0x188] sm:$0xff] %vm883, %v868
        %934 = vst.msk [vmem:[#allocation2 + $0x190] sm:$0xff] %vm883, %v869
        %935 = vst.msk [vmem:[#allocation2 + $0x198] sm:$0xff] %vm883, %v870
        %936 = vst.msk [vmem:[#allocation2 + $0x1a0] sm:$0xff] %vm883, %v871
        %937 = vst.msk [vmem:[#allocation2 + $0x1a8] sm:$0xff] %vm883, %v872
        %938 = vst.msk [vmem:[#allocation2 + $0x1b0] sm:$0xff] %vm883, %v873
        %939 = vst.msk [vmem:[#allocation2 + $0x1b8] sm:$0xff] %vm883, %v874
        %940 = vst.msk [vmem:[#allocation2 + $0x1c0] sm:$0xff] %vm883, %v875
        %941 = vst.msk [vmem:[#allocation2 + $0x1c8] sm:$0xff] %vm883, %v876
        %942 = vst.msk [vmem:[#allocation2 + $0x1d0] sm:$0xff] %vm883, %v877
        %943 = vst.msk [vmem:[#allocation2 + $0x1d8] sm:$0xff] %vm883, %v878
        %944 = vst.msk [vmem:[#allocation2 + $0x1e0] sm:$0xff] %vm883, %v879
        %945 = vst.msk [vmem:[#allocation2 + $0x1e8] sm:$0xff] %vm883, %v880
        %946 = vst.msk [vmem:[#allocation2 + $0x1f0] sm:$0xff] %vm883, %v881
        %947 = vst.msk [vmem:[#allocation2 + $0x1f8] sm:$0xff] %vm883, %v882
        %p948 = scmp.eq.s32.totalorder %s22, 8
        // Predicated region
        $region37: #{_conv_bn_leaky.1} parent=31 // pred_check
          %p949 = pneg %p948
        $region38: #{_conv_bn_leaky.1} parent=31 // pred_check_branch
          %951 = sbr.rel (%p949) target = $region40
        $region39: #{_conv_bn_leaky.1} parent=31 // pred_region
          %v952 = vld [vmem:[#allocation2] sm:$0xff]
          %v953 = vld [vmem:[#allocation2 + $0x8] sm:$0xff]
          %v954 = vld [vmem:[#allocation2 + $0x10] sm:$0xff]
          %v955 = vld [vmem:[#allocation2 + $0x18] sm:$0xff]
          %v956 = vld [vmem:[#allocation2 + $0x20] sm:$0xff]
          %v957 = vld [vmem:[#allocation2 + $0x28] sm:$0xff]
          %v958 = vld [vmem:[#allocation2 + $0x30] sm:$0xff]
          %v959 = vld [vmem:[#allocation2 + $0x38] sm:$0xff]
          %v960 = vld [vmem:[#allocation2 + $0x40] sm:$0xff]
          %v961 = vld [vmem:[#allocation2 + $0x48] sm:$0xff]
          %v962 = vld [vmem:[#allocation2 + $0x50] sm:$0xff]
          %v963 = vld [vmem:[#allocation2 + $0x58] sm:$0xff]
          %v964 = vld [vmem:[#allocation2 + $0x60] sm:$0xff]
          %v965 = vld [vmem:[#allocation2 + $0x68] sm:$0xff]
          %v966 = vld [vmem:[#allocation2 + $0x70] sm:$0xff]
          %v967 = vld [vmem:[#allocation2 + $0x78] sm:$0xff]
          %v968 = vld [vmem:[#allocation2 + $0x80] sm:$0xff]
          %v969 = vld [vmem:[#allocation2 + $0x88] sm:$0xff]
          %v970 = vld [vmem:[#allocation2 + $0x90] sm:$0xff]
          %v971 = vld [vmem:[#allocation2 + $0x98] sm:$0xff]
          %v972 = vld [vmem:[#allocation2 + $0xa0] sm:$0xff]
          %v973 = vld [vmem:[#allocation2 + $0xa8] sm:$0xff]
          %v974 = vld [vmem:[#allocation2 + $0xb0] sm:$0xff]
          %v975 = vld [vmem:[#allocation2 + $0xb8] sm:$0xff]
          %v976 = vld [vmem:[#allocation2 + $0xc0] sm:$0xff]
          %v977 = vld [vmem:[#allocation2 + $0xc8] sm:$0xff]
          %v978 = vld [vmem:[#allocation2 + $0xd0] sm:$0xff]
          %v979 = vld [vmem:[#allocation2 + $0xd8] sm:$0xff]
          %v980 = vld [vmem:[#allocation2 + $0xe0] sm:$0xff]
          %v981 = vld [vmem:[#allocation2 + $0xe8] sm:$0xff]
          %v982 = vld [vmem:[#allocation2 + $0xf0] sm:$0xff]
          %v983 = vld [vmem:[#allocation2 + $0xf8] sm:$0xff]
          %v984 = vld [vmem:[#allocation2 + $0x100] sm:$0xff]
          %v985 = vld [vmem:[#allocation2 + $0x108] sm:$0xff]
          %v986 = vld [vmem:[#allocation2 + $0x110] sm:$0xff]
          %v987 = vld [vmem:[#allocation2 + $0x118] sm:$0xff]
          %v988 = vld [vmem:[#allocation2 + $0x120] sm:$0xff]
          %v989 = vld [vmem:[#allocation2 + $0x128] sm:$0xff]
          %v990 = vld [vmem:[#allocation2 + $0x130] sm:$0xff]
          %v991 = vld [vmem:[#allocation2 + $0x138] sm:$0xff]
          %v992 = vld [vmem:[#allocation2 + $0x140] sm:$0xff]
          %v993 = vld [vmem:[#allocation2 + $0x148] sm:$0xff]
          %v994 = vld [vmem:[#allocation2 + $0x150] sm:$0xff]
          %v995 = vld [vmem:[#allocation2 + $0x158] sm:$0xff]
          %v996 = vld [vmem:[#allocation2 + $0x160] sm:$0xff]
          %v997 = vld [vmem:[#allocation2 + $0x168] sm:$0xff]
          %v998 = vld [vmem:[#allocation2 + $0x170] sm:$0xff]
          %v999 = vld [vmem:[#allocation2 + $0x178] sm:$0xff]
          %v1000 = vld [vmem:[#allocation2 + $0x180] sm:$0xff]
          %v1001 = vld [vmem:[#allocation2 + $0x188] sm:$0xff]
          %v1002 = vld [vmem:[#allocation2 + $0x190] sm:$0xff]
          %v1003 = vld [vmem:[#allocation2 + $0x198] sm:$0xff]
          %v1004 = vld [vmem:[#allocation2 + $0x1a0] sm:$0xff]
          %v1005 = vld [vmem:[#allocation2 + $0x1a8] sm:$0xff]
          %v1006 = vld [vmem:[#allocation2 + $0x1b0] sm:$0xff]
          %v1007 = vld [vmem:[#allocation2 + $0x1b8] sm:$0xff]
          %v1008 = vld [vmem:[#allocation2 + $0x1c0] sm:$0xff]
          %v1009 = vld [vmem:[#allocation2 + $0x1c8] sm:$0xff]
          %v1010 = vld [vmem:[#allocation2 + $0x1d0] sm:$0xff]
          %v1011 = vld [vmem:[#allocation2 + $0x1d8] sm:$0xff]
          %v1012 = vld [vmem:[#allocation2 + $0x1e0] sm:$0xff]
          %v1013 = vld [vmem:[#allocation2 + $0x1e8] sm:$0xff]
          %v1014 = vld [vmem:[#allocation2 + $0x1f0] sm:$0xff]
          %v1015 = vld [vmem:[#allocation2 + $0x1f8] sm:$0xff]
          %v1016 = vld [vmem:[%s2] sm:$0x1]
          %v1018 = vperm.slane %v1016, 0
          %v1020 = vadd.f32 %v952, %v1018
          %v1021 = vadd.f32 %v953, %v1018
          %v1022 = vadd.f32 %v954, %v1018
          %v1023 = vadd.f32 %v955, %v1018
          %v1024 = vadd.f32 %v956, %v1018
          %v1025 = vadd.f32 %v957, %v1018
          %v1026 = vadd.f32 %v958, %v1018
          %v1027 = vadd.f32 %v959, %v1018
          %v1028 = vadd.f32 %v960, %v1018
          %v1029 = vadd.f32 %v961, %v1018
          %v1030 = vadd.f32 %v962, %v1018
          %v1031 = vadd.f32 %v963, %v1018
          %v1032 = vadd.f32 %v964, %v1018
          %v1033 = vadd.f32 %v965, %v1018
          %v1034 = vadd.f32 %v966, %v1018
          %v1035 = vadd.f32 %v967, %v1018
          %v1036 = vadd.f32 %v968, %v1018
          %v1037 = vadd.f32 %v969, %v1018
          %v1038 = vadd.f32 %v970, %v1018
          %v1039 = vadd.f32 %v971, %v1018
          %v1040 = vadd.f32 %v972, %v1018
          %v1041 = vadd.f32 %v973, %v1018
          %v1042 = vadd.f32 %v974, %v1018
          %v1043 = vadd.f32 %v975, %v1018
          %v1044 = vadd.f32 %v976, %v1018
          %v1045 = vadd.f32 %v977, %v1018
          %v1046 = vadd.f32 %v978, %v1018
          %v1047 = vadd.f32 %v979, %v1018
          %v1048 = vadd.f32 %v980, %v1018
          %v1049 = vadd.f32 %v981, %v1018
          %v1050 = vadd.f32 %v982, %v1018
          %v1051 = vadd.f32 %v983, %v1018
          %v1052 = vadd.f32 %v984, %v1018
          %v1053 = vadd.f32 %v985, %v1018
          %v1054 = vadd.f32 %v986, %v1018
          %v1055 = vadd.f32 %v987, %v1018
          %v1056 = vadd.f32 %v988, %v1018
          %v1057 = vadd.f32 %v989, %v1018
          %v1058 = vadd.f32 %v990, %v1018
          %v1059 = vadd.f32 %v991, %v1018
          %v1060 = vadd.f32 %v992, %v1018
          %v1061 = vadd.f32 %v993, %v1018
          %v1062 = vadd.f32 %v994, %v1018
          %v1063 = vadd.f32 %v995, %v1018
          %v1064 = vadd.f32 %v996, %v1018
          %v1065 = vadd.f32 %v997, %v1018
          %v1066 = vadd.f32 %v998, %v1018
          %v1067 = vadd.f32 %v999, %v1018
          %v1068 = vadd.f32 %v1000, %v1018
          %v1069 = vadd.f32 %v1001, %v1018
          %v1070 = vadd.f32 %v1002, %v1018
          %v1071 = vadd.f32 %v1003, %v1018
          %v1072 = vadd.f32 %v1004, %v1018
          %v1073 = vadd.f32 %v1005, %v1018
          %v1074 = vadd.f32 %v1006, %v1018
          %v1075 = vadd.f32 %v1007, %v1018
          %v1076 = vadd.f32 %v1008, %v1018
          %v1077 = vadd.f32 %v1009, %v1018
          %v1078 = vadd.f32 %v1010, %v1018
          %v1079 = vadd.f32 %v1011, %v1018
          %v1080 = vadd.f32 %v1012, %v1018
          %v1081 = vadd.f32 %v1013, %v1018
          %v1082 = vadd.f32 %v1014, %v1018
          %v1083 = vadd.f32 %v1015, %v1018
          %vm1084 = vcmp.ge.f32.partialorder %v1020, 0.0
          %vm1085 = vcmp.ge.f32.partialorder %v1021, 0.0
          %vm1086 = vcmp.ge.f32.partialorder %v1022, 0.0
          %vm1087 = vcmp.ge.f32.partialorder %v1023, 0.0
          %vm1088 = vcmp.ge.f32.partialorder %v1024, 0.0
          %vm1089 = vcmp.ge.f32.partialorder %v1025, 0.0
          %vm1090 = vcmp.ge.f32.partialorder %v1026, 0.0
          %vm1091 = vcmp.ge.f32.partialorder %v1027, 0.0
          %vm1092 = vcmp.ge.f32.partialorder %v1028, 0.0
          %vm1093 = vcmp.ge.f32.partialorder %v1029, 0.0
          %vm1094 = vcmp.ge.f32.partialorder %v1030, 0.0
          %vm1095 = vcmp.ge.f32.partialorder %v1031, 0.0
          %vm1096 = vcmp.ge.f32.partialorder %v1032, 0.0
          %vm1097 = vcmp.ge.f32.partialorder %v1033, 0.0
          %vm1098 = vcmp.ge.f32.partialorder %v1034, 0.0
          %vm1099 = vcmp.ge.f32.partialorder %v1035, 0.0
          %vm1100 = vcmp.ge.f32.partialorder %v1036, 0.0
          %vm1101 = vcmp.ge.f32.partialorder %v1037, 0.0
          %vm1102 = vcmp.ge.f32.partialorder %v1038, 0.0
          %vm1103 = vcmp.ge.f32.partialorder %v1039, 0.0
          %vm1104 = vcmp.ge.f32.partialorder %v1040, 0.0
          %vm1105 = vcmp.ge.f32.partialorder %v1041, 0.0
          %vm1106 = vcmp.ge.f32.partialorder %v1042, 0.0
          %vm1107 = vcmp.ge.f32.partialorder %v1043, 0.0
          %vm1108 = vcmp.ge.f32.partialorder %v1044, 0.0
          %vm1109 = vcmp.ge.f32.partialorder %v1045, 0.0
          %vm1110 = vcmp.ge.f32.partialorder %v1046, 0.0
          %vm1111 = vcmp.ge.f32.partialorder %v1047, 0.0
          %vm1112 = vcmp.ge.f32.partialorder %v1048, 0.0
          %vm1113 = vcmp.ge.f32.partialorder %v1049, 0.0
          %vm1114 = vcmp.ge.f32.partialorder %v1050, 0.0
          %vm1115 = vcmp.ge.f32.partialorder %v1051, 0.0
          %vm1116 = vcmp.ge.f32.partialorder %v1052, 0.0
          %vm1117 = vcmp.ge.f32.partialorder %v1053, 0.0
          %vm1118 = vcmp.ge.f32.partialorder %v1054, 0.0
          %vm1119 = vcmp.ge.f32.partialorder %v1055, 0.0
          %vm1120 = vcmp.ge.f32.partialorder %v1056, 0.0
          %vm1121 = vcmp.ge.f32.partialorder %v1057, 0.0
          %vm1122 = vcmp.ge.f32.partialorder %v1058, 0.0
          %vm1123 = vcmp.ge.f32.partialorder %v1059, 0.0
          %vm1124 = vcmp.ge.f32.partialorder %v1060, 0.0
          %vm1125 = vcmp.ge.f32.partialorder %v1061, 0.0
          %vm1126 = vcmp.ge.f32.partialorder %v1062, 0.0
          %vm1127 = vcmp.ge.f32.partialorder %v1063, 0.0
          %vm1128 = vcmp.ge.f32.partialorder %v1064, 0.0
          %vm1129 = vcmp.ge.f32.partialorder %v1065, 0.0
          %vm1130 = vcmp.ge.f32.partialorder %v1066, 0.0
          %vm1131 = vcmp.ge.f32.partialorder %v1067, 0.0
          %vm1132 = vcmp.ge.f32.partialorder %v1068, 0.0
          %vm1133 = vcmp.ge.f32.partialorder %v1069, 0.0
          %vm1134 = vcmp.ge.f32.partialorder %v1070, 0.0
          %vm1135 = vcmp.ge.f32.partialorder %v1071, 0.0
          %vm1136 = vcmp.ge.f32.partialorder %v1072, 0.0
          %vm1137 = vcmp.ge.f32.partialorder %v1073, 0.0
          %vm1138 = vcmp.ge.f32.partialorder %v1074, 0.0
          %vm1139 = vcmp.ge.f32.partialorder %v1075, 0.0
          %vm1140 = vcmp.ge.f32.partialorder %v1076, 0.0
          %vm1141 = vcmp.ge.f32.partialorder %v1077, 0.0
          %vm1142 = vcmp.ge.f32.partialorder %v1078, 0.0
          %vm1143 = vcmp.ge.f32.partialorder %v1079, 0.0
          %vm1144 = vcmp.ge.f32.partialorder %v1080, 0.0
          %vm1145 = vcmp.ge.f32.partialorder %v1081, 0.0
          %vm1146 = vcmp.ge.f32.partialorder %v1082, 0.0
          %vm1147 = vcmp.ge.f32.partialorder %v1083, 0.0
          %v1148 = vmul.f32 %v1020, 0.1
          %v1149 = vmul.f32 %v1021, 0.1
          %v1150 = vmul.f32 %v1022, 0.1
          %v1151 = vmul.f32 %v1023, 0.1
          %v1152 = vmul.f32 %v1024, 0.1
          %v1153 = vmul.f32 %v1025, 0.1
          %v1154 = vmul.f32 %v1026, 0.1
          %v1155 = vmul.f32 %v1027, 0.1
          %v1156 = vmul.f32 %v1028, 0.1
          %v1157 = vmul.f32 %v1029, 0.1
          %v1158 = vmul.f32 %v1030, 0.1
          %v1159 = vmul.f32 %v1031, 0.1
          %v1160 = vmul.f32 %v1032, 0.1
          %v1161 = vmul.f32 %v1033, 0.1
          %v1162 = vmul.f32 %v1034, 0.1
          %v1163 = vmul.f32 %v1035, 0.1
          %v1164 = vmul.f32 %v1036, 0.1
          %v1165 = vmul.f32 %v1037, 0.1
          %v1166 = vmul.f32 %v1038, 0.1
          %v1167 = vmul.f32 %v1039, 0.1
          %v1168 = vmul.f32 %v1040, 0.1
          %v1169 = vmul.f32 %v1041, 0.1
          %v1170 = vmul.f32 %v1042, 0.1
          %v1171 = vmul.f32 %v1043, 0.1
          %v1172 = vmul.f32 %v1044, 0.1
          %v1173 = vmul.f32 %v1045, 0.1
          %v1174 = vmul.f32 %v1046, 0.1
          %v1175 = vmul.f32 %v1047, 0.1
          %v1176 = vmul.f32 %v1048, 0.1
          %v1177 = vmul.f32 %v1049, 0.1
          %v1178 = vmul.f32 %v1050, 0.1
          %v1179 = vmul.f32 %v1051, 0.1
          %v1180 = vmul.f32 %v1052, 0.1
          %v1181 = vmul.f32 %v1053, 0.1
          %v1182 = vmul.f32 %v1054, 0.1
          %v1183 = vmul.f32 %v1055, 0.1
          %v1184 = vmul.f32 %v1056, 0.1
          %v1185 = vmul.f32 %v1057, 0.1
          %v1186 = vmul.f32 %v1058, 0.1
          %v1187 = vmul.f32 %v1059, 0.1
          %v1188 = vmul.f32 %v1060, 0.1
          %v1189 = vmul.f32 %v1061, 0.1
          %v1190 = vmul.f32 %v1062, 0.1
          %v1191 = vmul.f32 %v1063, 0.1
          %v1192 = vmul.f32 %v1064, 0.1
          %v1193 = vmul.f32 %v1065, 0.1
          %v1194 = vmul.f32 %v1066, 0.1
          %v1195 = vmul.f32 %v1067, 0.1
          %v1196 = vmul.f32 %v1068, 0.1
          %v1197 = vmul.f32 %v1069, 0.1
          %v1198 = vmul.f32 %v1070, 0.1
          %v1199 = vmul.f32 %v1071, 0.1
          %v1200 = vmul.f32 %v1072, 0.1
          %v1201 = vmul.f32 %v1073, 0.1
          %v1202 = vmul.f32 %v1074, 0.1
          %v1203 = vmul.f32 %v1075, 0.1
          %v1204 = vmul.f32 %v1076, 0.1
          %v1205 = vmul.f32 %v1077, 0.1
          %v1206 = vmul.f32 %v1078, 0.1
          %v1207 = vmul.f32 %v1079, 0.1
          %v1208 = vmul.f32 %v1080, 0.1
          %v1209 = vmul.f32 %v1081, 0.1
          %v1210 = vmul.f32 %v1082, 0.1
          %v1211 = vmul.f32 %v1083, 0.1
          %v1212 = vsel %vm1084, %v1020, %v1148
          %v1213 = vsel %vm1085, %v1021, %v1149
          %v1214 = vsel %vm1086, %v1022, %v1150
          %v1215 = vsel %vm1087, %v1023, %v1151
          %v1216 = vsel %vm1088, %v1024, %v1152
          %v1217 = vsel %vm1089, %v1025, %v1153
          %v1218 = vsel %vm1090, %v1026, %v1154
          %v1219 = vsel %vm1091, %v1027, %v1155
          %v1220 = vsel %vm1092, %v1028, %v1156
          %v1221 = vsel %vm1093, %v1029, %v1157
          %v1222 = vsel %vm1094, %v1030, %v1158
          %v1223 = vsel %vm1095, %v1031, %v1159
          %v1224 = vsel %vm1096, %v1032, %v1160
          %v1225 = vsel %vm1097, %v1033, %v1161
          %v1226 = vsel %vm1098, %v1034, %v1162
          %v1227 = vsel %vm1099, %v1035, %v1163
          %v1228 = vsel %vm1100, %v1036, %v1164
          %v1229 = vsel %vm1101, %v1037, %v1165
          %v1230 = vsel %vm1102, %v1038, %v1166
          %v1231 = vsel %vm1103, %v1039, %v1167
          %v1232 = vsel %vm1104, %v1040, %v1168
          %v1233 = vsel %vm1105, %v1041, %v1169
          %v1234 = vsel %vm1106, %v1042, %v1170
          %v1235 = vsel %vm1107, %v1043, %v1171
          %v1236 = vsel %vm1108, %v1044, %v1172
          %v1237 = vsel %vm1109, %v1045, %v1173
          %v1238 = vsel %vm1110, %v1046, %v1174
          %v1239 = vsel %vm1111, %v1047, %v1175
          %v1240 = vsel %vm1112, %v1048, %v1176
          %v1241 = vsel %vm1113, %v1049, %v1177
          %v1242 = vsel %vm1114, %v1050, %v1178
          %v1243 = vsel %vm1115, %v1051, %v1179
          %v1244 = vsel %vm1116, %v1052, %v1180
          %v1245 = vsel %vm1117, %v1053, %v1181
          %v1246 = vsel %vm1118, %v1054, %v1182
          %v1247 = vsel %vm1119, %v1055, %v1183
          %v1248 = vsel %vm1120, %v1056, %v1184
          %v1249 = vsel %vm1121, %v1057, %v1185
          %v1250 = vsel %vm1122, %v1058, %v1186
          %v1251 = vsel %vm1123, %v1059, %v1187
          %v1252 = vsel %vm1124, %v1060, %v1188
          %v1253 = vsel %vm1125, %v1061, %v1189
          %v1254 = vsel %vm1126, %v1062, %v1190
          %v1255 = vsel %vm1127, %v1063, %v1191
          %v1256 = vsel %vm1128, %v1064, %v1192
          %v1257 = vsel %vm1129, %v1065, %v1193
          %v1258 = vsel %vm1130, %v1066, %v1194
          %v1259 = vsel %vm1131, %v1067, %v1195
          %v1260 = vsel %vm1132, %v1068, %v1196
          %v1261 = vsel %vm1133, %v1069, %v1197
          %v1262 = vsel %vm1134, %v1070, %v1198
          %v1263 = vsel %vm1135, %v1071, %v1199
          %v1264 = vsel %vm1136, %v1072, %v1200
          %v1265 = vsel %vm1137, %v1073, %v1201
          %v1266 = vsel %vm1138, %v1074, %v1202
          %v1267 = vsel %vm1139, %v1075, %v1203
          %v1268 = vsel %vm1140, %v1076, %v1204
          %v1269 = vsel %vm1141, %v1077, %v1205
          %v1270 = vsel %vm1142, %v1078, %v1206
          %v1271 = vsel %vm1143, %v1079, %v1207
          %v1272 = vsel %vm1144, %v1080, %v1208
          %v1273 = vsel %vm1145, %v1081, %v1209
          %v1274 = vsel %vm1146, %v1082, %v1210
          %v1275 = vsel %vm1147, %v1083, %v1211
          %1276 = vst.msk [vmem:[%s199] sm:$0xff] %vm883, %v1212
          %1277 = vst.msk [vmem:[%s199 + $0x8] sm:$0xff] %vm883, %v1213
          %1278 = vst.msk [vmem:[%s199 + $0x10] sm:$0xff] %vm883, %v1214
          %1279 = vst.msk [vmem:[%s199 + $0x18] sm:$0xff] %vm883, %v1215
          %1280 = vst.msk [vmem:[%s199 + $0x20] sm:$0xff] %vm883, %v1216
          %1281 = vst.msk [vmem:[%s199 + $0x28] sm:$0xff] %vm883, %v1217
          %1282 = vst.msk [vmem:[%s199 + $0x30] sm:$0xff] %vm883, %v1218
          %1283 = vst.msk [vmem:[%s199 + $0x38] sm:$0xff] %vm883, %v1219
          %1284 = vst.msk [vmem:[%s199 + $0x40] sm:$0xff] %vm883, %v1220
          %1285 = vst.msk [vmem:[%s199 + $0x48] sm:$0xff] %vm883, %v1221
          %1286 = vst.msk [vmem:[%s199 + $0x50] sm:$0xff] %vm883, %v1222
          %1287 = vst.msk [vmem:[%s199 + $0x58] sm:$0xff] %vm883, %v1223
          %1288 = vst.msk [vmem:[%s199 + $0x60] sm:$0xff] %vm883, %v1224
          %1289 = vst.msk [vmem:[%s199 + $0x68] sm:$0xff] %vm883, %v1225
          %1290 = vst.msk [vmem:[%s199 + $0x70] sm:$0xff] %vm883, %v1226
          %1291 = vst.msk [vmem:[%s199 + $0x78] sm:$0xff] %vm883, %v1227
          %1292 = vst.msk [vmem:[%s199 + $0x80] sm:$0xff] %vm883, %v1228
          %1293 = vst.msk [vmem:[%s199 + $0x88] sm:$0xff] %vm883, %v1229
          %1294 = vst.msk [vmem:[%s199 + $0x90] sm:$0xff] %vm883, %v1230
          %1295 = vst.msk [vmem:[%s199 + $0x98] sm:$0xff] %vm883, %v1231
          %1296 = vst.msk [vmem:[%s199 + $0xa0] sm:$0xff] %vm883, %v1232
          %1297 = vst.msk [vmem:[%s199 + $0xa8] sm:$0xff] %vm883, %v1233
          %1298 = vst.msk [vmem:[%s199 + $0xb0] sm:$0xff] %vm883, %v1234
          %1299 = vst.msk [vmem:[%s199 + $0xb8] sm:$0xff] %vm883, %v1235
          %1300 = vst.msk [vmem:[%s199 + $0xc0] sm:$0xff] %vm883, %v1236
          %1301 = vst.msk [vmem:[%s199 + $0xc8] sm:$0xff] %vm883, %v1237
          %1302 = vst.msk [vmem:[%s199 + $0xd0] sm:$0xff] %vm883, %v1238
          %1303 = vst.msk [vmem:[%s199 + $0xd8] sm:$0xff] %vm883, %v1239
          %1304 = vst.msk [vmem:[%s199 + $0xe0] sm:$0xff] %vm883, %v1240
          %1305 = vst.msk [vmem:[%s199 + $0xe8] sm:$0xff] %vm883, %v1241
          %1306 = vst.msk [vmem:[%s199 + $0xf0] sm:$0xff] %vm883, %v1242
          %1307 = vst.msk [vmem:[%s199 + $0xf8] sm:$0xff] %vm883, %v1243
          %1308 = vst.msk [vmem:[%s199 + $0x100] sm:$0xff] %vm883, %v1244
          %1309 = vst.msk [vmem:[%s199 + $0x108] sm:$0xff] %vm883, %v1245
          %1310 = vst.msk [vmem:[%s199 + $0x110] sm:$0xff] %vm883, %v1246
          %1311 = vst.msk [vmem:[%s199 + $0x118] sm:$0xff] %vm883, %v1247
          %1312 = vst.msk [vmem:[%s199 + $0x120] sm:$0xff] %vm883, %v1248
          %1313 = vst.msk [vmem:[%s199 + $0x128] sm:$0xff] %vm883, %v1249
          %1314 = vst.msk [vmem:[%s199 + $0x130] sm:$0xff] %vm883, %v1250
          %1315 = vst.msk [vmem:[%s199 + $0x138] sm:$0xff] %vm883, %v1251
          %1316 = vst.msk [vmem:[%s199 + $0x140] sm:$0xff] %vm883, %v1252
          %1317 = vst.msk [vmem:[%s199 + $0x148] sm:$0xff] %vm883, %v1253
          %1318 = vst.msk [vmem:[%s199 + $0x150] sm:$0xff] %vm883, %v1254
          %1319 = vst.msk [vmem:[%s199 + $0x158] sm:$0xff] %vm883, %v1255
          %1320 = vst.msk [vmem:[%s199 + $0x160] sm:$0xff] %vm883, %v1256
          %1321 = vst.msk [vmem:[%s199 + $0x168] sm:$0xff] %vm883, %v1257
          %1322 = vst.msk [vmem:[%s199 + $0x170] sm:$0xff] %vm883, %v1258
          %1323 = vst.msk [vmem:[%s199 + $0x178] sm:$0xff] %vm883, %v1259
          %1324 = vst.msk [vmem:[%s199 + $0x180] sm:$0xff] %vm883, %v1260
          %1325 = vst.msk [vmem:[%s199 + $0x188] sm:$0xff] %vm883, %v1261
          %1326 = vst.msk [vmem:[%s199 + $0x190] sm:$0xff] %vm883, %v1262
          %1327 = vst.msk [vmem:[%s199 + $0x198] sm:$0xff] %vm883, %v1263
          %1328 = vst.msk [vmem:[%s199 + $0x1a0] sm:$0xff] %vm883, %v1264
          %1329 = vst.msk [vmem:[%s199 + $0x1a8] sm:$0xff] %vm883, %v1265
          %1330 = vst.msk [vmem:[%s199 + $0x1b0] sm:$0xff] %vm883, %v1266
          %1331 = vst.msk [vmem:[%s199 + $0x1b8] sm:$0xff] %vm883, %v1267
          %1332 = vst.msk [vmem:[%s199 + $0x1c0] sm:$0xff] %vm883, %v1268
          %1333 = vst.msk [vmem:[%s199 + $0x1c8] sm:$0xff] %vm883, %v1269
          %1334 = vst.msk [vmem:[%s199 + $0x1d0] sm:$0xff] %vm883, %v1270
          %1335 = vst.msk [vmem:[%s199 + $0x1d8] sm:$0xff] %vm883, %v1271
          %1336 = vst.msk [vmem:[%s199 + $0x1e0] sm:$0xff] %vm883, %v1272
          %1337 = vst.msk [vmem:[%s199 + $0x1e8] sm:$0xff] %vm883, %v1273
          %1338 = vst.msk [vmem:[%s199 + $0x1f0] sm:$0xff] %vm883, %v1274
          %1339 = vst.msk [vmem:[%s199 + $0x1f8] sm:$0xff] %vm883, %v1275
        $region40: #{_conv_bn_leaky.1} parent=31 // pred_fallthru
          _
        %s1340 = sand.u32 %s112, 1
        %s1341 = scalar_lea.sflag [#allocation4], %s1340
        %s1342 = sand.u32 %s112, 1
        %s1343 = smul.addr %s1342, 512
        %s1344 = scalar_lea.vmem [#allocation3], %s1343
        // Predicated region
        $region41: #{_conv_bn_leaky.1} parent=31 // pred_check
          %p1345 = pneg %p122
        $region42: #{_conv_bn_leaky.1} parent=31 // pred_check_branch
          %1347 = sbr.rel (%p1345) target = $region44
        $region43: #{_conv_bn_leaky.1} parent=31 // pred_region
          %s1348 = smul.u32 64, %s21
          %1350 = vsyncadd %s1341, 0
          %s1351 = smul.addr %s1348, 8
          %s1352 = scalar_lea.hbm %s3, %s1351
          %s1353 = sshll.u32 %s1344, 4
          %s1354 = int_to_ptr.vmem [resolvable:$true] %s1353
          %s1355 = sshll.u32 %s1352, 4
          %s1356 = int_to_ptr.hbm [resolvable:$true] %s1355
          %1361 = dma.vmem_to_hbm [thread:$0]  %s1354, 8192, %s1356, %s1341, 128, 128, 8
        $region44: #{_conv_bn_leaky.1} parent=31 // pred_fallthru
          _
      $region32: #{_conv_bn_leaky.1} parent=5 // pred_fallthru
        _
      %p1362 = scmp.le.s32.totalorder 2, %s12
      // Predicated region
      $region45: #{_conv_bn_leaky.1} parent=5 // pred_check
        %p1363 = pneg %p1362
      $region46: #{_conv_bn_leaky.1} parent=5 // pred_check_branch
        %1365 = sbr.rel (%p1363) target = $region48
      $region47: #{_conv_bn_leaky.1} parent=5 // pred_region
        %s1366 = ssub.s32 %s12, 2
        // Predicated region
        $region49: #{_conv_bn_leaky.1} parent=47 // pred_check
          %p1367 = pneg %p128
        $region50: #{_conv_bn_leaky.1} parent=47 // pred_check_branch
          %1369 = sbr.rel (%p1367) target = $region52
        $region51: #{_conv_bn_leaky.1} parent=47 // pred_region
          %s1370 = sand.u32 %s113, 1
          %s1371 = scalar_lea.sflag [#allocation4], %s1370
          %s1372 = sand.u32 %s113, 1
          %s1373 = smul.addr %s1372, 512
          %s1374 = scalar_lea.vmem [#allocation3], %s1373
          %1376 = dma.done %s1371, 8192
        $region52: #{_conv_bn_leaky.1} parent=47 // pred_fallthru
          _
      $region48: #{_conv_bn_leaky.1} parent=5 // pred_fallthru
        _
    $region6: #{_conv_bn_leaky.1} parent=1 // loop_footer
      %s16 = sadd.s32 1, %s12
    $region7: #{_conv_bn_leaky.1} parent=1 // loop_footer_branch
      %11 = sbr.rel target = $region3
    $region8: #{_conv_bn_leaky.1} parent=1 // loop_exit
      _
    %1377 = vsyncpa [#allocation4], 1
    %s1378 = scalar_lea.sflag [#allocation4], 1
    %1379 = vsyncpa %s1378, 1

</llo_original>
